<compile_context>
chip_gen: v7x
topology: tpu7x:2x2x1
jax: 0.10.0
libtpu: 0.0.40
codegen_flags: <defaults>
</compile_context>

<pallas_src>
import math

import jax
import jax.numpy as jnp
import numpy as np
from jax.experimental import pallas as pl
from jax.experimental.pallas import tpu as pltpu

# ---------------- synthetic config (small) ----------------
HIDDEN    = 32          # config.hidden_size
NUM_HEADS = 4           # config.num_heads
D_KV      = 8           # config.d_kv   (HIDDEN == NUM_HEADS * D_KV)
D_FF      = 64          # config.d_ff
EPS       = 1e-6        # config.layer_norm_epsilon
SEQ       = 8           # decoder sequence length
ENC_SEQ   = 16          # encoder sequence length
BATCH     = 2

_GELU_K = math.sqrt(2.0 / math.pi)


# ---------------- shared math helpers (kernel AND reference) ----------------
def _gelu_new(x):
    # HF ACT2FN["gelu_new"] (tanh approximation); x*x*x avoids a pow lowering.
    return 0.5 * x * (1.0 + jnp.tanh(_GELU_K * (x + 0.044715 * x * x * x)))


def _layer_norm(x, w, b):
    # Standard nn.LayerNorm (per the spec's Pix2StructLayerNorm implementation).
    mean = jnp.mean(x, axis=-1, keepdims=True)
    var = jnp.mean(jnp.square(x - mean), axis=-1, keepdims=True)
    return (x - mean) * jax.lax.rsqrt(var + EPS) * w + b


# ---------------- kernel-side attention (batch folded into head-batch) ----------------
def _split_heads(x2d, b, s):
    """(b*s, H) -> (b*NUM_HEADS, s, D_KV); one lane-aware relayout per tensor."""
    x4 = x2d.reshape(b, s, NUM_HEADS, D_KV)
    x4 = pltpu.einshape("bshd->bhsd", x4)
    return x4.reshape(b * NUM_HEADS, s, D_KV)


def _merge_heads(ctx, b, s):
    """(b*NUM_HEADS, s, D_KV) -> (b*s, H)."""
    c4 = ctx.reshape(b, NUM_HEADS, s, D_KV)
    c4 = pltpu.einshape("bhsd->bshd", c4)
    return c4.reshape(b * s, HIDDEN)


def _mha_core(q, k, v, bias, sq, skv):
    """T5-style attention core (no score scaling).

    q   : (B*NH, sq, D)      k, v : (B*NH, skv, D)
    bias: (B, 1, sq|1, skv) additive mask, broadcast over heads in-kernel.
    Returns the merged context (B*sq, H).
    """
    s = jnp.einsum("nqd,nkd->nqk", q, k,
                   preferred_element_type=jnp.float32)          # (B*NH, sq, skv)
    bias_f = jnp.broadcast_to(
        bias, (BATCH, NUM_HEADS, sq, skv)).reshape(BATCH * NUM_HEADS, sq, skv)
    s = s + bias_f

    # softmax (f32), issued once over the whole folded tensor; denominator via
    # EUP approx reciprocal + one Newton step (~f32-exact).
    m = jnp.max(s, axis=-1, keepdims=True)
    e = jnp.exp(s - m)
    denom = jnp.sum(e, axis=-1, keepdims=True)
    inv = pl.reciprocal(denom, approx=True)
    inv = inv * (2.0 - denom * inv)
    p = e * inv

    ctx = jnp.einsum("nqk,nkd->nqd", p, v,
                     preferred_element_type=jnp.float32)        # (B*NH, sq, D)
    return _merge_heads(ctx, BATCH, sq)


# ---------------- Pallas kernel (whole block, single invocation) ----------------
def pix2struct_block_kernel(hs_ref, enc_ref, self_bias_ref, cross_bias_ref,
                            ln_ref, w_sqkv_ref, w_so_ref,
                            w_cq_ref, w_ckv_ref, w_co_ref,
                            w_glu_ref, w_ffo_ref, out_ref):
    B, S, E, H = BATCH, SEQ, ENC_SEQ, HIDDEN

    hs = hs_ref[...]                         # (B*S, H) — no in-kernel relayout
    enc = enc_ref[...]                       # (B*E, H)
    ln = ln_ref[...]                         # (6, H)

    # --- self-attention sublayer (fused QKV projection: one (H,3H) matmul) ---
    x = _layer_norm(hs, ln[0:1], ln[1:2])
    qkv = jnp.dot(x, w_sqkv_ref[...], preferred_element_type=jnp.float32)   # (B*S, 3H)
    q = _split_heads(qkv[:, 0 * H:1 * H], B, S)
    k = _split_heads(qkv[:, 1 * H:2 * H], B, S)
    v = _split_heads(qkv[:, 2 * H:3 * H], B, S)
    ctx = _mha_core(q, k, v, self_bias_ref[...], S, S)                       # (B*S, H)
    hs = hs + jnp.dot(ctx, w_so_ref[...], preferred_element_type=jnp.float32)

    # --- cross-attention sublayer (fused KV projection on encoder states) ---
    x = _layer_norm(hs, ln[2:3], ln[3:4])
    q = _split_heads(
        jnp.dot(x, w_cq_ref[...], preferred_element_type=jnp.float32), B, S)
    kv = jnp.dot(enc, w_ckv_ref[...], preferred_element_type=jnp.float32)    # (B*E, 2H)
    k = _split_heads(kv[:, 0 * H:1 * H], B, E)
    v = _split_heads(kv[:, 1 * H:2 * H], B, E)
    ctx = _mha_core(q, k, v, cross_bias_ref[...], S, E)
    hs = hs + jnp.dot(ctx, w_co_ref[...], preferred_element_type=jnp.float32)

    # --- gated FF (Pix2StructGLU, gelu_new); wi_0|wi_1 fused into one matmul ---
    x = _layer_norm(hs, ln[4:5], ln[5:6])
    hgl = jnp.dot(x, w_glu_ref[...], preferred_element_type=jnp.float32)     # (B*S, 2*D_FF)
    g = _gelu_new(hgl[:, :D_FF])
    lin = hgl[:, D_FF:]
    hs = hs + jnp.dot(g * lin, w_ffo_ref[...], preferred_element_type=jnp.float32)

    out_ref[...] = hs                        # plain (B*S, H) store


# ---------------- parameter packing (one-time, OUTSIDE the per-call jit) ----------------
def pack_params(p):
    """Pre-pack weights once at init; the jitted call sees packed arrays only."""
    return dict(
        ln=jnp.stack([p["ln1_w"], p["ln1_b"], p["ln2_w"], p["ln2_b"],
                      p["ln3_w"], p["ln3_b"]], axis=0),                   # (6, H)
        w_self_qkv=jnp.concatenate([p["sq"], p["sk"], p["sv"]], axis=1),  # (H, 3H)
        w_self_o=p["so"],                                                 # (H, H)
        w_cross_q=p["cq"],                                                # (H, H)
        w_cross_kv=jnp.concatenate([p["ck"], p["cv"]], axis=1),           # (H, 2H)
        w_cross_o=p["co"],                                                # (H, H)
        w_glu=jnp.concatenate([p["wi0"], p["wi1"]], axis=1),              # (H, 2*D_FF)
        w_ffo=p["wo"],                                                    # (D_FF, H)
    )


# ---------------- wrapper ----------------
@jax.jit
def pix2struct_text_block(hidden_states, encoder_hidden_states,
                          self_bias, cross_bias,
                          ln, w_self_qkv, w_self_o,
                          w_cross_q, w_cross_kv, w_cross_o,
                          w_glu, w_ffo):
    """hidden_states (B,S,H), encoder_hidden_states (B,E,H),
    self_bias (B,1,S,S), cross_bias (B,1,1,E); weights pre-packed (in,out) layout."""
    B, S, H = hidden_states.shape
    E = encoder_hidden_states.shape[1]

    # Free (contiguous) metadata reshapes — the kernel works on 2-D row slabs.
    hs2 = hidden_states.reshape(B * S, H)
    enc2 = encoder_hidden_states.reshape(B * E, H)

    out2 = pl.pallas_call(
        pix2struct_block_kernel,
        out_shape=jax.ShapeDtypeStruct((B * S, H), jnp.float32),
    )(hs2, enc2, self_bias, cross_bias, ln, w_self_qkv, w_self_o,
      w_cross_q, w_cross_kv, w_cross_o, w_glu, w_ffo)
    return out2.reshape(B, S, H)


# ---------------- reference (pure JAX, same module math, high precision) ----------------
def reference_block(hidden_states, encoder_hidden_states, self_bias, cross_bias, p):
    with jax.default_matmul_precision("highest"):
        def mha(xq, xkv, bias, wq, wk, wv, wo):
            B, Sq, _ = xq.shape
            Skv = xkv.shape[1]
            q = (xq @ wq).reshape(B, Sq, NUM_HEADS, D_KV)
            k = (xkv @ wk).reshape(B, Skv, NUM_HEADS, D_KV)
            v = (xkv @ wv).reshape(B, Skv, NUM_HEADS, D_KV)
            s = jnp.einsum("bqhd,bkhd->bhqk", q, k) + bias
            prob = jax.nn.softmax(s.astype(jnp.float32), axis=-1)
            ctx = jnp.einsum("bhqk,bkhd->bqhd", prob, v).reshape(B, Sq, HIDDEN)
            return ctx @ wo

        hs = hidden_states
        x = _layer_norm(hs, p["ln1_w"], p["ln1_b"])
        hs = hs + mha(x, x, self_bias, p["sq"], p["sk"], p["sv"], p["so"])
        x = _layer_norm(hs, p["ln2_w"], p["ln2_b"])
        hs = hs + mha(x, encoder_hidden_states, cross_bias,
                      p["cq"], p["ck"], p["cv"], p["co"])
        x = _layer_norm(hs, p["ln3_w"], p["ln3_b"])
        hs = hs + (_gelu_new(x @ p["wi0"]) * (x @ p["wi1"])) @ p["wo"]
        return hs


# ---------------- main ----------------
if __name__ == "__main__":
    key = jax.random.PRNGKey(0)
    ks = jax.random.split(key, 24)

    def init_w(k, shape, std=0.02):
        return (std * jax.random.normal(k, shape)).astype(jnp.float32)

    # nn.Linear weights (torch (out,in)) stored pre-transposed as (in,out).
    # LayerNorm params randomized (non-default) to exercise the affine path.
    params = {
        "sq": init_w(ks[0], (HIDDEN, HIDDEN)),
        "sk": init_w(ks[1], (HIDDEN, HIDDEN)),
        "sv": init_w(ks[2], (HIDDEN, HIDDEN)),
        "so": init_w(ks[3], (HIDDEN, HIDDEN)),
        "cq": init_w(ks[4], (HIDDEN, HIDDEN)),
        "ck": init_w(ks[5], (HIDDEN, HIDDEN)),
        "cv": init_w(ks[6], (HIDDEN, HIDDEN)),
        "co": init_w(ks[7], (HIDDEN, HIDDEN)),
        "wi0": init_w(ks[8], (HIDDEN, D_FF)),
        "wi1": init_w(ks[9], (HIDDEN, D_FF)),
        "wo":  init_w(ks[10], (D_FF, HIDDEN)),
        "ln1_w": (1.0 + 0.1 * jax.random.normal(ks[11], (HIDDEN,))).astype(jnp.float32),
        "ln1_b": (0.1 * jax.random.normal(ks[12], (HIDDEN,))).astype(jnp.float32),
        "ln2_w": (1.0 + 0.1 * jax.random.normal(ks[13], (HIDDEN,))).astype(jnp.float32),
        "ln2_b": (0.1 * jax.random.normal(ks[14], (HIDDEN,))).astype(jnp.float32),
        "ln3_w": (1.0 + 0.1 * jax.random.normal(ks[15], (HIDDEN,))).astype(jnp.float32),
        "ln3_b": (0.1 * jax.random.normal(ks[16], (HIDDEN,))).astype(jnp.float32),
    }

    hidden_states = jax.random.normal(ks[17], (BATCH, SEQ, HIDDEN), jnp.float32)
    encoder_hidden_states = jax.random.normal(ks[18], (BATCH, ENC_SEQ, HIDDEN), jnp.float32)

    # Additive attention masks, NOT pre-broadcast over heads (broadcast in-kernel):
    #   self: causal (B,1,S,S)   cross: encoder key padding mask (B,1,1,E)
    causal = jnp.tril(jnp.ones((SEQ, SEQ), jnp.float32))
    self_bias = jnp.broadcast_to(
        jnp.where(causal > 0, 0.0, -1e9)[None, None], (BATCH, 1, SEQ, SEQ)
    ).astype(jnp.float32)

    enc_valid = jnp.ones((BATCH, ENC_SEQ), jnp.float32)
    enc_valid = enc_valid.at[1, ENC_SEQ - 4:].set(0.0)   # pad last 4 keys of batch 1
    cross_bias = jnp.where(enc_valid > 0, 0.0, -1e9)[:, None, None, :].astype(jnp.float32)

    # One-time packing (hoisted out of the jitted per-call path).
    packed = pack_params(params)

    out = pix2struct_text_block(
        hidden_states, encoder_hidden_states, self_bias, cross_bias,
        packed["ln"], packed["w_self_qkv"], packed["w_self_o"],
        packed["w_cross_q"], packed["w_cross_kv"], packed["w_cross_o"],
        packed["w_glu"], packed["w_ffo"])
    out = jax.block_until_ready(out)

    ref = jax.block_until_ready(
        reference_block(hidden_states, encoder_hidden_states, self_bias, cross_bias, params))

    assert out.shape == (BATCH, SEQ, HIDDEN)
    # Matmuls stay f32 on the MXU (bf16 inputs are a production-scale TODO), so the
    # tight tolerance vs. the "highest"-precision XLA reference remains valid.
    np.testing.assert_allclose(np.asarray(out), np.asarray(ref), rtol=1e-4, atol=1e-4)
    print("KERNEL_OK")
</pallas_src>

<mosaic_0001>
module attributes {stable_mosaic.version = 11 : i64} {
  func.func @pix2struct_block_kernel(%arg0: memref<16x32xf32, #tpu.memory_space<vmem>>, %arg1: memref<32x32xf32, #tpu.memory_space<vmem>>, %arg2: memref<2x1x8x8xf32, #tpu.memory_space<vmem>>, %arg3: memref<2x1x1x16xf32, #tpu.memory_space<vmem>>, %arg4: memref<6x32xf32, #tpu.memory_space<vmem>>, %arg5: memref<32x96xf32, #tpu.memory_space<vmem>>, %arg6: memref<32x32xf32, #tpu.memory_space<vmem>>, %arg7: memref<32x32xf32, #tpu.memory_space<vmem>>, %arg8: memref<32x64xf32, #tpu.memory_space<vmem>>, %arg9: memref<32x32xf32, #tpu.memory_space<vmem>>, %arg10: memref<32x128xf32, #tpu.memory_space<vmem>>, %arg11: memref<64x32xf32, #tpu.memory_space<vmem>>, %arg12: memref<16x32xf32, #tpu.memory_space<vmem>>) attributes {dimension_semantics = [], scalar_prefetch = 0 : i64, scratch_operands = 0 : i64, tpu.core_type = #tpu.core_type<tc>} {
    %c0 = arith.constant 0 : index
    %c0_0 = arith.constant 0 : index
    %0 = vector.load %arg0[%c0, %c0_0] : memref<16x32xf32, #tpu.memory_space<vmem>>, vector<16x32xf32>
    %c0_1 = arith.constant 0 : index
    %c0_2 = arith.constant 0 : index
    %1 = vector.load %arg1[%c0_1, %c0_2] : memref<32x32xf32, #tpu.memory_space<vmem>>, vector<32x32xf32>
    %c0_3 = arith.constant 0 : index
    %c0_4 = arith.constant 0 : index
    %2 = vector.load %arg4[%c0_3, %c0_4] : memref<6x32xf32, #tpu.memory_space<vmem>>, vector<6x32xf32>
    %3 = vector.extract_strided_slice %2 {offsets = [0, 0], sizes = [1, 32], strides = [1, 1]} : vector<6x32xf32> to vector<1x32xf32>
    %4 = vector.extract_strided_slice %2 {offsets = [1, 0], sizes = [1, 32], strides = [1, 1]} : vector<6x32xf32> to vector<1x32xf32>
    %cst = arith.constant dense<0.000000e+00> : vector<16xf32>
    %5 = vector.multi_reduction <add>, %0, %cst [1] : vector<16x32xf32> to vector<16xf32>
    %6 = vector.shape_cast %5 : vector<16xf32> to vector<16x1xf32>
    %cst_5 = arith.constant 3.200000e+01 : f32
    %7 = vector.broadcast %cst_5 : f32 to vector<16x1xf32>
    %8 = arith.divf %6, %7 : vector<16x1xf32>
    %9 = vector.broadcast %8 : vector<16x1xf32> to vector<16x32xf32>
    %10 = arith.subf %0, %9 : vector<16x32xf32>
    %11 = arith.mulf %10, %10 : vector<16x32xf32>
    %cst_6 = arith.constant dense<0.000000e+00> : vector<16xf32>
    %12 = vector.multi_reduction <add>, %11, %cst_6 [1] : vector<16x32xf32> to vector<16xf32>
    %13 = vector.shape_cast %12 : vector<16xf32> to vector<16x1xf32>
    %cst_7 = arith.constant 3.200000e+01 : f32
    %14 = vector.broadcast %cst_7 : f32 to vector<16x1xf32>
    %15 = arith.divf %13, %14 : vector<16x1xf32>
    %16 = vector.broadcast %8 : vector<16x1xf32> to vector<16x32xf32>
    %17 = arith.subf %0, %16 : vector<16x32xf32>
    %cst_8 = arith.constant 9.99999997E-7 : f32
    %18 = vector.broadcast %cst_8 : f32 to vector<16x1xf32>
    %19 = arith.addf %15, %18 : vector<16x1xf32>
    %20 = math.rsqrt %19 : vector<16x1xf32>
    %21 = vector.broadcast %20 : vector<16x1xf32> to vector<16x32xf32>
    %22 = arith.mulf %17, %21 : vector<16x32xf32>
    %23 = vector.broadcast %3 : vector<1x32xf32> to vector<16x32xf32>
    %24 = arith.mulf %22, %23 : vector<16x32xf32>
    %25 = vector.broadcast %4 : vector<1x32xf32> to vector<16x32xf32>
    %26 = arith.addf %24, %25 : vector<16x32xf32>
    %c0_9 = arith.constant 0 : index
    %c0_10 = arith.constant 0 : index
    %27 = vector.load %arg5[%c0_9, %c0_10] : memref<32x96xf32, #tpu.memory_space<vmem>>, vector<32x96xf32>
    %cst_11 = arith.constant dense<0.000000e+00> : vector<16x96xf32>
    %28 = tpu.matmul %26, %27, %cst_11 {dimension_numbers = #tpu.dot_dimension_numbers<[1], [0], [0], [1], [0, 0, 1, 1], [], []>} : vector<16x32xf32>, vector<32x96xf32>, vector<16x96xf32> -> vector<16x96xf32>
    %29 = vector.extract_strided_slice %28 {offsets = [0, 0], sizes = [16, 32], strides = [1, 1]} : vector<16x96xf32> to vector<16x32xf32>
    %30 = vector.shape_cast %29 : vector<16x32xf32> to vector<2x8x4x8xf32>
    %31 = tpu.transpose %30, [0, 2, 1, 3] : vector<2x8x4x8xf32> -> vector<2x4x8x8xf32>
    %32 = vector.shape_cast %31 : vector<2x4x8x8xf32> to vector<8x8x8xf32>
    %33 = vector.extract_strided_slice %28 {offsets = [0, 32], sizes = [16, 32], strides = [1, 1]} : vector<16x96xf32> to vector<16x32xf32>
    %34 = vector.shape_cast %33 : vector<16x32xf32> to vector<2x8x4x8xf32>
    %35 = tpu.transpose %34, [0, 2, 1, 3] : vector<2x8x4x8xf32> -> vector<2x4x8x8xf32>
    %36 = vector.shape_cast %35 : vector<2x4x8x8xf32> to vector<8x8x8xf32>
    %37 = vector.extract_strided_slice %28 {offsets = [0, 64], sizes = [16, 32], strides = [1, 1]} : vector<16x96xf32> to vector<16x32xf32>
    %38 = vector.shape_cast %37 : vector<16x32xf32> to vector<2x8x4x8xf32>
    %39 = tpu.transpose %38, [0, 2, 1, 3] : vector<2x8x4x8xf32> -> vector<2x4x8x8xf32>
    %40 = vector.shape_cast %39 : vector<2x4x8x8xf32> to vector<8x8x8xf32>
    %c0_12 = arith.constant 0 : index
    %c0_13 = arith.constant 0 : index
    %c0_14 = arith.constant 0 : index
    %c0_15 = arith.constant 0 : index
    %41 = vector.load %arg2[%c0_12, %c0_13, %c0_14, %c0_15] : memref<2x1x8x8xf32, #tpu.memory_space<vmem>>, vector<2x1x8x8xf32>
    "tpu.trace_start"() <{level = 10 : i32, message = "nqd,nkd->nqk"}> : () -> ()
    %cst_16 = arith.constant dense<0.000000e+00> : vector<8x8x8xf32>
    %42 = tpu.matmul %32, %36, %cst_16 {dimension_numbers = #tpu.dot_dimension_numbers<[2], [2], [1], [1], [0, 0, 0, 1, 1, 1], [0], [0]>} : vector<8x8x8xf32>, vector<8x8x8xf32>, vector<8x8x8xf32> -> vector<8x8x8xf32>
    "tpu.trace_stop"() : () -> ()
    %43 = vector.shape_cast %41 : vector<2x1x8x8xf32> to vector<2x1x8x8xf32>
    %44 = vector.broadcast %43 : vector<2x1x8x8xf32> to vector<2x4x8x8xf32>
    %45 = vector.shape_cast %44 : vector<2x4x8x8xf32> to vector<8x8x8xf32>
    %46 = arith.addf %42, %45 : vector<8x8x8xf32>
    %cst_17 = arith.constant dense<0xFF800000> : vector<8x8xf32>
    %47 = vector.multi_reduction <maximumf>, %46, %cst_17 [2] : vector<8x8x8xf32> to vector<8x8xf32>
    %48 = vector.shape_cast %47 : vector<8x8xf32> to vector<8x8x1xf32>
    %49 = vector.broadcast %48 : vector<8x8x1xf32> to vector<8x8x8xf32>
    %50 = arith.subf %46, %49 : vector<8x8x8xf32>
    %51 = math.exp %50 : vector<8x8x8xf32>
    %cst_18 = arith.constant dense<0.000000e+00> : vector<8x8xf32>
    %52 = vector.multi_reduction <add>, %51, %cst_18 [2] : vector<8x8x8xf32> to vector<8x8xf32>
    %53 = vector.shape_cast %52 : vector<8x8xf32> to vector<8x8x1xf32>
    %54 = tpu.reciprocal %53 {approx = true} : vector<8x8x1xf32> -> vector<8x8x1xf32>
    %55 = arith.mulf %53, %54 : vector<8x8x1xf32>
    %cst_19 = arith.constant 2.000000e+00 : f32
    %56 = vector.broadcast %cst_19 : f32 to vector<8x8x1xf32>
    %57 = arith.subf %56, %55 : vector<8x8x1xf32>
    %58 = arith.mulf %54, %57 : vector<8x8x1xf32>
    %59 = vector.broadcast %58 : vector<8x8x1xf32> to vector<8x8x8xf32>
    %60 = arith.mulf %51, %59 : vector<8x8x8xf32>
    "tpu.trace_start"() <{level = 10 : i32, message = "nqk,nkd->nqd"}> : () -> ()
    %cst_20 = arith.constant dense<0.000000e+00> : vector<8x8x8xf32>
    %61 = tpu.matmul %60, %40, %cst_20 {dimension_numbers = #tpu.dot_dimension_numbers<[2], [1], [1], [2], [0, 0, 0, 1, 1, 2], [0], [0]>} : vector<8x8x8xf32>, vector<8x8x8xf32>, vector<8x8x8xf32> -> vector<8x8x8xf32>
    "tpu.trace_stop"() : () -> ()
    %62 = vector.shape_cast %61 : vector<8x8x8xf32> to vector<2x4x8x8xf32>
    %63 = tpu.transpose %62, [0, 2, 1, 3] : vector<2x4x8x8xf32> -> vector<2x8x4x8xf32>
    %64 = vector.shape_cast %63 : vector<2x8x4x8xf32> to vector<16x32xf32>
    %c0_21 = arith.constant 0 : index
    %c0_22 = arith.constant 0 : index
    %65 = vector.load %arg6[%c0_21, %c0_22] : memref<32x32xf32, #tpu.memory_space<vmem>>, vector<32x32xf32>
    %cst_23 = arith.constant dense<0.000000e+00> : vector<16x32xf32>
    %66 = tpu.matmul %64, %65, %cst_23 {dimension_numbers = #tpu.dot_dimension_numbers<[1], [0], [0], [1], [0, 0, 1, 1], [], []>} : vector<16x32xf32>, vector<32x32xf32>, vector<16x32xf32> -> vector<16x32xf32>
    %67 = arith.addf %0, %66 : vector<16x32xf32>
    %68 = vector.extract_strided_slice %2 {offsets = [2, 0], sizes = [1, 32], strides = [1, 1]} : vector<6x32xf32> to vector<1x32xf32>
    %69 = vector.extract_strided_slice %2 {offsets = [3, 0], sizes = [1, 32], strides = [1, 1]} : vector<6x32xf32> to vector<1x32xf32>
    %cst_24 = arith.constant dense<0.000000e+00> : vector<16xf32>
    %70 = vector.multi_reduction <add>, %67, %cst_24 [1] : vector<16x32xf32> to vector<16xf32>
    %71 = vector.shape_cast %70 : vector<16xf32> to vector<16x1xf32>
    %cst_25 = arith.constant 3.200000e+01 : f32
    %72 = vector.broadcast %cst_25 : f32 to vector<16x1xf32>
    %73 = arith.divf %71, %72 : vector<16x1xf32>
    %74 = vector.broadcast %73 : vector<16x1xf32> to vector<16x32xf32>
    %75 = arith.subf %67, %74 : vector<16x32xf32>
    %76 = arith.mulf %75, %75 : vector<16x32xf32>
    %cst_26 = arith.constant dense<0.000000e+00> : vector<16xf32>
    %77 = vector.multi_reduction <add>, %76, %cst_26 [1] : vector<16x32xf32> to vector<16xf32>
    %78 = vector.shape_cast %77 : vector<16xf32> to vector<16x1xf32>
    %cst_27 = arith.constant 3.200000e+01 : f32
    %79 = vector.broadcast %cst_27 : f32 to vector<16x1xf32>
    %80 = arith.divf %78, %79 : vector<16x1xf32>
    %81 = vector.broadcast %73 : vector<16x1xf32> to vector<16x32xf32>
    %82 = arith.subf %67, %81 : vector<16x32xf32>
    %cst_28 = arith.constant 9.99999997E-7 : f32
    %83 = vector.broadcast %cst_28 : f32 to vector<16x1xf32>
    %84 = arith.addf %80, %83 : vector<16x1xf32>
    %85 = math.rsqrt %84 : vector<16x1xf32>
    %86 = vector.broadcast %85 : vector<16x1xf32> to vector<16x32xf32>
    %87 = arith.mulf %82, %86 : vector<16x32xf32>
    %88 = vector.broadcast %68 : vector<1x32xf32> to vector<16x32xf32>
    %89 = arith.mulf %87, %88 : vector<16x32xf32>
    %90 = vector.broadcast %69 : vector<1x32xf32> to vector<16x32xf32>
    %91 = arith.addf %89, %90 : vector<16x32xf32>
    %c0_29 = arith.constant 0 : index
    %c0_30 = arith.constant 0 : index
    %92 = vector.load %arg7[%c0_29, %c0_30] : memref<32x32xf32, #tpu.memory_space<vmem>>, vector<32x32xf32>
    %cst_31 = arith.constant dense<0.000000e+00> : vector<16x32xf32>
    %93 = tpu.matmul %91, %92, %cst_31 {dimension_numbers = #tpu.dot_dimension_numbers<[1], [0], [0], [1], [0, 0, 1, 1], [], []>} : vector<16x32xf32>, vector<32x32xf32>, vector<16x32xf32> -> vector<16x32xf32>
    %94 = vector.shape_cast %93 : vector<16x32xf32> to vector<2x8x4x8xf32>
    %95 = tpu.transpose %94, [0, 2, 1, 3] : vector<2x8x4x8xf32> -> vector<2x4x8x8xf32>
    %96 = vector.shape_cast %95 : vector<2x4x8x8xf32> to vector<8x8x8xf32>
    %c0_32 = arith.constant 0 : index
    %c0_33 = arith.constant 0 : index
    %97 = vector.load %arg8[%c0_32, %c0_33] : memref<32x64xf32, #tpu.memory_space<vmem>>, vector<32x64xf32>
    %cst_34 = arith.constant dense<0.000000e+00> : vector<32x64xf32>
    %98 = tpu.matmul %1, %97, %cst_34 {dimension_numbers = #tpu.dot_dimension_numbers<[1], [0], [0], [1], [0, 0, 1, 1], [], []>} : vector<32x32xf32>, vector<32x64xf32>, vector<32x64xf32> -> vector<32x64xf32>
    %99 = vector.extract_strided_slice %98 {offsets = [0, 0], sizes = [32, 32], strides = [1, 1]} : vector<32x64xf32> to vector<32x32xf32>
    %100 = vector.shape_cast %99 : vector<32x32xf32> to vector<2x16x4x8xf32>
    %101 = tpu.transpose %100, [0, 2, 1, 3] : vector<2x16x4x8xf32> -> vector<2x4x16x8xf32>
    %102 = vector.shape_cast %101 : vector<2x4x16x8xf32> to vector<8x16x8xf32>
    %103 = vector.extract_strided_slice %98 {offsets = [0, 32], sizes = [32, 32], strides = [1, 1]} : vector<32x64xf32> to vector<32x32xf32>
    %104 = vector.shape_cast %103 : vector<32x32xf32> to vector<2x16x4x8xf32>
    %105 = tpu.transpose %104, [0, 2, 1, 3] : vector<2x16x4x8xf32> -> vector<2x4x16x8xf32>
    %106 = vector.shape_cast %105 : vector<2x4x16x8xf32> to vector<8x16x8xf32>
    %c0_35 = arith.constant 0 : index
    %c0_36 = arith.constant 0 : index
    %c0_37 = arith.constant 0 : index
    %c0_38 = arith.constant 0 : index
    %107 = vector.load %arg3[%c0_35, %c0_36, %c0_37, %c0_38] : memref<2x1x1x16xf32, #tpu.memory_space<vmem>>, vector<2x1x1x16xf32>
    "tpu.trace_start"() <{level = 10 : i32, message = "nqd,nkd->nqk"}> : () -> ()
    %cst_39 = arith.constant dense<0.000000e+00> : vector<8x8x16xf32>
    %108 = tpu.matmul %96, %102, %cst_39 {dimension_numbers = #tpu.dot_dimension_numbers<[2], [2], [1], [1], [0, 0, 0, 1, 1, 1], [0], [0]>} : vector<8x8x8xf32>, vector<8x16x8xf32>, vector<8x8x16xf32> -> vector<8x8x16xf32>
    "tpu.trace_stop"() : () -> ()
    %109 = vector.shape_cast %107 : vector<2x1x1x16xf32> to vector<2x1x1x16xf32>
    %110 = vector.broadcast %109 : vector<2x1x1x16xf32> to vector<2x4x8x16xf32>
    %111 = vector.shape_cast %110 : vector<2x4x8x16xf32> to vector<8x8x16xf32>
    %112 = arith.addf %108, %111 : vector<8x8x16xf32>
    %cst_40 = arith.constant dense<0xFF800000> : vector<8x8xf32>
    %113 = vector.multi_reduction <maximumf>, %112, %cst_40 [2] : vector<8x8x16xf32> to vector<8x8xf32>
    %114 = vector.shape_cast %113 : vector<8x8xf32> to vector<8x8x1xf32>
    %115 = vector.broadcast %114 : vector<8x8x1xf32> to vector<8x8x16xf32>
    %116 = arith.subf %112, %115 : vector<8x8x16xf32>
    %117 = math.exp %116 : vector<8x8x16xf32>
    %cst_41 = arith.constant dense<0.000000e+00> : vector<8x8xf32>
    %118 = vector.multi_reduction <add>, %117, %cst_41 [2] : vector<8x8x16xf32> to vector<8x8xf32>
    %119 = vector.shape_cast %118 : vector<8x8xf32> to vector<8x8x1xf32>
    %120 = tpu.reciprocal %119 {approx = true} : vector<8x8x1xf32> -> vector<8x8x1xf32>
    %121 = arith.mulf %119, %120 : vector<8x8x1xf32>
    %cst_42 = arith.constant 2.000000e+00 : f32
    %122 = vector.broadcast %cst_42 : f32 to vector<8x8x1xf32>
    %123 = arith.subf %122, %121 : vector<8x8x1xf32>
    %124 = arith.mulf %120, %123 : vector<8x8x1xf32>
    %125 = vector.broadcast %124 : vector<8x8x1xf32> to vector<8x8x16xf32>
    %126 = arith.mulf %117, %125 : vector<8x8x16xf32>
    "tpu.trace_start"() <{level = 10 : i32, message = "nqk,nkd->nqd"}> : () -> ()
    %cst_43 = arith.constant dense<0.000000e+00> : vector<8x8x8xf32>
    %127 = tpu.matmul %126, %106, %cst_43 {dimension_numbers = #tpu.dot_dimension_numbers<[2], [1], [1], [2], [0, 0, 0, 1, 1, 2], [0], [0]>} : vector<8x8x16xf32>, vector<8x16x8xf32>, vector<8x8x8xf32> -> vector<8x8x8xf32>
    "tpu.trace_stop"() : () -> ()
    %128 = vector.shape_cast %127 : vector<8x8x8xf32> to vector<2x4x8x8xf32>
    %129 = tpu.transpose %128, [0, 2, 1, 3] : vector<2x4x8x8xf32> -> vector<2x8x4x8xf32>
    %130 = vector.shape_cast %129 : vector<2x8x4x8xf32> to vector<16x32xf32>
    %c0_44 = arith.constant 0 : index
    %c0_45 = arith.constant 0 : index
    %131 = vector.load %arg9[%c0_44, %c0_45] : memref<32x32xf32, #tpu.memory_space<vmem>>, vector<32x32xf32>
    %cst_46 = arith.constant dense<0.000000e+00> : vector<16x32xf32>
    %132 = tpu.matmul %130, %131, %cst_46 {dimension_numbers = #tpu.dot_dimension_numbers<[1], [0], [0], [1], [0, 0, 1, 1], [], []>} : vector<16x32xf32>, vector<32x32xf32>, vector<16x32xf32> -> vector<16x32xf32>
    %133 = arith.addf %67, %132 : vector<16x32xf32>
    %134 = vector.extract_strided_slice %2 {offsets = [4, 0], sizes = [1, 32], strides = [1, 1]} : vector<6x32xf32> to vector<1x32xf32>
    %135 = vector.extract_strided_slice %2 {offsets = [5, 0], sizes = [1, 32], strides = [1, 1]} : vector<6x32xf32> to vector<1x32xf32>
    %cst_47 = arith.constant dense<0.000000e+00> : vector<16xf32>
    %136 = vector.multi_reduction <add>, %133, %cst_47 [1] : vector<16x32xf32> to vector<16xf32>
    %137 = vector.shape_cast %136 : vector<16xf32> to vector<16x1xf32>
    %cst_48 = arith.constant 3.200000e+01 : f32
    %138 = vector.broadcast %cst_48 : f32 to vector<16x1xf32>
    %139 = arith.divf %137, %138 : vector<16x1xf32>
    %140 = vector.broadcast %139 : vector<16x1xf32> to vector<16x32xf32>
    %141 = arith.subf %133, %140 : vector<16x32xf32>
    %142 = arith.mulf %141, %141 : vector<16x32xf32>
    %cst_49 = arith.constant dense<0.000000e+00> : vector<16xf32>
    %143 = vector.multi_reduction <add>, %142, %cst_49 [1] : vector<16x32xf32> to vector<16xf32>
    %144 = vector.shape_cast %143 : vector<16xf32> to vector<16x1xf32>
    %cst_50 = arith.constant 3.200000e+01 : f32
    %145 = vector.broadcast %cst_50 : f32 to vector<16x1xf32>
    %146 = arith.divf %144, %145 : vector<16x1xf32>
    %147 = vector.broadcast %139 : vector<16x1xf32> to vector<16x32xf32>
    %148 = arith.subf %133, %147 : vector<16x32xf32>
    %cst_51 = arith.constant 9.99999997E-7 : f32
    %149 = vector.broadcast %cst_51 : f32 to vector<16x1xf32>
    %150 = arith.addf %146, %149 : vector<16x1xf32>
    %151 = math.rsqrt %150 : vector<16x1xf32>
    %152 = vector.broadcast %151 : vector<16x1xf32> to vector<16x32xf32>
    %153 = arith.mulf %148, %152 : vector<16x32xf32>
    %154 = vector.broadcast %134 : vector<1x32xf32> to vector<16x32xf32>
    %155 = arith.mulf %153, %154 : vector<16x32xf32>
    %156 = vector.broadcast %135 : vector<1x32xf32> to vector<16x32xf32>
    %157 = arith.addf %155, %156 : vector<16x32xf32>
    %c0_52 = arith.constant 0 : index
    %c0_53 = arith.constant 0 : index
    %158 = vector.load %arg10[%c0_52, %c0_53] : memref<32x128xf32, #tpu.memory_space<vmem>>, vector<32x128xf32>
    %cst_54 = arith.constant dense<0.000000e+00> : vector<16x128xf32>
    %159 = tpu.matmul %157, %158, %cst_54 {dimension_numbers = #tpu.dot_dimension_numbers<[1], [0], [0], [1], [0, 0, 1, 1], [], []>} : vector<16x32xf32>, vector<32x128xf32>, vector<16x128xf32> -> vector<16x128xf32>
    %160 = vector.extract_strided_slice %159 {offsets = [0, 0], sizes = [16, 64], strides = [1, 1]} : vector<16x128xf32> to vector<16x64xf32>
    %cst_55 = arith.constant 5.000000e-01 : f32
    %161 = vector.broadcast %cst_55 : f32 to vector<16x64xf32>
    %162 = arith.mulf %161, %160 : vector<16x64xf32>
    %cst_56 = arith.constant 4.471500e-02 : f32
    %163 = vector.broadcast %cst_56 : f32 to vector<16x64xf32>
    %164 = arith.mulf %163, %160 : vector<16x64xf32>
    %165 = arith.mulf %164, %160 : vector<16x64xf32>
    %166 = arith.mulf %165, %160 : vector<16x64xf32>
    %167 = arith.addf %160, %166 : vector<16x64xf32>
    %cst_57 = arith.constant 0.797884583 : f32
    %168 = vector.broadcast %cst_57 : f32 to vector<16x64xf32>
    %169 = arith.mulf %168, %167 : vector<16x64xf32>
    %170 = math.tanh %169 : vector<16x64xf32>
    %cst_58 = arith.constant 1.000000e+00 : f32
    %171 = vector.broadcast %cst_58 : f32 to vector<16x64xf32>
    %172 = arith.addf %171, %170 : vector<16x64xf32>
    %173 = arith.mulf %162, %172 : vector<16x64xf32>
    %174 = vector.extract_strided_slice %159 {offsets = [0, 64], sizes = [16, 64], strides = [1, 1]} : vector<16x128xf32> to vector<16x64xf32>
    %175 = arith.mulf %173, %174 : vector<16x64xf32>
    %c0_59 = arith.constant 0 : index
    %c0_60 = arith.constant 0 : index
    %176 = vector.load %arg11[%c0_59, %c0_60] : memref<64x32xf32, #tpu.memory_space<vmem>>, vector<64x32xf32>
    %cst_61 = arith.constant dense<0.000000e+00> : vector<16x32xf32>
    %177 = tpu.matmul %175, %176, %cst_61 {dimension_numbers = #tpu.dot_dimension_numbers<[1], [0], [0], [1], [0, 0, 1, 1], [], []>} : vector<16x64xf32>, vector<64x32xf32>, vector<16x32xf32> -> vector<16x32xf32>
    %178 = arith.addf %133, %177 : vector<16x32xf32>
    %c0_62 = arith.constant 0 : index
    %c0_63 = arith.constant 0 : index
    %179 = vector.load %arg12[%c0_62, %c0_63] : memref<16x32xf32, #tpu.memory_space<vmem>>, vector<16x32xf32>
    tpu.vector_store %arg12[%c0_62, %c0_63], %178 {strides = array<i32>} : memref<16x32xf32, #tpu.memory_space<vmem>>, vector<16x32xf32>,
    return
  }
}

</mosaic_0001>

<llo_original>
// kernel: pix2struct_text_block.1
$region0: #{pix2struct_text_block.1}
  #allocation0 [shape = 'u32[]', space=smem, size = 0x4, offset = 0x4, fixed_abs, tag = 'smem constant byte address 0x4 - core index']
  #allocation1 [shape = 'u32[144,128]{1,0:T(1,128)}', space=vmem, size = 0x12000, scoped, tag = 'internal scratch']
  %s0 = inlined_call_operand.hbm [shape: f32[16,32], index: 0, kind: input, shape index: {}]
  %s1 = inlined_call_operand.vmem [shape: f32[32,32], index: 1, kind: input, shape index: {}]
  %s2 = inlined_call_operand.hbm [shape: f32[2,1,8,8], index: 2, kind: input, shape index: {}]
  %s3 = inlined_call_operand.vmem [shape: f32[2,1,1,16], index: 3, kind: input, shape index: {}]
  %s4 = inlined_call_operand.vmem [shape: f32[6,32], index: 4, kind: input, shape index: {}]
  %s5 = inlined_call_operand.vmem [shape: f32[32,96], index: 5, kind: input, shape index: {}]
  %s6 = inlined_call_operand.vmem [shape: f32[32,32], index: 6, kind: input, shape index: {}]
  %s7 = inlined_call_operand.hbm [shape: f32[32,32], index: 7, kind: input, shape index: {}]
  %s8 = inlined_call_operand.hbm [shape: f32[32,64], index: 8, kind: input, shape index: {}]
  %s9 = inlined_call_operand.hbm [shape: f32[32,32], index: 9, kind: input, shape index: {}]
  %s10 = inlined_call_operand.hbm [shape: f32[32,128], index: 10, kind: input, shape index: {}]
  %s11 = inlined_call_operand.vmem [shape: f32[64,32], index: 11, kind: input, shape index: {}]
  %s12 = inlined_call_operand.hbm [shape: f32[16,32], index: 12, kind: output, shape index: {}]
  %s13 = sld [smem:[#allocation0]]
  $region82: #{pix2struct_text_block.1} parent=0
    _
  %s15 = ssub.s32 1, %s13
  %s16 = scalar_select 0, %s15, %s13
  $region1: #{pix2struct_text_block.1} parent=0
    #allocation2 [shape = 'u8[8192]{0}', space=vmem, size = 0x2000, scoped, tag = 'input window, operand 0, single buffered']
    #allocation3 [shape = 's32[1]{0}', space=sflag, size = 0x4, scoped, tag = 'scoped memory for pix2struct_text_block.1']
    #allocation4 [shape = 's32[1]{0}', space=sflag, size = 0x4, scoped, tag = 'scoped memory for pix2struct_text_block.1']
    #allocation5 [shape = 'u8[8192]{0}', space=vmem, size = 0x2000, scoped, tag = 'input window, operand 2, single buffered']
    #allocation6 [shape = 's32[1]{0}', space=sflag, size = 0x4, scoped, tag = 'scoped memory for pix2struct_text_block.1']
    #allocation7 [shape = 'u8[16384]{0}', space=vmem, size = 0x4000, scoped, tag = 'input window, operand 7, single buffered']
    #allocation8 [shape = 'u8[16384]{0}', space=vmem, size = 0x4000, scoped, tag = 'input window, operand 8, single buffered']
    #allocation9 [shape = 's32[1]{0}', space=sflag, size = 0x4, scoped, tag = 'scoped memory for pix2struct_text_block.1']
    #allocation10 [shape = 'u8[16384]{0}', space=vmem, size = 0x4000, scoped, tag = 'input window, operand 9, single buffered']
    #allocation11 [shape = 'u8[16384]{0}', space=vmem, size = 0x4000, scoped, tag = 'input window, operand 10, single buffered']
    #allocation12 [shape = 's32[1]{0}', space=sflag, size = 0x4, scoped, tag = 'scoped memory for pix2struct_text_block.1']
    #allocation13 [shape = 'u8[8192]{0}', space=vmem, size = 0x2000, scoped, tag = 'output window, operand 0, single buffered']
    %17 = vsyncpa [#allocation3], 0
    %18 = vsyncpa [#allocation6], 0
    %19 = vsyncpa [#allocation9], 0
    %20 = vsyncpa [#allocation12], 0
    %21 = vsyncpa [#allocation4], 0
    // Predicated region
    $region2: #{pix2struct_text_block.1} parent=1 // pred_check
      _
    $region3: #{pix2struct_text_block.1} parent=1 // pred_check_branch
      %23 = sbr.rel (0) target = $region5
    $region4: #{pix2struct_text_block.1} parent=1 // pred_region
      %s25 = ssub.s32 256, 256
      %26 = vsyncadd [#allocation3], %s25
      %s27 = sshll.u32 [#allocation2], 4
      %s28 = int_to_ptr.vmem [resolvable:$true] %s27
      %33 = dma.hbm_to_vmem [thread:$0]  %s0, 256, %s28, [#allocation3], 128, 128, 8
    $region5: #{pix2struct_text_block.1} parent=1 // pred_fallthru
      _
    // Predicated region
    $region6: #{pix2struct_text_block.1} parent=1 // pred_check
      _
    $region7: #{pix2struct_text_block.1} parent=1 // pred_check_branch
      %35 = sbr.rel (0) target = $region9
    $region8: #{pix2struct_text_block.1} parent=1 // pred_region
      _
    $region9: #{pix2struct_text_block.1} parent=1 // pred_fallthru
      _
    // Predicated region
    $region10: #{pix2struct_text_block.1} parent=1 // pred_check
      _
    $region11: #{pix2struct_text_block.1} parent=1 // pred_check_branch
      %37 = sbr.rel (0) target = $region13
    $region12: #{pix2struct_text_block.1} parent=1 // pred_region
      %s39 = ssub.s32 256, 256
      %40 = vsyncadd [#allocation6], %s39
      %s41 = sshll.u32 [#allocation5], 4
      %s42 = int_to_ptr.vmem [resolvable:$true] %s41
      %47 = dma.hbm_to_vmem [thread:$0]  %s2, 256, %s42, [#allocation6], 128, 128, 8
    $region13: #{pix2struct_text_block.1} parent=1 // pred_fallthru
      _
    // Predicated region
    $region14: #{pix2struct_text_block.1} parent=1 // pred_check
      _
    $region15: #{pix2struct_text_block.1} parent=1 // pred_check_branch
      %49 = sbr.rel (0) target = $region17
    $region16: #{pix2struct_text_block.1} parent=1 // pred_region
      _
    $region17: #{pix2struct_text_block.1} parent=1 // pred_fallthru
      _
    // Predicated region
    $region18: #{pix2struct_text_block.1} parent=1 // pred_check
      _
    $region19: #{pix2struct_text_block.1} parent=1 // pred_check_branch
      %51 = sbr.rel (0) target = $region21
    $region20: #{pix2struct_text_block.1} parent=1 // pred_region
      _
    $region21: #{pix2struct_text_block.1} parent=1 // pred_fallthru
      _
    // Predicated region
    $region22: #{pix2struct_text_block.1} parent=1 // pred_check
      _
    $region23: #{pix2struct_text_block.1} parent=1 // pred_check_branch
      %53 = sbr.rel (0) target = $region25
    $region24: #{pix2struct_text_block.1} parent=1 // pred_region
      _
    $region25: #{pix2struct_text_block.1} parent=1 // pred_fallthru
      _
    // Predicated region
    $region26: #{pix2struct_text_block.1} parent=1 // pred_check
      _
    $region27: #{pix2struct_text_block.1} parent=1 // pred_check_branch
      %55 = sbr.rel (0) target = $region29
    $region28: #{pix2struct_text_block.1} parent=1 // pred_region
      _
    $region29: #{pix2struct_text_block.1} parent=1 // pred_fallthru
      _
    // Predicated region
    $region30: #{pix2struct_text_block.1} parent=1 // pred_check
      _
    $region31: #{pix2struct_text_block.1} parent=1 // pred_check_branch
      %57 = sbr.rel (0) target = $region33
    $region32: #{pix2struct_text_block.1} parent=1 // pred_region
      %s59 = ssub.s32 512, 512
      %60 = vsyncadd [#allocation6], %s59
      %s61 = sshll.u32 [#allocation7], 4
      %s62 = int_to_ptr.vmem [resolvable:$true] %s61
      %67 = dma.hbm_to_vmem [thread:$0]  %s7, 512, %s62, [#allocation6], 128, 128, 8
    $region33: #{pix2struct_text_block.1} parent=1 // pred_fallthru
      _
    // Predicated region
    $region34: #{pix2struct_text_block.1} parent=1 // pred_check
      _
    $region35: #{pix2struct_text_block.1} parent=1 // pred_check_branch
      %69 = sbr.rel (0) target = $region37
    $region36: #{pix2struct_text_block.1} parent=1 // pred_region
      %s71 = ssub.s32 512, 512
      %72 = vsyncadd [#allocation9], %s71
      %s73 = sshll.u32 [#allocation8], 4
      %s74 = int_to_ptr.vmem [resolvable:$true] %s73
      %79 = dma.hbm_to_vmem [thread:$0]  %s8, 512, %s74, [#allocation9], 128, 128, 8
    $region37: #{pix2struct_text_block.1} parent=1 // pred_fallthru
      _
    // Predicated region
    $region38: #{pix2struct_text_block.1} parent=1 // pred_check
      _
    $region39: #{pix2struct_text_block.1} parent=1 // pred_check_branch
      %81 = sbr.rel (0) target = $region41
    $region40: #{pix2struct_text_block.1} parent=1 // pred_region
      %s83 = ssub.s32 512, 512
      %84 = vsyncadd [#allocation9], %s83
      %s85 = sshll.u32 [#allocation10], 4
      %s86 = int_to_ptr.vmem [resolvable:$true] %s85
      %91 = dma.hbm_to_vmem [thread:$0]  %s9, 512, %s86, [#allocation9], 128, 128, 8
    $region41: #{pix2struct_text_block.1} parent=1 // pred_fallthru
      _
    // Predicated region
    $region42: #{pix2struct_text_block.1} parent=1 // pred_check
      _
    $region43: #{pix2struct_text_block.1} parent=1 // pred_check_branch
      %93 = sbr.rel (0) target = $region45
    $region44: #{pix2struct_text_block.1} parent=1 // pred_region
      %s95 = ssub.s32 512, 512
      %96 = vsyncadd [#allocation12], %s95
      %s97 = sshll.u32 [#allocation11], 4
      %s98 = int_to_ptr.vmem [resolvable:$true] %s97
      %103 = dma.hbm_to_vmem [thread:$0]  %s10, 512, %s98, [#allocation12], 128, 128, 8
    $region45: #{pix2struct_text_block.1} parent=1 // pred_fallthru
      _
    // Predicated region
    $region46: #{pix2struct_text_block.1} parent=1 // pred_check
      _
    $region47: #{pix2struct_text_block.1} parent=1 // pred_check_branch
      %105 = sbr.rel (0) target = $region49
    $region48: #{pix2struct_text_block.1} parent=1 // pred_region
      _
    $region49: #{pix2struct_text_block.1} parent=1 // pred_fallthru
      _
    // Predicated region
    $region50: #{pix2struct_text_block.1} parent=1 // pred_check
      _
    $region51: #{pix2struct_text_block.1} parent=1 // pred_check_branch
      %107 = sbr.rel (0) target = $region53
    $region52: #{pix2struct_text_block.1} parent=1 // pred_region
      %108 = dma.done [#allocation3], 256
    $region53: #{pix2struct_text_block.1} parent=1 // pred_fallthru
      _
    // Predicated region
    $region54: #{pix2struct_text_block.1} parent=1 // pred_check
      _
    $region55: #{pix2struct_text_block.1} parent=1 // pred_check_branch
      %110 = sbr.rel (0) target = $region57
    $region56: #{pix2struct_text_block.1} parent=1 // pred_region
      %111 = dma.done [#allocation6], 256
    $region57: #{pix2struct_text_block.1} parent=1 // pred_fallthru
      _
    // Predicated region
    $region58: #{pix2struct_text_block.1} parent=1 // pred_check
      _
    $region59: #{pix2struct_text_block.1} parent=1 // pred_check_branch
      %113 = sbr.rel (0) target = $region61
    $region60: #{pix2struct_text_block.1} parent=1 // pred_region
      %114 = dma.done [#allocation6], 512
    $region61: #{pix2struct_text_block.1} parent=1 // pred_fallthru
      _
    // Predicated region
    $region62: #{pix2struct_text_block.1} parent=1 // pred_check
      _
    $region63: #{pix2struct_text_block.1} parent=1 // pred_check_branch
      %116 = sbr.rel (0) target = $region65
    $region64: #{pix2struct_text_block.1} parent=1 // pred_region
      %117 = dma.done [#allocation9], 512
    $region65: #{pix2struct_text_block.1} parent=1 // pred_fallthru
      _
    // Predicated region
    $region66: #{pix2struct_text_block.1} parent=1 // pred_check
      _
    $region67: #{pix2struct_text_block.1} parent=1 // pred_check_branch
      %119 = sbr.rel (0) target = $region69
    $region68: #{pix2struct_text_block.1} parent=1 // pred_region
      %120 = dma.done [#allocation9], 512
    $region69: #{pix2struct_text_block.1} parent=1 // pred_fallthru
      _
    // Predicated region
    $region70: #{pix2struct_text_block.1} parent=1 // pred_check
      _
    $region71: #{pix2struct_text_block.1} parent=1 // pred_check_branch
      %122 = sbr.rel (0) target = $region73
    $region72: #{pix2struct_text_block.1} parent=1 // pred_region
      %123 = dma.done [#allocation12], 512
    $region73: #{pix2struct_text_block.1} parent=1 // pred_fallthru
      _
    %v124 = vld [vmem:[#allocation2] sm:$0xff]
    %v125 = vld [vmem:[#allocation2 + $0x8] sm:$0xff]
    %v126 = vld [vmem:[%s1] sm:$0xff]
    %v127 = vld [vmem:[%s1 + $0x8] sm:$0xff]
    %v128 = vld [vmem:[%s1 + $0x10] sm:$0xff]
    %v129 = vld [vmem:[%s1 + $0x18] sm:$0xff]
    %v130 = vld [vmem:[%s4] sm:$0x3f]
    %vm131 = vcmask 261120
    %v132 = vsel %vm131, %v124, 0.0
    %133 = vadd.xlane.f32.xlu0 %v132
    %v134 = vpop.xlane.xlu0 %133
    %v135 = vsel %vm131, %v125, 0.0
    %136 = vadd.xlane.f32.xlu0 %v135
    %v137 = vpop.xlane.xlu0 %136
    %v138 = vrcp.pop 32.0
    %v139 = vmul.f32 %v134, %v138
    %v140 = vmul.f32 %v137, %v138
    %v141 = vsub.f32 %v124, %v139
    %v142 = vsub.f32 %v125, %v140
    %v143 = vmul.f32 %v141, %v141
    %v144 = vmul.f32 %v142, %v142
    %v145 = vsel %vm131, %v143, 0.0
    %146 = vadd.xlane.f32.xlu0 %v145
    %v147 = vpop.xlane.xlu0 %146
    %v148 = vsel %vm131, %v144, 0.0
    %149 = vadd.xlane.f32.xlu0 %v148
    %v150 = vpop.xlane.xlu0 %149
    %v151 = vmul.f32 %v147, %v138
    %v152 = vmul.f32 %v150, %v138
    %v153 = vadd.f32 %v151, 1e-06
    %v154 = vadd.f32 %v152, 1e-06
    %v155 = vrsqrt.pop %v153
    %v156 = vrsqrt.pop %v154
    %v157 = vmul.f32 %v141, %v155
    %v158 = vmul.f32 %v142, %v156
    %v159 = vlaneseq
    %v160 = vshrl.u32 %v159, 7
    %v161 = vsub.s32 0, %v160
    %v162 = vrot.slane %v130, %v161
    %v163 = vmul.f32 %v157, %v162
    %v164 = vmul.f32 %v158, %v162
    %v165 = vlaneseq
    %v166 = vshrl.u32 %v165, 7
    %v167 = vsub.s32 1, %v166
    %v168 = vrot.slane %v130, %v167
    %v169 = vadd.f32 %v163, %v168
    %v170 = vadd.f32 %v164, %v168
    %v171 = vld [vmem:[%s5] sm:$0xff]
    %v172 = vld [vmem:[%s5 + $0x8] sm:$0xff]
    %v173 = vld [vmem:[%s5 + $0x10] sm:$0xff]
    %v174 = vld [vmem:[%s5 + $0x18] sm:$0xff]
    %v176 = vsel %vm131, %v169, 0
    %v179 = vsel %vm131, %v170, 0
    %181 = vmatprep.subr.mxu0 0.0
    %182 = vmatpush1.msra.mxu0 %v171
    %183 = vmatprep.subr.mxu0 0.0
    %184 = vmatpush1.msra.mxu0 %v172
    %185 = vmatprep.subr.mxu0 0.0
    %186 = vmatpush1.msra.mxu0 %v173
    %187 = vmatprep.subr.mxu0 0.0
    %188 = vmatpush1.msra.mxu0 %v174
    %189 = vmatprep.subr.mxu0 0.0
    %190 = vmatpush1.msra.mxu0 0.0
    %191 = vmatprep.subr.mxu0 0.0
    %192 = vmatpush1.msra.mxu0 0.0
    %193 = vmatprep.subr.mxu0 0.0
    %194 = vmatpush1.msra.mxu0 0.0
    %195 = vmatprep.subr.mxu0 0.0
    %196 = vmatpush1.msra.mxu0 0.0
    %197 = vmatprep.subr.mxu0 0.0
    %198 = vmatpush1.msra.mxu0 0.0
    %199 = vmatprep.subr.mxu0 0.0
    %200 = vmatpush1.msra.mxu0 0.0
    %201 = vmatprep.subr.mxu0 0.0
    %202 = vmatpush1.msra.mxu0 0.0
    %203 = vmatprep.subr.mxu0 0.0
    %204 = vmatpush1.msra.mxu0 0.0
    %205 = vmatprep.subr.mxu0 0.0
    %206 = vmatpush1.msra.mxu0 0.0
    %207 = vmatprep.subr.mxu0 0.0
    %208 = vmatpush1.msra.mxu0 0.0
    %209 = vmatprep.subr.mxu0 0.0
    %210 = vmatpush1.msra.mxu0 0.0
    %211 = vmatprep.subr.mxu0 0.0
    %212 = vmatpush1.msra.mxu0 0.0
    %213 = vmatprep.subr.mxu0 0.0
    %214 = vmatpush1.msra.mxu0 0.0
    %215 = vmatprep.subr.mxu0 0.0
    %216 = vmatpush1.msra.mxu0 0.0
    %217 = vmatprep.subr.mxu0 0.0
    %218 = vmatpush1.msra.mxu0 0.0
    %219 = vmatprep.subr.mxu0 0.0
    %220 = vmatpush1.msra.mxu0 0.0
    %221 = vmatprep.subr.mxu0 0.0
    %222 = vmatpush1.msra.mxu0 0.0
    %223 = vmatprep.subr.mxu0 0.0
    %224 = vmatpush1.msra.mxu0 0.0
    %225 = vmatprep.subr.mxu0 0.0
    %226 = vmatpush1.msra.mxu0 0.0
    %227 = vmatprep.subr.mxu0 0.0
    %228 = vmatpush1.msra.mxu0 0.0
    %229 = vmatprep.subr.mxu0 0.0
    %230 = vmatpush1.msra.mxu0 0.0
    %231 = vmatprep.subr.mxu0 0.0
    %232 = vmatpush1.msra.mxu0 0.0
    %233 = vmatprep.subr.mxu0 0.0
    %234 = vmatpush1.msra.mxu0 0.0
    %235 = vmatprep.subr.mxu0 0.0
    %236 = vmatpush1.msra.mxu0 0.0
    %237 = vmatprep.subr.mxu0 0.0
    %238 = vmatpush1.msra.mxu0 0.0
    %239 = vmatprep.subr.mxu0 0.0
    %240 = vmatpush1.msra.mxu0 0.0
    %241 = vmatprep.subr.mxu0 0.0
    %242 = vmatpush1.msra.mxu0 0.0
    %243 = vmatprep.subr.mxu0 0.0
    %244 = vmatpush1.msra.mxu0 0.0
    %245 = vmatprep.mubr.f32.mxu0 0.0
    %246 = vmatmul.mubr.f32.gmra.mrb[0].mxu0 %v176
    %v247 = vpop.f32.mrb[0].mxu0
    %v248 = vadd.f32 0.0, %v247
    %v249 = vpop.f32.mrb[0].mxu0
    %250 = vmatprep.mubr.f32.mxu0 0.0
    %251 = vmatmul.mubr.f32.gmra.mrb[0].mxu0 %v179
    %v252 = vpop.f32.mrb[0].mxu0
    %v253 = vadd.f32 0.0, %v252
    %v254 = vpop.f32.mrb[0].mxu0
    %255 = vdwg.mxu0
    %258 = vrot.lane.b32.xlu0 %v248, 120
    %v259 = vpop.permute.xlu0 %258
    %260 = vrot.lane.b32.xlu0 %v253, 120
    %v261 = vpop.permute.xlu0 %260
    %264 = vrot.lane.b32.xlu0 %v248, 112
    %v265 = vpop.permute.xlu0 %264
    %266 = vrot.lane.b32.xlu0 %v253, 112
    %v267 = vpop.permute.xlu0 %266
    %270 = vrot.lane.b32.xlu0 %v248, 104
    %v271 = vpop.permute.xlu0 %270
    %272 = vrot.lane.b32.xlu0 %v253, 104
    %v273 = vpop.permute.xlu0 %272
    %v276 = vcombine.low %v248, %v265
    %v277 = vcombine.high %v248, %v265
    %v279 = vunpack.c.l.s4 1983009808
    %v280 = vunpack.c.0.s8 %v279
    %v281 = vlaneseq
    %v282 = vshrl.u32 %v281, 7
    %v283 = vsub.s32 %v280, %v282
    %v284 = vrot.slane %v276, %v283
    %v286 = vunpack.c.l.s4 1983009808
    %v287 = vunpack.c.0.s8 %v286
    %v288 = vlaneseq
    %v289 = vshrl.u32 %v288, 7
    %v290 = vsub.s32 %v287, %v289
    %v291 = vrot.slane %v277, %v290
    %v292 = vcombine.low %v259, %v271
    %v293 = vcombine.high %v259, %v271
    %v295 = vunpack.c.l.s4 1983009808
    %v296 = vunpack.c.0.s8 %v295
    %v297 = vlaneseq
    %v298 = vshrl.u32 %v297, 7
    %v299 = vsub.s32 %v296, %v298
    %v300 = vrot.slane %v292, %v299
    %v302 = vunpack.c.l.s4 1983009808
    %v303 = vunpack.c.0.s8 %v302
    %v304 = vlaneseq
    %v305 = vshrl.u32 %v304, 7
    %v306 = vsub.s32 %v303, %v305
    %v307 = vrot.slane %v293, %v306
    %v308 = vcombine.low %v284, %v300
    %v309 = vcombine.high %v284, %v300
    %v311 = vunpack.c.l.s4 1934713408
    %v312 = vunpack.c.0.s8 %v311
    %v313 = vlaneseq
    %v314 = vshrl.u32 %v313, 7
    %v315 = vsub.s32 %v312, %v314
    %v316 = vrot.slane %v308, %v315
    %v318 = vunpack.c.l.s4 1934713408
    %v319 = vunpack.c.0.s8 %v318
    %v320 = vlaneseq
    %v321 = vshrl.u32 %v320, 7
    %v322 = vsub.s32 %v319, %v321
    %v323 = vrot.slane %v309, %v322
    %v324 = vcombine.low %v291, %v307
    %v325 = vcombine.high %v291, %v307
    %v327 = vunpack.c.l.s4 1934713408
    %v328 = vunpack.c.0.s8 %v327
    %v329 = vlaneseq
    %v330 = vshrl.u32 %v329, 7
    %v331 = vsub.s32 %v328, %v330
    %v332 = vrot.slane %v324, %v331
    %v334 = vunpack.c.l.s4 1934713408
    %v335 = vunpack.c.0.s8 %v334
    %v336 = vlaneseq
    %v337 = vshrl.u32 %v336, 7
    %v338 = vsub.s32 %v335, %v337
    %v339 = vrot.slane %v325, %v338
    %v340 = vcombine.high %v316, 0.0
    %v341 = vcombine.high %v323, 0.0
    %v342 = vcombine.high %v332, 0.0
    %v343 = vcombine.high %v339, 0.0
    %v344 = vcombine.low %v253, %v267
    %v345 = vcombine.high %v253, %v267
    %v347 = vunpack.c.l.s4 1983009808
    %v348 = vunpack.c.0.s8 %v347
    %v349 = vlaneseq
    %v350 = vshrl.u32 %v349, 7
    %v351 = vsub.s32 %v348, %v350
    %v352 = vrot.slane %v344, %v351
    %v354 = vunpack.c.l.s4 1983009808
    %v355 = vunpack.c.0.s8 %v354
    %v356 = vlaneseq
    %v357 = vshrl.u32 %v356, 7
    %v358 = vsub.s32 %v355, %v357
    %v359 = vrot.slane %v345, %v358
    %v360 = vcombine.low %v261, %v273
    %v361 = vcombine.high %v261, %v273
    %v363 = vunpack.c.l.s4 1983009808
    %v364 = vunpack.c.0.s8 %v363
    %v365 = vlaneseq
    %v366 = vshrl.u32 %v365, 7
    %v367 = vsub.s32 %v364, %v366
    %v368 = vrot.slane %v360, %v367
    %v370 = vunpack.c.l.s4 1983009808
    %v371 = vunpack.c.0.s8 %v370
    %v372 = vlaneseq
    %v373 = vshrl.u32 %v372, 7
    %v374 = vsub.s32 %v371, %v373
    %v375 = vrot.slane %v361, %v374
    %v376 = vcombine.low %v352, %v368
    %v377 = vcombine.high %v352, %v368
    %v379 = vunpack.c.l.s4 1934713408
    %v380 = vunpack.c.0.s8 %v379
    %v381 = vlaneseq
    %v382 = vshrl.u32 %v381, 7
    %v383 = vsub.s32 %v380, %v382
    %v384 = vrot.slane %v376, %v383
    %v386 = vunpack.c.l.s4 1934713408
    %v387 = vunpack.c.0.s8 %v386
    %v388 = vlaneseq
    %v389 = vshrl.u32 %v388, 7
    %v390 = vsub.s32 %v387, %v389
    %v391 = vrot.slane %v377, %v390
    %v392 = vcombine.low %v359, %v375
    %v393 = vcombine.high %v359, %v375
    %v395 = vunpack.c.l.s4 1934713408
    %v396 = vunpack.c.0.s8 %v395
    %v397 = vlaneseq
    %v398 = vshrl.u32 %v397, 7
    %v399 = vsub.s32 %v396, %v398
    %v400 = vrot.slane %v392, %v399
    %v402 = vunpack.c.l.s4 1934713408
    %v403 = vunpack.c.0.s8 %v402
    %v404 = vlaneseq
    %v405 = vshrl.u32 %v404, 7
    %v406 = vsub.s32 %v403, %v405
    %v407 = vrot.slane %v393, %v406
    %v408 = vcombine.high %v384, 0.0
    %v409 = vcombine.high %v391, 0.0
    %v410 = vcombine.high %v400, 0.0
    %v411 = vcombine.high %v407, 0.0
    %v412 = vcombine.low %v316, %v323
    %v414 = vunpack.c.l.s4 1983009808
    %v415 = vunpack.c.0.s8 %v414
    %v416 = vlaneseq
    %v417 = vshrl.u32 %v416, 7
    %v418 = vsub.s32 %v415, %v417
    %v419 = vrot.slane %v412, %v418
    %v420 = vcombine.low %v340, %v341
    %v422 = vunpack.c.l.s4 1983009808
    %v423 = vunpack.c.0.s8 %v422
    %v424 = vlaneseq
    %v425 = vshrl.u32 %v424, 7
    %v426 = vsub.s32 %v423, %v425
    %v427 = vrot.slane %v420, %v426
    %v428 = vcombine.low %v332, %v339
    %v430 = vunpack.c.l.s4 1983009808
    %v431 = vunpack.c.0.s8 %v430
    %v432 = vlaneseq
    %v433 = vshrl.u32 %v432, 7
    %v434 = vsub.s32 %v431, %v433
    %v435 = vrot.slane %v428, %v434
    %v436 = vcombine.low %v342, %v343
    %v438 = vunpack.c.l.s4 1983009808
    %v439 = vunpack.c.0.s8 %v438
    %v440 = vlaneseq
    %v441 = vshrl.u32 %v440, 7
    %v442 = vsub.s32 %v439, %v441
    %v443 = vrot.slane %v436, %v442
    %v444 = vcombine.low %v419, %v427
    %v445 = vcombine.high %v419, %v427
    %v447 = vunpack.c.l.s4 1934713408
    %v448 = vunpack.c.0.s8 %v447
    %v449 = vlaneseq
    %v450 = vshrl.u32 %v449, 7
    %v451 = vsub.s32 %v448, %v450
    %v452 = vrot.slane %v444, %v451
    %v454 = vunpack.c.l.s4 1934713408
    %v455 = vunpack.c.0.s8 %v454
    %v456 = vlaneseq
    %v457 = vshrl.u32 %v456, 7
    %v458 = vsub.s32 %v455, %v457
    %v459 = vrot.slane %v445, %v458
    %v460 = vcombine.low %v435, %v443
    %v461 = vcombine.high %v435, %v443
    %v463 = vunpack.c.l.s4 1934713408
    %v464 = vunpack.c.0.s8 %v463
    %v465 = vlaneseq
    %v466 = vshrl.u32 %v465, 7
    %v467 = vsub.s32 %v464, %v466
    %v468 = vrot.slane %v460, %v467
    %v470 = vunpack.c.l.s4 1934713408
    %v471 = vunpack.c.0.s8 %v470
    %v472 = vlaneseq
    %v473 = vshrl.u32 %v472, 7
    %v474 = vsub.s32 %v471, %v473
    %v475 = vrot.slane %v461, %v474
    %v476 = vcombine.low %v452, %v468
    %v477 = vcombine.high %v452, %v468
    %v478 = vcombine.low %v459, %v475
    %v479 = vcombine.high %v459, %v475
    %v480 = vcombine.low %v384, %v391
    %v482 = vunpack.c.l.s4 1983009808
    %v483 = vunpack.c.0.s8 %v482
    %v484 = vlaneseq
    %v485 = vshrl.u32 %v484, 7
    %v486 = vsub.s32 %v483, %v485
    %v487 = vrot.slane %v480, %v486
    %v488 = vcombine.low %v408, %v409
    %v490 = vunpack.c.l.s4 1983009808
    %v491 = vunpack.c.0.s8 %v490
    %v492 = vlaneseq
    %v493 = vshrl.u32 %v492, 7
    %v494 = vsub.s32 %v491, %v493
    %v495 = vrot.slane %v488, %v494
    %v496 = vcombine.low %v400, %v407
    %v498 = vunpack.c.l.s4 1983009808
    %v499 = vunpack.c.0.s8 %v498
    %v500 = vlaneseq
    %v501 = vshrl.u32 %v500, 7
    %v502 = vsub.s32 %v499, %v501
    %v503 = vrot.slane %v496, %v502
    %v504 = vcombine.low %v410, %v411
    %v506 = vunpack.c.l.s4 1983009808
    %v507 = vunpack.c.0.s8 %v506
    %v508 = vlaneseq
    %v509 = vshrl.u32 %v508, 7
    %v510 = vsub.s32 %v507, %v509
    %v511 = vrot.slane %v504, %v510
    %v512 = vcombine.low %v487, %v495
    %v513 = vcombine.high %v487, %v495
    %v515 = vunpack.c.l.s4 1934713408
    %v516 = vunpack.c.0.s8 %v515
    %v517 = vlaneseq
    %v518 = vshrl.u32 %v517, 7
    %v519 = vsub.s32 %v516, %v518
    %v520 = vrot.slane %v512, %v519
    %v522 = vunpack.c.l.s4 1934713408
    %v523 = vunpack.c.0.s8 %v522
    %v524 = vlaneseq
    %v525 = vshrl.u32 %v524, 7
    %v526 = vsub.s32 %v523, %v525
    %v527 = vrot.slane %v513, %v526
    %v528 = vcombine.low %v503, %v511
    %v529 = vcombine.high %v503, %v511
    %v531 = vunpack.c.l.s4 1934713408
    %v532 = vunpack.c.0.s8 %v531
    %v533 = vlaneseq
    %v534 = vshrl.u32 %v533, 7
    %v535 = vsub.s32 %v532, %v534
    %v536 = vrot.slane %v528, %v535
    %v538 = vunpack.c.l.s4 1934713408
    %v539 = vunpack.c.0.s8 %v538
    %v540 = vlaneseq
    %v541 = vshrl.u32 %v540, 7
    %v542 = vsub.s32 %v539, %v541
    %v543 = vrot.slane %v529, %v542
    %v544 = vcombine.low %v520, %v536
    %v545 = vcombine.high %v520, %v536
    %v546 = vcombine.low %v527, %v543
    %v547 = vcombine.high %v527, %v543
    %548 = vrot.lane.b32.xlu0 %v248, 96
    %v549 = vpop.permute.xlu0 %548
    %550 = vrot.lane.b32.xlu0 %v253, 96
    %v551 = vpop.permute.xlu0 %550
    %552 = vrot.lane.b32.xlu0 %v259, 96
    %v553 = vpop.permute.xlu0 %552
    %554 = vrot.lane.b32.xlu0 %v261, 96
    %v555 = vpop.permute.xlu0 %554
    %556 = vrot.lane.b32.xlu0 %v265, 96
    %v557 = vpop.permute.xlu0 %556
    %558 = vrot.lane.b32.xlu0 %v267, 96
    %v559 = vpop.permute.xlu0 %558
    %560 = vrot.lane.b32.xlu0 %v271, 96
    %v561 = vpop.permute.xlu0 %560
    %562 = vrot.lane.b32.xlu0 %v273, 96
    %v563 = vpop.permute.xlu0 %562
    %v572 = vcombine.low %v549, %v557
    %v573 = vcombine.high %v549, %v557
    %v575 = vunpack.c.l.s4 1983009808
    %v576 = vunpack.c.0.s8 %v575
    %v577 = vlaneseq
    %v578 = vshrl.u32 %v577, 7
    %v579 = vsub.s32 %v576, %v578
    %v580 = vrot.slane %v572, %v579
    %v582 = vunpack.c.l.s4 1983009808
    %v583 = vunpack.c.0.s8 %v582
    %v584 = vlaneseq
    %v585 = vshrl.u32 %v584, 7
    %v586 = vsub.s32 %v583, %v585
    %v587 = vrot.slane %v573, %v586
    %v588 = vcombine.low %v553, %v561
    %v589 = vcombine.high %v553, %v561
    %v591 = vunpack.c.l.s4 1983009808
    %v592 = vunpack.c.0.s8 %v591
    %v593 = vlaneseq
    %v594 = vshrl.u32 %v593, 7
    %v595 = vsub.s32 %v592, %v594
    %v596 = vrot.slane %v588, %v595
    %v598 = vunpack.c.l.s4 1983009808
    %v599 = vunpack.c.0.s8 %v598
    %v600 = vlaneseq
    %v601 = vshrl.u32 %v600, 7
    %v602 = vsub.s32 %v599, %v601
    %v603 = vrot.slane %v589, %v602
    %v604 = vcombine.low %v580, %v596
    %v605 = vcombine.high %v580, %v596
    %v607 = vunpack.c.l.s4 1934713408
    %v608 = vunpack.c.0.s8 %v607
    %v609 = vlaneseq
    %v610 = vshrl.u32 %v609, 7
    %v611 = vsub.s32 %v608, %v610
    %v612 = vrot.slane %v604, %v611
    %v614 = vunpack.c.l.s4 1934713408
    %v615 = vunpack.c.0.s8 %v614
    %v616 = vlaneseq
    %v617 = vshrl.u32 %v616, 7
    %v618 = vsub.s32 %v615, %v617
    %v619 = vrot.slane %v605, %v618
    %v620 = vcombine.low %v587, %v603
    %v621 = vcombine.high %v587, %v603
    %v623 = vunpack.c.l.s4 1934713408
    %v624 = vunpack.c.0.s8 %v623
    %v625 = vlaneseq
    %v626 = vshrl.u32 %v625, 7
    %v627 = vsub.s32 %v624, %v626
    %v628 = vrot.slane %v620, %v627
    %v630 = vunpack.c.l.s4 1934713408
    %v631 = vunpack.c.0.s8 %v630
    %v632 = vlaneseq
    %v633 = vshrl.u32 %v632, 7
    %v634 = vsub.s32 %v631, %v633
    %v635 = vrot.slane %v621, %v634
    %v636 = vcombine.high %v612, 0.0
    %v637 = vcombine.high %v619, 0.0
    %v638 = vcombine.high %v628, 0.0
    %v639 = vcombine.high %v635, 0.0
    %v640 = vcombine.low %v551, %v559
    %v641 = vcombine.high %v551, %v559
    %v643 = vunpack.c.l.s4 1983009808
    %v644 = vunpack.c.0.s8 %v643
    %v645 = vlaneseq
    %v646 = vshrl.u32 %v645, 7
    %v647 = vsub.s32 %v644, %v646
    %v648 = vrot.slane %v640, %v647
    %v650 = vunpack.c.l.s4 1983009808
    %v651 = vunpack.c.0.s8 %v650
    %v652 = vlaneseq
    %v653 = vshrl.u32 %v652, 7
    %v654 = vsub.s32 %v651, %v653
    %v655 = vrot.slane %v641, %v654
    %v656 = vcombine.low %v555, %v563
    %v657 = vcombine.high %v555, %v563
    %v659 = vunpack.c.l.s4 1983009808
    %v660 = vunpack.c.0.s8 %v659
    %v661 = vlaneseq
    %v662 = vshrl.u32 %v661, 7
    %v663 = vsub.s32 %v660, %v662
    %v664 = vrot.slane %v656, %v663
    %v666 = vunpack.c.l.s4 1983009808
    %v667 = vunpack.c.0.s8 %v666
    %v668 = vlaneseq
    %v669 = vshrl.u32 %v668, 7
    %v670 = vsub.s32 %v667, %v669
    %v671 = vrot.slane %v657, %v670
    %v672 = vcombine.low %v648, %v664
    %v673 = vcombine.high %v648, %v664
    %v675 = vunpack.c.l.s4 1934713408
    %v676 = vunpack.c.0.s8 %v675
    %v677 = vlaneseq
    %v678 = vshrl.u32 %v677, 7
    %v679 = vsub.s32 %v676, %v678
    %v680 = vrot.slane %v672, %v679
    %v682 = vunpack.c.l.s4 1934713408
    %v683 = vunpack.c.0.s8 %v682
    %v684 = vlaneseq
    %v685 = vshrl.u32 %v684, 7
    %v686 = vsub.s32 %v683, %v685
    %v687 = vrot.slane %v673, %v686
    %v688 = vcombine.low %v655, %v671
    %v689 = vcombine.high %v655, %v671
    %v691 = vunpack.c.l.s4 1934713408
    %v692 = vunpack.c.0.s8 %v691
    %v693 = vlaneseq
    %v694 = vshrl.u32 %v693, 7
    %v695 = vsub.s32 %v692, %v694
    %v696 = vrot.slane %v688, %v695
    %v698 = vunpack.c.l.s4 1934713408
    %v699 = vunpack.c.0.s8 %v698
    %v700 = vlaneseq
    %v701 = vshrl.u32 %v700, 7
    %v702 = vsub.s32 %v699, %v701
    %v703 = vrot.slane %v689, %v702
    %v704 = vcombine.high %v680, 0.0
    %v705 = vcombine.high %v687, 0.0
    %v706 = vcombine.high %v696, 0.0
    %v707 = vcombine.high %v703, 0.0
    %v708 = vcombine.low %v612, %v619
    %v710 = vunpack.c.l.s4 1983009808
    %v711 = vunpack.c.0.s8 %v710
    %v712 = vlaneseq
    %v713 = vshrl.u32 %v712, 7
    %v714 = vsub.s32 %v711, %v713
    %v715 = vrot.slane %v708, %v714
    %v716 = vcombine.low %v636, %v637
    %v718 = vunpack.c.l.s4 1983009808
    %v719 = vunpack.c.0.s8 %v718
    %v720 = vlaneseq
    %v721 = vshrl.u32 %v720, 7
    %v722 = vsub.s32 %v719, %v721
    %v723 = vrot.slane %v716, %v722
    %v724 = vcombine.low %v628, %v635
    %v726 = vunpack.c.l.s4 1983009808
    %v727 = vunpack.c.0.s8 %v726
    %v728 = vlaneseq
    %v729 = vshrl.u32 %v728, 7
    %v730 = vsub.s32 %v727, %v729
    %v731 = vrot.slane %v724, %v730
    %v732 = vcombine.low %v638, %v639
    %v734 = vunpack.c.l.s4 1983009808
    %v735 = vunpack.c.0.s8 %v734
    %v736 = vlaneseq
    %v737 = vshrl.u32 %v736, 7
    %v738 = vsub.s32 %v735, %v737
    %v739 = vrot.slane %v732, %v738
    %v740 = vcombine.low %v715, %v723
    %v741 = vcombine.high %v715, %v723
    %v743 = vunpack.c.l.s4 1934713408
    %v744 = vunpack.c.0.s8 %v743
    %v745 = vlaneseq
    %v746 = vshrl.u32 %v745, 7
    %v747 = vsub.s32 %v744, %v746
    %v748 = vrot.slane %v740, %v747
    %v750 = vunpack.c.l.s4 1934713408
    %v751 = vunpack.c.0.s8 %v750
    %v752 = vlaneseq
    %v753 = vshrl.u32 %v752, 7
    %v754 = vsub.s32 %v751, %v753
    %v755 = vrot.slane %v741, %v754
    %v756 = vcombine.low %v731, %v739
    %v757 = vcombine.high %v731, %v739
    %v759 = vunpack.c.l.s4 1934713408
    %v760 = vunpack.c.0.s8 %v759
    %v761 = vlaneseq
    %v762 = vshrl.u32 %v761, 7
    %v763 = vsub.s32 %v760, %v762
    %v764 = vrot.slane %v756, %v763
    %v766 = vunpack.c.l.s4 1934713408
    %v767 = vunpack.c.0.s8 %v766
    %v768 = vlaneseq
    %v769 = vshrl.u32 %v768, 7
    %v770 = vsub.s32 %v767, %v769
    %v771 = vrot.slane %v757, %v770
    %v772 = vcombine.low %v748, %v764
    %v773 = vcombine.high %v748, %v764
    %v774 = vcombine.low %v755, %v771
    %v775 = vcombine.high %v755, %v771
    %v776 = vcombine.low %v680, %v687
    %v778 = vunpack.c.l.s4 1983009808
    %v779 = vunpack.c.0.s8 %v778
    %v780 = vlaneseq
    %v781 = vshrl.u32 %v780, 7
    %v782 = vsub.s32 %v779, %v781
    %v783 = vrot.slane %v776, %v782
    %v784 = vcombine.low %v704, %v705
    %v786 = vunpack.c.l.s4 1983009808
    %v787 = vunpack.c.0.s8 %v786
    %v788 = vlaneseq
    %v789 = vshrl.u32 %v788, 7
    %v790 = vsub.s32 %v787, %v789
    %v791 = vrot.slane %v784, %v790
    %v792 = vcombine.low %v696, %v703
    %v794 = vunpack.c.l.s4 1983009808
    %v795 = vunpack.c.0.s8 %v794
    %v796 = vlaneseq
    %v797 = vshrl.u32 %v796, 7
    %v798 = vsub.s32 %v795, %v797
    %v799 = vrot.slane %v792, %v798
    %v800 = vcombine.low %v706, %v707
    %v802 = vunpack.c.l.s4 1983009808
    %v803 = vunpack.c.0.s8 %v802
    %v804 = vlaneseq
    %v805 = vshrl.u32 %v804, 7
    %v806 = vsub.s32 %v803, %v805
    %v807 = vrot.slane %v800, %v806
    %v808 = vcombine.low %v783, %v791
    %v809 = vcombine.high %v783, %v791
    %v811 = vunpack.c.l.s4 1934713408
    %v812 = vunpack.c.0.s8 %v811
    %v813 = vlaneseq
    %v814 = vshrl.u32 %v813, 7
    %v815 = vsub.s32 %v812, %v814
    %v816 = vrot.slane %v808, %v815
    %v818 = vunpack.c.l.s4 1934713408
    %v819 = vunpack.c.0.s8 %v818
    %v820 = vlaneseq
    %v821 = vshrl.u32 %v820, 7
    %v822 = vsub.s32 %v819, %v821
    %v823 = vrot.slane %v809, %v822
    %v824 = vcombine.low %v799, %v807
    %v825 = vcombine.high %v799, %v807
    %v827 = vunpack.c.l.s4 1934713408
    %v828 = vunpack.c.0.s8 %v827
    %v829 = vlaneseq
    %v830 = vshrl.u32 %v829, 7
    %v831 = vsub.s32 %v828, %v830
    %v832 = vrot.slane %v824, %v831
    %v834 = vunpack.c.l.s4 1934713408
    %v835 = vunpack.c.0.s8 %v834
    %v836 = vlaneseq
    %v837 = vshrl.u32 %v836, 7
    %v838 = vsub.s32 %v835, %v837
    %v839 = vrot.slane %v825, %v838
    %v840 = vcombine.low %v816, %v832
    %v841 = vcombine.high %v816, %v832
    %v842 = vcombine.low %v823, %v839
    %v843 = vcombine.high %v823, %v839
    %844 = vrot.lane.b32.xlu0 %v248, 64
    %v845 = vpop.permute.xlu0 %844
    %846 = vrot.lane.b32.xlu0 %v253, 64
    %v847 = vpop.permute.xlu0 %846
    %848 = vrot.lane.b32.xlu0 %v259, 64
    %v849 = vpop.permute.xlu0 %848
    %850 = vrot.lane.b32.xlu0 %v261, 64
    %v851 = vpop.permute.xlu0 %850
    %852 = vrot.lane.b32.xlu0 %v265, 64
    %v853 = vpop.permute.xlu0 %852
    %854 = vrot.lane.b32.xlu0 %v267, 64
    %v855 = vpop.permute.xlu0 %854
    %856 = vrot.lane.b32.xlu0 %v271, 64
    %v857 = vpop.permute.xlu0 %856
    %858 = vrot.lane.b32.xlu0 %v273, 64
    %v859 = vpop.permute.xlu0 %858
    %v868 = vcombine.low %v845, %v853
    %v869 = vcombine.high %v845, %v853
    %v871 = vunpack.c.l.s4 1983009808
    %v872 = vunpack.c.0.s8 %v871
    %v873 = vlaneseq
    %v874 = vshrl.u32 %v873, 7
    %v875 = vsub.s32 %v872, %v874
    %v876 = vrot.slane %v868, %v875
    %v878 = vunpack.c.l.s4 1983009808
    %v879 = vunpack.c.0.s8 %v878
    %v880 = vlaneseq
    %v881 = vshrl.u32 %v880, 7
    %v882 = vsub.s32 %v879, %v881
    %v883 = vrot.slane %v869, %v882
    %v884 = vcombine.low %v849, %v857
    %v885 = vcombine.high %v849, %v857
    %v887 = vunpack.c.l.s4 1983009808
    %v888 = vunpack.c.0.s8 %v887
    %v889 = vlaneseq
    %v890 = vshrl.u32 %v889, 7
    %v891 = vsub.s32 %v888, %v890
    %v892 = vrot.slane %v884, %v891
    %v894 = vunpack.c.l.s4 1983009808
    %v895 = vunpack.c.0.s8 %v894
    %v896 = vlaneseq
    %v897 = vshrl.u32 %v896, 7
    %v898 = vsub.s32 %v895, %v897
    %v899 = vrot.slane %v885, %v898
    %v900 = vcombine.low %v876, %v892
    %v901 = vcombine.high %v876, %v892
    %v903 = vunpack.c.l.s4 1934713408
    %v904 = vunpack.c.0.s8 %v903
    %v905 = vlaneseq
    %v906 = vshrl.u32 %v905, 7
    %v907 = vsub.s32 %v904, %v906
    %v908 = vrot.slane %v900, %v907
    %v910 = vunpack.c.l.s4 1934713408
    %v911 = vunpack.c.0.s8 %v910
    %v912 = vlaneseq
    %v913 = vshrl.u32 %v912, 7
    %v914 = vsub.s32 %v911, %v913
    %v915 = vrot.slane %v901, %v914
    %v916 = vcombine.low %v883, %v899
    %v917 = vcombine.high %v883, %v899
    %v919 = vunpack.c.l.s4 1934713408
    %v920 = vunpack.c.0.s8 %v919
    %v921 = vlaneseq
    %v922 = vshrl.u32 %v921, 7
    %v923 = vsub.s32 %v920, %v922
    %v924 = vrot.slane %v916, %v923
    %v926 = vunpack.c.l.s4 1934713408
    %v927 = vunpack.c.0.s8 %v926
    %v928 = vlaneseq
    %v929 = vshrl.u32 %v928, 7
    %v930 = vsub.s32 %v927, %v929
    %v931 = vrot.slane %v917, %v930
    %v932 = vcombine.high %v908, 0.0
    %v933 = vcombine.high %v915, 0.0
    %v934 = vcombine.high %v924, 0.0
    %v935 = vcombine.high %v931, 0.0
    %v936 = vcombine.low %v847, %v855
    %v937 = vcombine.high %v847, %v855
    %v939 = vunpack.c.l.s4 1983009808
    %v940 = vunpack.c.0.s8 %v939
    %v941 = vlaneseq
    %v942 = vshrl.u32 %v941, 7
    %v943 = vsub.s32 %v940, %v942
    %v944 = vrot.slane %v936, %v943
    %v946 = vunpack.c.l.s4 1983009808
    %v947 = vunpack.c.0.s8 %v946
    %v948 = vlaneseq
    %v949 = vshrl.u32 %v948, 7
    %v950 = vsub.s32 %v947, %v949
    %v951 = vrot.slane %v937, %v950
    %v952 = vcombine.low %v851, %v859
    %v953 = vcombine.high %v851, %v859
    %v955 = vunpack.c.l.s4 1983009808
    %v956 = vunpack.c.0.s8 %v955
    %v957 = vlaneseq
    %v958 = vshrl.u32 %v957, 7
    %v959 = vsub.s32 %v956, %v958
    %v960 = vrot.slane %v952, %v959
    %v962 = vunpack.c.l.s4 1983009808
    %v963 = vunpack.c.0.s8 %v962
    %v964 = vlaneseq
    %v965 = vshrl.u32 %v964, 7
    %v966 = vsub.s32 %v963, %v965
    %v967 = vrot.slane %v953, %v966
    %v968 = vcombine.low %v944, %v960
    %v969 = vcombine.high %v944, %v960
    %v971 = vunpack.c.l.s4 1934713408
    %v972 = vunpack.c.0.s8 %v971
    %v973 = vlaneseq
    %v974 = vshrl.u32 %v973, 7
    %v975 = vsub.s32 %v972, %v974
    %v976 = vrot.slane %v968, %v975
    %v978 = vunpack.c.l.s4 1934713408
    %v979 = vunpack.c.0.s8 %v978
    %v980 = vlaneseq
    %v981 = vshrl.u32 %v980, 7
    %v982 = vsub.s32 %v979, %v981
    %v983 = vrot.slane %v969, %v982
    %v984 = vcombine.low %v951, %v967
    %v985 = vcombine.high %v951, %v967
    %v987 = vunpack.c.l.s4 1934713408
    %v988 = vunpack.c.0.s8 %v987
    %v989 = vlaneseq
    %v990 = vshrl.u32 %v989, 7
    %v991 = vsub.s32 %v988, %v990
    %v992 = vrot.slane %v984, %v991
    %v994 = vunpack.c.l.s4 1934713408
    %v995 = vunpack.c.0.s8 %v994
    %v996 = vlaneseq
    %v997 = vshrl.u32 %v996, 7
    %v998 = vsub.s32 %v995, %v997
    %v999 = vrot.slane %v985, %v998
    %v1000 = vcombine.high %v976, 0.0
    %v1001 = vcombine.high %v983, 0.0
    %v1002 = vcombine.high %v992, 0.0
    %v1003 = vcombine.high %v999, 0.0
    %v1004 = vcombine.low %v908, %v915
    %v1006 = vunpack.c.l.s4 1983009808
    %v1007 = vunpack.c.0.s8 %v1006
    %v1008 = vlaneseq
    %v1009 = vshrl.u32 %v1008, 7
    %v1010 = vsub.s32 %v1007, %v1009
    %v1011 = vrot.slane %v1004, %v1010
    %v1012 = vcombine.low %v932, %v933
    %v1014 = vunpack.c.l.s4 1983009808
    %v1015 = vunpack.c.0.s8 %v1014
    %v1016 = vlaneseq
    %v1017 = vshrl.u32 %v1016, 7
    %v1018 = vsub.s32 %v1015, %v1017
    %v1019 = vrot.slane %v1012, %v1018
    %v1020 = vcombine.low %v924, %v931
    %v1022 = vunpack.c.l.s4 1983009808
    %v1023 = vunpack.c.0.s8 %v1022
    %v1024 = vlaneseq
    %v1025 = vshrl.u32 %v1024, 7
    %v1026 = vsub.s32 %v1023, %v1025
    %v1027 = vrot.slane %v1020, %v1026
    %v1028 = vcombine.low %v934, %v935
    %v1030 = vunpack.c.l.s4 1983009808
    %v1031 = vunpack.c.0.s8 %v1030
    %v1032 = vlaneseq
    %v1033 = vshrl.u32 %v1032, 7
    %v1034 = vsub.s32 %v1031, %v1033
    %v1035 = vrot.slane %v1028, %v1034
    %v1036 = vcombine.low %v1011, %v1019
    %v1037 = vcombine.high %v1011, %v1019
    %v1039 = vunpack.c.l.s4 1934713408
    %v1040 = vunpack.c.0.s8 %v1039
    %v1041 = vlaneseq
    %v1042 = vshrl.u32 %v1041, 7
    %v1043 = vsub.s32 %v1040, %v1042
    %v1044 = vrot.slane %v1036, %v1043
    %v1046 = vunpack.c.l.s4 1934713408
    %v1047 = vunpack.c.0.s8 %v1046
    %v1048 = vlaneseq
    %v1049 = vshrl.u32 %v1048, 7
    %v1050 = vsub.s32 %v1047, %v1049
    %v1051 = vrot.slane %v1037, %v1050
    %v1052 = vcombine.low %v1027, %v1035
    %v1053 = vcombine.high %v1027, %v1035
    %v1055 = vunpack.c.l.s4 1934713408
    %v1056 = vunpack.c.0.s8 %v1055
    %v1057 = vlaneseq
    %v1058 = vshrl.u32 %v1057, 7
    %v1059 = vsub.s32 %v1056, %v1058
    %v1060 = vrot.slane %v1052, %v1059
    %v1062 = vunpack.c.l.s4 1934713408
    %v1063 = vunpack.c.0.s8 %v1062
    %v1064 = vlaneseq
    %v1065 = vshrl.u32 %v1064, 7
    %v1066 = vsub.s32 %v1063, %v1065
    %v1067 = vrot.slane %v1053, %v1066
    %v1068 = vcombine.low %v1044, %v1060
    %v1069 = vcombine.high %v1044, %v1060
    %v1070 = vcombine.low %v1051, %v1067
    %v1071 = vcombine.high %v1051, %v1067
    %v1072 = vcombine.low %v976, %v983
    %v1074 = vunpack.c.l.s4 1983009808
    %v1075 = vunpack.c.0.s8 %v1074
    %v1076 = vlaneseq
    %v1077 = vshrl.u32 %v1076, 7
    %v1078 = vsub.s32 %v1075, %v1077
    %v1079 = vrot.slane %v1072, %v1078
    %v1080 = vcombine.low %v1000, %v1001
    %v1082 = vunpack.c.l.s4 1983009808
    %v1083 = vunpack.c.0.s8 %v1082
    %v1084 = vlaneseq
    %v1085 = vshrl.u32 %v1084, 7
    %v1086 = vsub.s32 %v1083, %v1085
    %v1087 = vrot.slane %v1080, %v1086
    %v1088 = vcombine.low %v992, %v999
    %v1090 = vunpack.c.l.s4 1983009808
    %v1091 = vunpack.c.0.s8 %v1090
    %v1092 = vlaneseq
    %v1093 = vshrl.u32 %v1092, 7
    %v1094 = vsub.s32 %v1091, %v1093
    %v1095 = vrot.slane %v1088, %v1094
    %v1096 = vcombine.low %v1002, %v1003
    %v1098 = vunpack.c.l.s4 1983009808
    %v1099 = vunpack.c.0.s8 %v1098
    %v1100 = vlaneseq
    %v1101 = vshrl.u32 %v1100, 7
    %v1102 = vsub.s32 %v1099, %v1101
    %v1103 = vrot.slane %v1096, %v1102
    %v1104 = vcombine.low %v1079, %v1087
    %v1105 = vcombine.high %v1079, %v1087
    %v1107 = vunpack.c.l.s4 1934713408
    %v1108 = vunpack.c.0.s8 %v1107
    %v1109 = vlaneseq
    %v1110 = vshrl.u32 %v1109, 7
    %v1111 = vsub.s32 %v1108, %v1110
    %v1112 = vrot.slane %v1104, %v1111
    %v1114 = vunpack.c.l.s4 1934713408
    %v1115 = vunpack.c.0.s8 %v1114
    %v1116 = vlaneseq
    %v1117 = vshrl.u32 %v1116, 7
    %v1118 = vsub.s32 %v1115, %v1117
    %v1119 = vrot.slane %v1105, %v1118
    %v1120 = vcombine.low %v1095, %v1103
    %v1121 = vcombine.high %v1095, %v1103
    %v1123 = vunpack.c.l.s4 1934713408
    %v1124 = vunpack.c.0.s8 %v1123
    %v1125 = vlaneseq
    %v1126 = vshrl.u32 %v1125, 7
    %v1127 = vsub.s32 %v1124, %v1126
    %v1128 = vrot.slane %v1120, %v1127
    %v1130 = vunpack.c.l.s4 1934713408
    %v1131 = vunpack.c.0.s8 %v1130
    %v1132 = vlaneseq
    %v1133 = vshrl.u32 %v1132, 7
    %v1134 = vsub.s32 %v1131, %v1133
    %v1135 = vrot.slane %v1121, %v1134
    %v1136 = vcombine.low %v1112, %v1128
    %v1137 = vcombine.high %v1112, %v1128
    %v1138 = vcombine.low %v1119, %v1135
    %v1139 = vcombine.high %v1119, %v1135
    %v1140 = vld [vmem:[#allocation5] sm:$0xff]
    %v1141 = vld [vmem:[#allocation5 + $0x8] sm:$0xff]
    %vm1142 = vcmask 64512
    %v1144 = vsel %vm1142, %v476, 0
    %v1147 = vsel %vm1142, %v772, 0
    %1149 = vmatprep.subr.mxu0 0.0
    %1150 = vmatpush1.xpose.msra.mxu0 %v1147
    %1151 = vmatprep.subr.mxu0 0.0
    %1152 = vmatpush1.xpose.msra.mxu0 0.0
    %1153 = vmatprep.subr.mxu0 0.0
    %1154 = vmatpush1.xpose.msra.mxu0 0.0
    %1155 = vmatprep.subr.mxu0 0.0
    %1156 = vmatpush1.xpose.msra.mxu0 0.0
    %1157 = vmatprep.subr.mxu0 0.0
    %1158 = vmatpush1.xpose.msra.mxu0 0.0
    %1159 = vmatprep.subr.mxu0 0.0
    %1160 = vmatpush1.xpose.msra.mxu0 0.0
    %1161 = vmatprep.subr.mxu0 0.0
    %1162 = vmatpush1.xpose.msra.mxu0 0.0
    %1163 = vmatprep.subr.mxu0 0.0
    %1164 = vmatpush1.xpose.msra.mxu0 0.0
    %1165 = vmatprep.subr.mxu0 0.0
    %1166 = vmatpush1.xpose.msra.mxu0 0.0
    %1167 = vmatprep.subr.mxu0 0.0
    %1168 = vmatpush1.xpose.msra.mxu0 0.0
    %1169 = vmatprep.subr.mxu0 0.0
    %1170 = vmatpush1.xpose.msra.mxu0 0.0
    %1171 = vmatprep.subr.mxu0 0.0
    %1172 = vmatpush1.xpose.msra.mxu0 0.0
    %1173 = vmatprep.subr.mxu0 0.0
    %1174 = vmatpush1.xpose.msra.mxu0 0.0
    %1175 = vmatprep.subr.mxu0 0.0
    %1176 = vmatpush1.xpose.msra.mxu0 0.0
    %1177 = vmatprep.subr.mxu0 0.0
    %1178 = vmatpush1.xpose.msra.mxu0 0.0
    %1179 = vmatprep.subr.mxu0 0.0
    %1180 = vmatpush1.xpose.msra.mxu0 0.0
    %1181 = vmatprep.subr.mxu0 0.0
    %1182 = vmatpush1.xpose.msra.mxu0 0.0
    %1183 = vmatprep.subr.mxu0 0.0
    %1184 = vmatpush1.xpose.msra.mxu0 0.0
    %1185 = vmatprep.subr.mxu0 0.0
    %1186 = vmatpush1.xpose.msra.mxu0 0.0
    %1187 = vmatprep.subr.mxu0 0.0
    %1188 = vmatpush1.xpose.msra.mxu0 0.0
    %1189 = vmatprep.subr.mxu0 0.0
    %1190 = vmatpush1.xpose.msra.mxu0 0.0
    %1191 = vmatprep.subr.mxu0 0.0
    %1192 = vmatpush1.xpose.msra.mxu0 0.0
    %1193 = vmatprep.subr.mxu0 0.0
    %1194 = vmatpush1.xpose.msra.mxu0 0.0
    %1195 = vmatprep.subr.mxu0 0.0
    %1196 = vmatpush1.xpose.msra.mxu0 0.0
    %1197 = vmatprep.subr.mxu0 0.0
    %1198 = vmatpush1.xpose.msra.mxu0 0.0
    %1199 = vmatprep.subr.mxu0 0.0
    %1200 = vmatpush1.xpose.msra.mxu0 0.0
    %1201 = vmatprep.subr.mxu0 0.0
    %1202 = vmatpush1.xpose.msra.mxu0 0.0
    %1203 = vmatprep.subr.mxu0 0.0
    %1204 = vmatpush1.xpose.msra.mxu0 0.0
    %1205 = vmatprep.subr.mxu0 0.0
    %1206 = vmatpush1.xpose.msra.mxu0 0.0
    %1207 = vmatprep.subr.mxu0 0.0
    %1208 = vmatpush1.xpose.msra.mxu0 0.0
    %1209 = vmatprep.subr.mxu0 0.0
    %1210 = vmatpush1.xpose.msra.mxu0 0.0
    %1211 = vmatprep.subr.mxu0 0.0
    %1212 = vmatpush1.xpose.msra.mxu0 0.0
    %1213 = vmatprep.mubr.f32.mxu0 0.0
    %1214 = vmatmul.mubr.f32.gmra.mrb[0].mxu0 %v1144
    %v1215 = vpop.f32.mrb[0].mxu0
    %v1216 = vadd.f32 %v1140, %v1215
    %v1217 = vpop.f32.mrb[0].mxu0
    %1218 = vdwg.mxu0
    %v1220 = vsel %vm1142, %v477, 0
    %v1223 = vsel %vm1142, %v773, 0
    %1225 = vmatprep.subr.mxu0 0.0
    %1226 = vmatpush1.xpose.msra.mxu0 %v1223
    %1227 = vmatprep.subr.mxu0 0.0
    %1228 = vmatpush1.xpose.msra.mxu0 0.0
    %1229 = vmatprep.subr.mxu0 0.0
    %1230 = vmatpush1.xpose.msra.mxu0 0.0
    %1231 = vmatprep.subr.mxu0 0.0
    %1232 = vmatpush1.xpose.msra.mxu0 0.0
    %1233 = vmatprep.subr.mxu0 0.0
    %1234 = vmatpush1.xpose.msra.mxu0 0.0
    %1235 = vmatprep.subr.mxu0 0.0
    %1236 = vmatpush1.xpose.msra.mxu0 0.0
    %1237 = vmatprep.subr.mxu0 0.0
    %1238 = vmatpush1.xpose.msra.mxu0 0.0
    %1239 = vmatprep.subr.mxu0 0.0
    %1240 = vmatpush1.xpose.msra.mxu0 0.0
    %1241 = vmatprep.subr.mxu0 0.0
    %1242 = vmatpush1.xpose.msra.mxu0 0.0
    %1243 = vmatprep.subr.mxu0 0.0
    %1244 = vmatpush1.xpose.msra.mxu0 0.0
    %1245 = vmatprep.subr.mxu0 0.0
    %1246 = vmatpush1.xpose.msra.mxu0 0.0
    %1247 = vmatprep.subr.mxu0 0.0
    %1248 = vmatpush1.xpose.msra.mxu0 0.0
    %1249 = vmatprep.subr.mxu0 0.0
    %1250 = vmatpush1.xpose.msra.mxu0 0.0
    %1251 = vmatprep.subr.mxu0 0.0
    %1252 = vmatpush1.xpose.msra.mxu0 0.0
    %1253 = vmatprep.subr.mxu0 0.0
    %1254 = vmatpush1.xpose.msra.mxu0 0.0
    %1255 = vmatprep.subr.mxu0 0.0
    %1256 = vmatpush1.xpose.msra.mxu0 0.0
    %1257 = vmatprep.subr.mxu0 0.0
    %1258 = vmatpush1.xpose.msra.mxu0 0.0
    %1259 = vmatprep.subr.mxu0 0.0
    %1260 = vmatpush1.xpose.msra.mxu0 0.0
    %1261 = vmatprep.subr.mxu0 0.0
    %1262 = vmatpush1.xpose.msra.mxu0 0.0
    %1263 = vmatprep.subr.mxu0 0.0
    %1264 = vmatpush1.xpose.msra.mxu0 0.0
    %1265 = vmatprep.subr.mxu0 0.0
    %1266 = vmatpush1.xpose.msra.mxu0 0.0
    %1267 = vmatprep.subr.mxu0 0.0
    %1268 = vmatpush1.xpose.msra.mxu0 0.0
    %1269 = vmatprep.subr.mxu0 0.0
    %1270 = vmatpush1.xpose.msra.mxu0 0.0
    %1271 = vmatprep.subr.mxu0 0.0
    %1272 = vmatpush1.xpose.msra.mxu0 0.0
    %1273 = vmatprep.subr.mxu0 0.0
    %1274 = vmatpush1.xpose.msra.mxu0 0.0
    %1275 = vmatprep.subr.mxu0 0.0
    %1276 = vmatpush1.xpose.msra.mxu0 0.0
    %1277 = vmatprep.subr.mxu0 0.0
    %1278 = vmatpush1.xpose.msra.mxu0 0.0
    %1279 = vmatprep.subr.mxu0 0.0
    %1280 = vmatpush1.xpose.msra.mxu0 0.0
    %1281 = vmatprep.subr.mxu0 0.0
    %1282 = vmatpush1.xpose.msra.mxu0 0.0
    %1283 = vmatprep.subr.mxu0 0.0
    %1284 = vmatpush1.xpose.msra.mxu0 0.0
    %1285 = vmatprep.subr.mxu0 0.0
    %1286 = vmatpush1.xpose.msra.mxu0 0.0
    %1287 = vmatprep.subr.mxu0 0.0
    %1288 = vmatpush1.xpose.msra.mxu0 0.0
    %1289 = vmatprep.mubr.f32.mxu0 0.0
    %1290 = vmatmul.mubr.f32.gmra.mrb[0].mxu0 %v1220
    %v1291 = vpop.f32.mrb[0].mxu0
    %v1292 = vadd.f32 %v1140, %v1291
    %v1293 = vpop.f32.mrb[0].mxu0
    %1294 = vdwg.mxu0
    %v1296 = vsel %vm1142, %v478, 0
    %v1299 = vsel %vm1142, %v774, 0
    %1301 = vmatprep.subr.mxu0 0.0
    %1302 = vmatpush1.xpose.msra.mxu0 %v1299
    %1303 = vmatprep.subr.mxu0 0.0
    %1304 = vmatpush1.xpose.msra.mxu0 0.0
    %1305 = vmatprep.subr.mxu0 0.0
    %1306 = vmatpush1.xpose.msra.mxu0 0.0
    %1307 = vmatprep.subr.mxu0 0.0
    %1308 = vmatpush1.xpose.msra.mxu0 0.0
    %1309 = vmatprep.subr.mxu0 0.0
    %1310 = vmatpush1.xpose.msra.mxu0 0.0
    %1311 = vmatprep.subr.mxu0 0.0
    %1312 = vmatpush1.xpose.msra.mxu0 0.0
    %1313 = vmatprep.subr.mxu0 0.0
    %1314 = vmatpush1.xpose.msra.mxu0 0.0
    %1315 = vmatprep.subr.mxu0 0.0
    %1316 = vmatpush1.xpose.msra.mxu0 0.0
    %1317 = vmatprep.subr.mxu0 0.0
    %1318 = vmatpush1.xpose.msra.mxu0 0.0
    %1319 = vmatprep.subr.mxu0 0.0
    %1320 = vmatpush1.xpose.msra.mxu0 0.0
    %1321 = vmatprep.subr.mxu0 0.0
    %1322 = vmatpush1.xpose.msra.mxu0 0.0
    %1323 = vmatprep.subr.mxu0 0.0
    %1324 = vmatpush1.xpose.msra.mxu0 0.0
    %1325 = vmatprep.subr.mxu0 0.0
    %1326 = vmatpush1.xpose.msra.mxu0 0.0
    %1327 = vmatprep.subr.mxu0 0.0
    %1328 = vmatpush1.xpose.msra.mxu0 0.0
    %1329 = vmatprep.subr.mxu0 0.0
    %1330 = vmatpush1.xpose.msra.mxu0 0.0
    %1331 = vmatprep.subr.mxu0 0.0
    %1332 = vmatpush1.xpose.msra.mxu0 0.0
    %1333 = vmatprep.subr.mxu0 0.0
    %1334 = vmatpush1.xpose.msra.mxu0 0.0
    %1335 = vmatprep.subr.mxu0 0.0
    %1336 = vmatpush1.xpose.msra.mxu0 0.0
    %1337 = vmatprep.subr.mxu0 0.0
    %1338 = vmatpush1.xpose.msra.mxu0 0.0
    %1339 = vmatprep.subr.mxu0 0.0
    %1340 = vmatpush1.xpose.msra.mxu0 0.0
    %1341 = vmatprep.subr.mxu0 0.0
    %1342 = vmatpush1.xpose.msra.mxu0 0.0
    %1343 = vmatprep.subr.mxu0 0.0
    %1344 = vmatpush1.xpose.msra.mxu0 0.0
    %1345 = vmatprep.subr.mxu0 0.0
    %1346 = vmatpush1.xpose.msra.mxu0 0.0
    %1347 = vmatprep.subr.mxu0 0.0
    %1348 = vmatpush1.xpose.msra.mxu0 0.0
    %1349 = vmatprep.subr.mxu0 0.0
    %1350 = vmatpush1.xpose.msra.mxu0 0.0
    %1351 = vmatprep.subr.mxu0 0.0
    %1352 = vmatpush1.xpose.msra.mxu0 0.0
    %1353 = vmatprep.subr.mxu0 0.0
    %1354 = vmatpush1.xpose.msra.mxu0 0.0
    %1355 = vmatprep.subr.mxu0 0.0
    %1356 = vmatpush1.xpose.msra.mxu0 0.0
    %1357 = vmatprep.subr.mxu0 0.0
    %1358 = vmatpush1.xpose.msra.mxu0 0.0
    %1359 = vmatprep.subr.mxu0 0.0
    %1360 = vmatpush1.xpose.msra.mxu0 0.0
    %1361 = vmatprep.subr.mxu0 0.0
    %1362 = vmatpush1.xpose.msra.mxu0 0.0
    %1363 = vmatprep.subr.mxu0 0.0
    %1364 = vmatpush1.xpose.msra.mxu0 0.0
    %1365 = vmatprep.mubr.f32.mxu0 0.0
    %1366 = vmatmul.mubr.f32.gmra.mrb[0].mxu0 %v1296
    %v1367 = vpop.f32.mrb[0].mxu0
    %v1368 = vadd.f32 %v1140, %v1367
    %v1369 = vpop.f32.mrb[0].mxu0
    %1370 = vdwg.mxu0
    %v1372 = vsel %vm1142, %v479, 0
    %v1375 = vsel %vm1142, %v775, 0
    %1377 = vmatprep.subr.mxu0 0.0
    %1378 = vmatpush1.xpose.msra.mxu0 %v1375
    %1379 = vmatprep.subr.mxu0 0.0
    %1380 = vmatpush1.xpose.msra.mxu0 0.0
    %1381 = vmatprep.subr.mxu0 0.0
    %1382 = vmatpush1.xpose.msra.mxu0 0.0
    %1383 = vmatprep.subr.mxu0 0.0
    %1384 = vmatpush1.xpose.msra.mxu0 0.0
    %1385 = vmatprep.subr.mxu0 0.0
    %1386 = vmatpush1.xpose.msra.mxu0 0.0
    %1387 = vmatprep.subr.mxu0 0.0
    %1388 = vmatpush1.xpose.msra.mxu0 0.0
    %1389 = vmatprep.subr.mxu0 0.0
    %1390 = vmatpush1.xpose.msra.mxu0 0.0
    %1391 = vmatprep.subr.mxu0 0.0
    %1392 = vmatpush1.xpose.msra.mxu0 0.0
    %1393 = vmatprep.subr.mxu0 0.0
    %1394 = vmatpush1.xpose.msra.mxu0 0.0
    %1395 = vmatprep.subr.mxu0 0.0
    %1396 = vmatpush1.xpose.msra.mxu0 0.0
    %1397 = vmatprep.subr.mxu0 0.0
    %1398 = vmatpush1.xpose.msra.mxu0 0.0
    %1399 = vmatprep.subr.mxu0 0.0
    %1400 = vmatpush1.xpose.msra.mxu0 0.0
    %1401 = vmatprep.subr.mxu0 0.0
    %1402 = vmatpush1.xpose.msra.mxu0 0.0
    %1403 = vmatprep.subr.mxu0 0.0
    %1404 = vmatpush1.xpose.msra.mxu0 0.0
    %1405 = vmatprep.subr.mxu0 0.0
    %1406 = vmatpush1.xpose.msra.mxu0 0.0
    %1407 = vmatprep.subr.mxu0 0.0
    %1408 = vmatpush1.xpose.msra.mxu0 0.0
    %1409 = vmatprep.subr.mxu0 0.0
    %1410 = vmatpush1.xpose.msra.mxu0 0.0
    %1411 = vmatprep.subr.mxu0 0.0
    %1412 = vmatpush1.xpose.msra.mxu0 0.0
    %1413 = vmatprep.subr.mxu0 0.0
    %1414 = vmatpush1.xpose.msra.mxu0 0.0
    %1415 = vmatprep.subr.mxu0 0.0
    %1416 = vmatpush1.xpose.msra.mxu0 0.0
    %1417 = vmatprep.subr.mxu0 0.0
    %1418 = vmatpush1.xpose.msra.mxu0 0.0
    %1419 = vmatprep.subr.mxu0 0.0
    %1420 = vmatpush1.xpose.msra.mxu0 0.0
    %1421 = vmatprep.subr.mxu0 0.0
    %1422 = vmatpush1.xpose.msra.mxu0 0.0
    %1423 = vmatprep.subr.mxu0 0.0
    %1424 = vmatpush1.xpose.msra.mxu0 0.0
    %1425 = vmatprep.subr.mxu0 0.0
    %1426 = vmatpush1.xpose.msra.mxu0 0.0
    %1427 = vmatprep.subr.mxu0 0.0
    %1428 = vmatpush1.xpose.msra.mxu0 0.0
    %1429 = vmatprep.subr.mxu0 0.0
    %1430 = vmatpush1.xpose.msra.mxu0 0.0
    %1431 = vmatprep.subr.mxu0 0.0
    %1432 = vmatpush1.xpose.msra.mxu0 0.0
    %1433 = vmatprep.subr.mxu0 0.0
    %1434 = vmatpush1.xpose.msra.mxu0 0.0
    %1435 = vmatprep.subr.mxu0 0.0
    %1436 = vmatpush1.xpose.msra.mxu0 0.0
    %1437 = vmatprep.subr.mxu0 0.0
    %1438 = vmatpush1.xpose.msra.mxu0 0.0
    %1439 = vmatprep.subr.mxu0 0.0
    %1440 = vmatpush1.xpose.msra.mxu0 0.0
    %1441 = vmatprep.mubr.f32.mxu0 0.0
    %1442 = vmatmul.mubr.f32.gmra.mrb[0].mxu0 %v1372
    %v1443 = vpop.f32.mrb[0].mxu0
    %v1444 = vadd.f32 %v1140, %v1443
    %v1445 = vpop.f32.mrb[0].mxu0
    %1446 = vdwg.mxu0
    %v1448 = vsel %vm1142, %v544, 0
    %v1451 = vsel %vm1142, %v840, 0
    %1453 = vmatprep.subr.mxu0 0.0
    %1454 = vmatpush1.xpose.msra.mxu0 %v1451
    %1455 = vmatprep.subr.mxu0 0.0
    %1456 = vmatpush1.xpose.msra.mxu0 0.0
    %1457 = vmatprep.subr.mxu0 0.0
    %1458 = vmatpush1.xpose.msra.mxu0 0.0
    %1459 = vmatprep.subr.mxu0 0.0
    %1460 = vmatpush1.xpose.msra.mxu0 0.0
    %1461 = vmatprep.subr.mxu0 0.0
    %1462 = vmatpush1.xpose.msra.mxu0 0.0
    %1463 = vmatprep.subr.mxu0 0.0
    %1464 = vmatpush1.xpose.msra.mxu0 0.0
    %1465 = vmatprep.subr.mxu0 0.0
    %1466 = vmatpush1.xpose.msra.mxu0 0.0
    %1467 = vmatprep.subr.mxu0 0.0
    %1468 = vmatpush1.xpose.msra.mxu0 0.0
    %1469 = vmatprep.subr.mxu0 0.0
    %1470 = vmatpush1.xpose.msra.mxu0 0.0
    %1471 = vmatprep.subr.mxu0 0.0
    %1472 = vmatpush1.xpose.msra.mxu0 0.0
    %1473 = vmatprep.subr.mxu0 0.0
    %1474 = vmatpush1.xpose.msra.mxu0 0.0
    %1475 = vmatprep.subr.mxu0 0.0
    %1476 = vmatpush1.xpose.msra.mxu0 0.0
    %1477 = vmatprep.subr.mxu0 0.0
    %1478 = vmatpush1.xpose.msra.mxu0 0.0
    %1479 = vmatprep.subr.mxu0 0.0
    %1480 = vmatpush1.xpose.msra.mxu0 0.0
    %1481 = vmatprep.subr.mxu0 0.0
    %1482 = vmatpush1.xpose.msra.mxu0 0.0
    %1483 = vmatprep.subr.mxu0 0.0
    %1484 = vmatpush1.xpose.msra.mxu0 0.0
    %1485 = vmatprep.subr.mxu0 0.0
    %1486 = vmatpush1.xpose.msra.mxu0 0.0
    %1487 = vmatprep.subr.mxu0 0.0
    %1488 = vmatpush1.xpose.msra.mxu0 0.0
    %1489 = vmatprep.subr.mxu0 0.0
    %1490 = vmatpush1.xpose.msra.mxu0 0.0
    %1491 = vmatprep.subr.mxu0 0.0
    %1492 = vmatpush1.xpose.msra.mxu0 0.0
    %1493 = vmatprep.subr.mxu0 0.0
    %1494 = vmatpush1.xpose.msra.mxu0 0.0
    %1495 = vmatprep.subr.mxu0 0.0
    %1496 = vmatpush1.xpose.msra.mxu0 0.0
    %1497 = vmatprep.subr.mxu0 0.0
    %1498 = vmatpush1.xpose.msra.mxu0 0.0
    %1499 = vmatprep.subr.mxu0 0.0
    %1500 = vmatpush1.xpose.msra.mxu0 0.0
    %1501 = vmatprep.subr.mxu0 0.0
    %1502 = vmatpush1.xpose.msra.mxu0 0.0
    %1503 = vmatprep.subr.mxu0 0.0
    %1504 = vmatpush1.xpose.msra.mxu0 0.0
    %1505 = vmatprep.subr.mxu0 0.0
    %1506 = vmatpush1.xpose.msra.mxu0 0.0
    %1507 = vmatprep.subr.mxu0 0.0
    %1508 = vmatpush1.xpose.msra.mxu0 0.0
    %1509 = vmatprep.subr.mxu0 0.0
    %1510 = vmatpush1.xpose.msra.mxu0 0.0
    %1511 = vmatprep.subr.mxu0 0.0
    %1512 = vmatpush1.xpose.msra.mxu0 0.0
    %1513 = vmatprep.subr.mxu0 0.0
    %1514 = vmatpush1.xpose.msra.mxu0 0.0
    %1515 = vmatprep.subr.mxu0 0.0
    %1516 = vmatpush1.xpose.msra.mxu0 0.0
    %1517 = vmatprep.mubr.f32.mxu0 0.0
    %1518 = vmatmul.mubr.f32.gmra.mrb[0].mxu0 %v1448
    %v1519 = vpop.f32.mrb[0].mxu0
    %v1520 = vadd.f32 %v1141, %v1519
    %v1521 = vpop.f32.mrb[0].mxu0
    %1522 = vdwg.mxu0
    %v1524 = vsel %vm1142, %v545, 0
    %v1527 = vsel %vm1142, %v841, 0
    %1529 = vmatprep.subr.mxu0 0.0
    %1530 = vmatpush1.xpose.msra.mxu0 %v1527
    %1531 = vmatprep.subr.mxu0 0.0
    %1532 = vmatpush1.xpose.msra.mxu0 0.0
    %1533 = vmatprep.subr.mxu0 0.0
    %1534 = vmatpush1.xpose.msra.mxu0 0.0
    %1535 = vmatprep.subr.mxu0 0.0
    %1536 = vmatpush1.xpose.msra.mxu0 0.0
    %1537 = vmatprep.subr.mxu0 0.0
    %1538 = vmatpush1.xpose.msra.mxu0 0.0
    %1539 = vmatprep.subr.mxu0 0.0
    %1540 = vmatpush1.xpose.msra.mxu0 0.0
    %1541 = vmatprep.subr.mxu0 0.0
    %1542 = vmatpush1.xpose.msra.mxu0 0.0
    %1543 = vmatprep.subr.mxu0 0.0
    %1544 = vmatpush1.xpose.msra.mxu0 0.0
    %1545 = vmatprep.subr.mxu0 0.0
    %1546 = vmatpush1.xpose.msra.mxu0 0.0
    %1547 = vmatprep.subr.mxu0 0.0
    %1548 = vmatpush1.xpose.msra.mxu0 0.0
    %1549 = vmatprep.subr.mxu0 0.0
    %1550 = vmatpush1.xpose.msra.mxu0 0.0
    %1551 = vmatprep.subr.mxu0 0.0
    %1552 = vmatpush1.xpose.msra.mxu0 0.0
    %1553 = vmatprep.subr.mxu0 0.0
    %1554 = vmatpush1.xpose.msra.mxu0 0.0
    %1555 = vmatprep.subr.mxu0 0.0
    %1556 = vmatpush1.xpose.msra.mxu0 0.0
    %1557 = vmatprep.subr.mxu0 0.0
    %1558 = vmatpush1.xpose.msra.mxu0 0.0
    %1559 = vmatprep.subr.mxu0 0.0
    %1560 = vmatpush1.xpose.msra.mxu0 0.0
    %1561 = vmatprep.subr.mxu0 0.0
    %1562 = vmatpush1.xpose.msra.mxu0 0.0
    %1563 = vmatprep.subr.mxu0 0.0
    %1564 = vmatpush1.xpose.msra.mxu0 0.0
    %1565 = vmatprep.subr.mxu0 0.0
    %1566 = vmatpush1.xpose.msra.mxu0 0.0
    %1567 = vmatprep.subr.mxu0 0.0
    %1568 = vmatpush1.xpose.msra.mxu0 0.0
    %1569 = vmatprep.subr.mxu0 0.0
    %1570 = vmatpush1.xpose.msra.mxu0 0.0
    %1571 = vmatprep.subr.mxu0 0.0
    %1572 = vmatpush1.xpose.msra.mxu0 0.0
    %1573 = vmatprep.subr.mxu0 0.0
    %1574 = vmatpush1.xpose.msra.mxu0 0.0
    %1575 = vmatprep.subr.mxu0 0.0
    %1576 = vmatpush1.xpose.msra.mxu0 0.0
    %1577 = vmatprep.subr.mxu0 0.0
    %1578 = vmatpush1.xpose.msra.mxu0 0.0
    %1579 = vmatprep.subr.mxu0 0.0
    %1580 = vmatpush1.xpose.msra.mxu0 0.0
    %1581 = vmatprep.subr.mxu0 0.0
    %1582 = vmatpush1.xpose.msra.mxu0 0.0
    %1583 = vmatprep.subr.mxu0 0.0
    %1584 = vmatpush1.xpose.msra.mxu0 0.0
    %1585 = vmatprep.subr.mxu0 0.0
    %1586 = vmatpush1.xpose.msra.mxu0 0.0
    %1587 = vmatprep.subr.mxu0 0.0
    %1588 = vmatpush1.xpose.msra.mxu0 0.0
    %1589 = vmatprep.subr.mxu0 0.0
    %1590 = vmatpush1.xpose.msra.mxu0 0.0
    %1591 = vmatprep.subr.mxu0 0.0
    %1592 = vmatpush1.xpose.msra.mxu0 0.0
    %1593 = vmatprep.mubr.f32.mxu0 0.0
    %1594 = vmatmul.mubr.f32.gmra.mrb[0].mxu0 %v1524
    %v1595 = vpop.f32.mrb[0].mxu0
    %v1596 = vadd.f32 %v1141, %v1595
    %v1597 = vpop.f32.mrb[0].mxu0
    %1598 = vdwg.mxu0
    %v1600 = vsel %vm1142, %v546, 0
    %v1603 = vsel %vm1142, %v842, 0
    %1605 = vmatprep.subr.mxu0 0.0
    %1606 = vmatpush1.xpose.msra.mxu0 %v1603
    %1607 = vmatprep.subr.mxu0 0.0
    %1608 = vmatpush1.xpose.msra.mxu0 0.0
    %1609 = vmatprep.subr.mxu0 0.0
    %1610 = vmatpush1.xpose.msra.mxu0 0.0
    %1611 = vmatprep.subr.mxu0 0.0
    %1612 = vmatpush1.xpose.msra.mxu0 0.0
    %1613 = vmatprep.subr.mxu0 0.0
    %1614 = vmatpush1.xpose.msra.mxu0 0.0
    %1615 = vmatprep.subr.mxu0 0.0
    %1616 = vmatpush1.xpose.msra.mxu0 0.0
    %1617 = vmatprep.subr.mxu0 0.0
    %1618 = vmatpush1.xpose.msra.mxu0 0.0
    %1619 = vmatprep.subr.mxu0 0.0
    %1620 = vmatpush1.xpose.msra.mxu0 0.0
    %1621 = vmatprep.subr.mxu0 0.0
    %1622 = vmatpush1.xpose.msra.mxu0 0.0
    %1623 = vmatprep.subr.mxu0 0.0
    %1624 = vmatpush1.xpose.msra.mxu0 0.0
    %1625 = vmatprep.subr.mxu0 0.0
    %1626 = vmatpush1.xpose.msra.mxu0 0.0
    %1627 = vmatprep.subr.mxu0 0.0
    %1628 = vmatpush1.xpose.msra.mxu0 0.0
    %1629 = vmatprep.subr.mxu0 0.0
    %1630 = vmatpush1.xpose.msra.mxu0 0.0
    %1631 = vmatprep.subr.mxu0 0.0
    %1632 = vmatpush1.xpose.msra.mxu0 0.0
    %1633 = vmatprep.subr.mxu0 0.0
    %1634 = vmatpush1.xpose.msra.mxu0 0.0
    %1635 = vmatprep.subr.mxu0 0.0
    %1636 = vmatpush1.xpose.msra.mxu0 0.0
    %1637 = vmatprep.subr.mxu0 0.0
    %1638 = vmatpush1.xpose.msra.mxu0 0.0
    %1639 = vmatprep.subr.mxu0 0.0
    %1640 = vmatpush1.xpose.msra.mxu0 0.0
    %1641 = vmatprep.subr.mxu0 0.0
    %1642 = vmatpush1.xpose.msra.mxu0 0.0
    %1643 = vmatprep.subr.mxu0 0.0
    %1644 = vmatpush1.xpose.msra.mxu0 0.0
    %1645 = vmatprep.subr.mxu0 0.0
    %1646 = vmatpush1.xpose.msra.mxu0 0.0
    %1647 = vmatprep.subr.mxu0 0.0
    %1648 = vmatpush1.xpose.msra.mxu0 0.0
    %1649 = vmatprep.subr.mxu0 0.0
    %1650 = vmatpush1.xpose.msra.mxu0 0.0
    %1651 = vmatprep.subr.mxu0 0.0
    %1652 = vmatpush1.xpose.msra.mxu0 0.0
    %1653 = vmatprep.subr.mxu0 0.0
    %1654 = vmatpush1.xpose.msra.mxu0 0.0
    %1655 = vmatprep.subr.mxu0 0.0
    %1656 = vmatpush1.xpose.msra.mxu0 0.0
    %1657 = vmatprep.subr.mxu0 0.0
    %1658 = vmatpush1.xpose.msra.mxu0 0.0
    %1659 = vmatprep.subr.mxu0 0.0
    %1660 = vmatpush1.xpose.msra.mxu0 0.0
    %1661 = vmatprep.subr.mxu0 0.0
    %1662 = vmatpush1.xpose.msra.mxu0 0.0
    %1663 = vmatprep.subr.mxu0 0.0
    %1664 = vmatpush1.xpose.msra.mxu0 0.0
    %1665 = vmatprep.subr.mxu0 0.0
    %1666 = vmatpush1.xpose.msra.mxu0 0.0
    %1667 = vmatprep.subr.mxu0 0.0
    %1668 = vmatpush1.xpose.msra.mxu0 0.0
    %1669 = vmatprep.mubr.f32.mxu0 0.0
    %1670 = vmatmul.mubr.f32.gmra.mrb[0].mxu0 %v1600
    %v1671 = vpop.f32.mrb[0].mxu0
    %v1672 = vadd.f32 %v1141, %v1671
    %v1673 = vpop.f32.mrb[0].mxu0
    %1674 = vdwg.mxu0
    %v1676 = vsel %vm1142, %v547, 0
    %v1679 = vsel %vm1142, %v843, 0
    %1681 = vmatprep.subr.mxu0 0.0
    %1682 = vmatpush1.xpose.msra.mxu0 %v1679
    %1683 = vmatprep.subr.mxu0 0.0
    %1684 = vmatpush1.xpose.msra.mxu0 0.0
    %1685 = vmatprep.subr.mxu0 0.0
    %1686 = vmatpush1.xpose.msra.mxu0 0.0
    %1687 = vmatprep.subr.mxu0 0.0
    %1688 = vmatpush1.xpose.msra.mxu0 0.0
    %1689 = vmatprep.subr.mxu0 0.0
    %1690 = vmatpush1.xpose.msra.mxu0 0.0
    %1691 = vmatprep.subr.mxu0 0.0
    %1692 = vmatpush1.xpose.msra.mxu0 0.0
    %1693 = vmatprep.subr.mxu0 0.0
    %1694 = vmatpush1.xpose.msra.mxu0 0.0
    %1695 = vmatprep.subr.mxu0 0.0
    %1696 = vmatpush1.xpose.msra.mxu0 0.0
    %1697 = vmatprep.subr.mxu0 0.0
    %1698 = vmatpush1.xpose.msra.mxu0 0.0
    %1699 = vmatprep.subr.mxu0 0.0
    %1700 = vmatpush1.xpose.msra.mxu0 0.0
    %1701 = vmatprep.subr.mxu0 0.0
    %1702 = vmatpush1.xpose.msra.mxu0 0.0
    %1703 = vmatprep.subr.mxu0 0.0
    %1704 = vmatpush1.xpose.msra.mxu0 0.0
    %1705 = vmatprep.subr.mxu0 0.0
    %1706 = vmatpush1.xpose.msra.mxu0 0.0
    %1707 = vmatprep.subr.mxu0 0.0
    %1708 = vmatpush1.xpose.msra.mxu0 0.0
    %1709 = vmatprep.subr.mxu0 0.0
    %1710 = vmatpush1.xpose.msra.mxu0 0.0
    %1711 = vmatprep.subr.mxu0 0.0
    %1712 = vmatpush1.xpose.msra.mxu0 0.0
    %1713 = vmatprep.subr.mxu0 0.0
    %1714 = vmatpush1.xpose.msra.mxu0 0.0
    %1715 = vmatprep.subr.mxu0 0.0
    %1716 = vmatpush1.xpose.msra.mxu0 0.0
    %1717 = vmatprep.subr.mxu0 0.0
    %1718 = vmatpush1.xpose.msra.mxu0 0.0
    %1719 = vmatprep.subr.mxu0 0.0
    %1720 = vmatpush1.xpose.msra.mxu0 0.0
    %1721 = vmatprep.subr.mxu0 0.0
    %1722 = vmatpush1.xpose.msra.mxu0 0.0
    %1723 = vmatprep.subr.mxu0 0.0
    %1724 = vmatpush1.xpose.msra.mxu0 0.0
    %1725 = vmatprep.subr.mxu0 0.0
    %1726 = vmatpush1.xpose.msra.mxu0 0.0
    %1727 = vmatprep.subr.mxu0 0.0
    %1728 = vmatpush1.xpose.msra.mxu0 0.0
    %1729 = vmatprep.subr.mxu0 0.0
    %1730 = vmatpush1.xpose.msra.mxu0 0.0
    %1731 = vmatprep.subr.mxu0 0.0
    %1732 = vmatpush1.xpose.msra.mxu0 0.0
    %1733 = vmatprep.subr.mxu0 0.0
    %1734 = vmatpush1.xpose.msra.mxu0 0.0
    %1735 = vmatprep.subr.mxu0 0.0
    %1736 = vmatpush1.xpose.msra.mxu0 0.0
    %1737 = vmatprep.subr.mxu0 0.0
    %1738 = vmatpush1.xpose.msra.mxu0 0.0
    %1739 = vmatprep.subr.mxu0 0.0
    %1740 = vmatpush1.xpose.msra.mxu0 0.0
    %1741 = vmatprep.subr.mxu0 0.0
    %1742 = vmatpush1.xpose.msra.mxu0 0.0
    %1743 = vmatprep.subr.mxu0 0.0
    %1744 = vmatpush1.xpose.msra.mxu0 0.0
    %1745 = vmatprep.mubr.f32.mxu0 0.0
    %1746 = vmatmul.mubr.f32.gmra.mrb[0].mxu0 %v1676
    %v1747 = vpop.f32.mrb[0].mxu0
    %v1748 = vadd.f32 %v1141, %v1747
    %v1749 = vpop.f32.mrb[0].mxu0
    %1750 = vdwg.mxu0
    %v1751 = vsel %vm1142, %v1216, -inf
    %1752 = vmax.xlane.f32.xlu0 %v1751
    %v1753 = vpop.xlane.xlu0 %1752
    %v1754 = vsel %vm1142, %v1292, -inf
    %1755 = vmax.xlane.f32.xlu0 %v1754
    %v1756 = vpop.xlane.xlu0 %1755
    %v1757 = vsel %vm1142, %v1368, -inf
    %1758 = vmax.xlane.f32.xlu0 %v1757
    %v1759 = vpop.xlane.xlu0 %1758
    %v1760 = vsel %vm1142, %v1444, -inf
    %1761 = vmax.xlane.f32.xlu0 %v1760
    %v1762 = vpop.xlane.xlu0 %1761
    %v1763 = vsel %vm1142, %v1520, -inf
    %1764 = vmax.xlane.f32.xlu0 %v1763
    %v1765 = vpop.xlane.xlu0 %1764
    %v1766 = vsel %vm1142, %v1596, -inf
    %1767 = vmax.xlane.f32.xlu0 %v1766
    %v1768 = vpop.xlane.xlu0 %1767
    %v1769 = vsel %vm1142, %v1672, -inf
    %1770 = vmax.xlane.f32.xlu0 %v1769
    %v1771 = vpop.xlane.xlu0 %1770
    %v1772 = vsel %vm1142, %v1748, -inf
    %1773 = vmax.xlane.f32.xlu0 %v1772
    %v1774 = vpop.xlane.xlu0 %1773
    %v1775 = vsub.f32 %v1216, %v1753
    %v1776 = vsub.f32 %v1292, %v1756
    %v1777 = vsub.f32 %v1368, %v1759
    %v1778 = vsub.f32 %v1444, %v1762
    %v1779 = vsub.f32 %v1520, %v1765
    %v1780 = vsub.f32 %v1596, %v1768
    %v1781 = vsub.f32 %v1672, %v1771
    %v1782 = vsub.f32 %v1748, %v1774
    %v1783 = vmul.f32 %v1775, 1.442695
    %v1784 = vpow.pop %v1783
    %v1785 = vmul.f32 %v1776, 1.442695
    %v1786 = vpow.pop %v1785
    %v1787 = vmul.f32 %v1777, 1.442695
    %v1788 = vpow.pop %v1787
    %v1789 = vmul.f32 %v1778, 1.442695
    %v1790 = vpow.pop %v1789
    %v1791 = vmul.f32 %v1779, 1.442695
    %v1792 = vpow.pop %v1791
    %v1793 = vmul.f32 %v1780, 1.442695
    %v1794 = vpow.pop %v1793
    %v1795 = vmul.f32 %v1781, 1.442695
    %v1796 = vpow.pop %v1795
    %v1797 = vmul.f32 %v1782, 1.442695
    %v1798 = vpow.pop %v1797
    %v1799 = vsel %vm1142, %v1784, 0.0
    %1800 = vadd.xlane.f32.xlu0 %v1799
    %v1801 = vpop.xlane.xlu0 %1800
    %v1802 = vsel %vm1142, %v1786, 0.0
    %1803 = vadd.xlane.f32.xlu0 %v1802
    %v1804 = vpop.xlane.xlu0 %1803
    %v1805 = vsel %vm1142, %v1788, 0.0
    %1806 = vadd.xlane.f32.xlu0 %v1805
    %v1807 = vpop.xlane.xlu0 %1806
    %v1808 = vsel %vm1142, %v1790, 0.0
    %1809 = vadd.xlane.f32.xlu0 %v1808
    %v1810 = vpop.xlane.xlu0 %1809
    %v1811 = vsel %vm1142, %v1792, 0.0
    %1812 = vadd.xlane.f32.xlu0 %v1811
    %v1813 = vpop.xlane.xlu0 %1812
    %v1814 = vsel %vm1142, %v1794, 0.0
    %1815 = vadd.xlane.f32.xlu0 %v1814
    %v1816 = vpop.xlane.xlu0 %1815
    %v1817 = vsel %vm1142, %v1796, 0.0
    %1818 = vadd.xlane.f32.xlu0 %v1817
    %v1819 = vpop.xlane.xlu0 %1818
    %v1820 = vsel %vm1142, %v1798, 0.0
    %1821 = vadd.xlane.f32.xlu0 %v1820
    %v1822 = vpop.xlane.xlu0 %1821
    %v1823 = vrcp.pop %v1801
    %v1824 = vrcp.pop %v1804
    %v1825 = vrcp.pop %v1807
    %v1826 = vrcp.pop %v1810
    %v1827 = vrcp.pop %v1813
    %v1828 = vrcp.pop %v1816
    %v1829 = vrcp.pop %v1819
    %v1830 = vrcp.pop %v1822
    %v1831 = vmul.f32 %v1801, %v1823
    %v1832 = vmul.f32 %v1804, %v1824
    %v1833 = vmul.f32 %v1807, %v1825
    %v1834 = vmul.f32 %v1810, %v1826
    %v1835 = vmul.f32 %v1813, %v1827
    %v1836 = vmul.f32 %v1816, %v1828
    %v1837 = vmul.f32 %v1819, %v1829
    %v1838 = vmul.f32 %v1822, %v1830
    %v1839 = vsub.f32 2.0, %v1831
    %v1840 = vsub.f32 2.0, %v1832
    %v1841 = vsub.f32 2.0, %v1833
    %v1842 = vsub.f32 2.0, %v1834
    %v1843 = vsub.f32 2.0, %v1835
    %v1844 = vsub.f32 2.0, %v1836
    %v1845 = vsub.f32 2.0, %v1837
    %v1846 = vsub.f32 2.0, %v1838
    %v1847 = vmul.f32 %v1823, %v1839
    %v1848 = vmul.f32 %v1824, %v1840
    %v1849 = vmul.f32 %v1825, %v1841
    %v1850 = vmul.f32 %v1826, %v1842
    %v1851 = vmul.f32 %v1827, %v1843
    %v1852 = vmul.f32 %v1828, %v1844
    %v1853 = vmul.f32 %v1829, %v1845
    %v1854 = vmul.f32 %v1830, %v1846
    %v1855 = vmul.f32 %v1784, %v1847
    %v1856 = vmul.f32 %v1786, %v1848
    %v1857 = vmul.f32 %v1788, %v1849
    %v1858 = vmul.f32 %v1790, %v1850
    %v1859 = vmul.f32 %v1792, %v1851
    %v1860 = vmul.f32 %v1794, %v1852
    %v1861 = vmul.f32 %v1796, %v1853
    %v1862 = vmul.f32 %v1798, %v1854
    %v1864 = vsel %vm1142, %v1855, 0
    %1866 = vmatprep.subr.mxu0 0.0
    %1867 = vmatpush1.msra.mxu0 %v1068
    %1868 = vmatprep.subr.mxu0 0.0
    %1869 = vmatpush1.msra.mxu0 0.0
    %1870 = vmatprep.subr.mxu0 0.0
    %1871 = vmatpush1.msra.mxu0 0.0
    %1872 = vmatprep.subr.mxu0 0.0
    %1873 = vmatpush1.msra.mxu0 0.0
    %1874 = vmatprep.subr.mxu0 0.0
    %1875 = vmatpush1.msra.mxu0 0.0
    %1876 = vmatprep.subr.mxu0 0.0
    %1877 = vmatpush1.msra.mxu0 0.0
    %1878 = vmatprep.subr.mxu0 0.0
    %1879 = vmatpush1.msra.mxu0 0.0
    %1880 = vmatprep.subr.mxu0 0.0
    %1881 = vmatpush1.msra.mxu0 0.0
    %1882 = vmatprep.subr.mxu0 0.0
    %1883 = vmatpush1.msra.mxu0 0.0
    %1884 = vmatprep.subr.mxu0 0.0
    %1885 = vmatpush1.msra.mxu0 0.0
    %1886 = vmatprep.subr.mxu0 0.0
    %1887 = vmatpush1.msra.mxu0 0.0
    %1888 = vmatprep.subr.mxu0 0.0
    %1889 = vmatpush1.msra.mxu0 0.0
    %1890 = vmatprep.subr.mxu0 0.0
    %1891 = vmatpush1.msra.mxu0 0.0
    %1892 = vmatprep.subr.mxu0 0.0
    %1893 = vmatpush1.msra.mxu0 0.0
    %1894 = vmatprep.subr.mxu0 0.0
    %1895 = vmatpush1.msra.mxu0 0.0
    %1896 = vmatprep.subr.mxu0 0.0
    %1897 = vmatpush1.msra.mxu0 0.0
    %1898 = vmatprep.subr.mxu0 0.0
    %1899 = vmatpush1.msra.mxu0 0.0
    %1900 = vmatprep.subr.mxu0 0.0
    %1901 = vmatpush1.msra.mxu0 0.0
    %1902 = vmatprep.subr.mxu0 0.0
    %1903 = vmatpush1.msra.mxu0 0.0
    %1904 = vmatprep.subr.mxu0 0.0
    %1905 = vmatpush1.msra.mxu0 0.0
    %1906 = vmatprep.subr.mxu0 0.0
    %1907 = vmatpush1.msra.mxu0 0.0
    %1908 = vmatprep.subr.mxu0 0.0
    %1909 = vmatpush1.msra.mxu0 0.0
    %1910 = vmatprep.subr.mxu0 0.0
    %1911 = vmatpush1.msra.mxu0 0.0
    %1912 = vmatprep.subr.mxu0 0.0
    %1913 = vmatpush1.msra.mxu0 0.0
    %1914 = vmatprep.subr.mxu0 0.0
    %1915 = vmatpush1.msra.mxu0 0.0
    %1916 = vmatprep.subr.mxu0 0.0
    %1917 = vmatpush1.msra.mxu0 0.0
    %1918 = vmatprep.subr.mxu0 0.0
    %1919 = vmatpush1.msra.mxu0 0.0
    %1920 = vmatprep.subr.mxu0 0.0
    %1921 = vmatpush1.msra.mxu0 0.0
    %1922 = vmatprep.subr.mxu0 0.0
    %1923 = vmatpush1.msra.mxu0 0.0
    %1924 = vmatprep.subr.mxu0 0.0
    %1925 = vmatpush1.msra.mxu0 0.0
    %1926 = vmatprep.subr.mxu0 0.0
    %1927 = vmatpush1.msra.mxu0 0.0
    %1928 = vmatprep.subr.mxu0 0.0
    %1929 = vmatpush1.msra.mxu0 0.0
    %1930 = vmatprep.mubr.f32.mxu0 0.0
    %1931 = vmatmul.mubr.f32.gmra.mrb[0].mxu0 %v1864
    %v1932 = vpop.f32.mrb[0].mxu0
    %v1933 = vadd.f32 0.0, %v1932
    %v1934 = vpop.f32.mrb[0].mxu0
    %1935 = vdwg.mxu0
    %v1937 = vsel %vm1142, %v1856, 0
    %1939 = vmatprep.subr.mxu0 0.0
    %1940 = vmatpush1.msra.mxu0 %v1069
    %1941 = vmatprep.subr.mxu0 0.0
    %1942 = vmatpush1.msra.mxu0 0.0
    %1943 = vmatprep.subr.mxu0 0.0
    %1944 = vmatpush1.msra.mxu0 0.0
    %1945 = vmatprep.subr.mxu0 0.0
    %1946 = vmatpush1.msra.mxu0 0.0
    %1947 = vmatprep.subr.mxu0 0.0
    %1948 = vmatpush1.msra.mxu0 0.0
    %1949 = vmatprep.subr.mxu0 0.0
    %1950 = vmatpush1.msra.mxu0 0.0
    %1951 = vmatprep.subr.mxu0 0.0
    %1952 = vmatpush1.msra.mxu0 0.0
    %1953 = vmatprep.subr.mxu0 0.0
    %1954 = vmatpush1.msra.mxu0 0.0
    %1955 = vmatprep.subr.mxu0 0.0
    %1956 = vmatpush1.msra.mxu0 0.0
    %1957 = vmatprep.subr.mxu0 0.0
    %1958 = vmatpush1.msra.mxu0 0.0
    %1959 = vmatprep.subr.mxu0 0.0
    %1960 = vmatpush1.msra.mxu0 0.0
    %1961 = vmatprep.subr.mxu0 0.0
    %1962 = vmatpush1.msra.mxu0 0.0
    %1963 = vmatprep.subr.mxu0 0.0
    %1964 = vmatpush1.msra.mxu0 0.0
    %1965 = vmatprep.subr.mxu0 0.0
    %1966 = vmatpush1.msra.mxu0 0.0
    %1967 = vmatprep.subr.mxu0 0.0
    %1968 = vmatpush1.msra.mxu0 0.0
    %1969 = vmatprep.subr.mxu0 0.0
    %1970 = vmatpush1.msra.mxu0 0.0
    %1971 = vmatprep.subr.mxu0 0.0
    %1972 = vmatpush1.msra.mxu0 0.0
    %1973 = vmatprep.subr.mxu0 0.0
    %1974 = vmatpush1.msra.mxu0 0.0
    %1975 = vmatprep.subr.mxu0 0.0
    %1976 = vmatpush1.msra.mxu0 0.0
    %1977 = vmatprep.subr.mxu0 0.0
    %1978 = vmatpush1.msra.mxu0 0.0
    %1979 = vmatprep.subr.mxu0 0.0
    %1980 = vmatpush1.msra.mxu0 0.0
    %1981 = vmatprep.subr.mxu0 0.0
    %1982 = vmatpush1.msra.mxu0 0.0
    %1983 = vmatprep.subr.mxu0 0.0
    %1984 = vmatpush1.msra.mxu0 0.0
    %1985 = vmatprep.subr.mxu0 0.0
    %1986 = vmatpush1.msra.mxu0 0.0
    %1987 = vmatprep.subr.mxu0 0.0
    %1988 = vmatpush1.msra.mxu0 0.0
    %1989 = vmatprep.subr.mxu0 0.0
    %1990 = vmatpush1.msra.mxu0 0.0
    %1991 = vmatprep.subr.mxu0 0.0
    %1992 = vmatpush1.msra.mxu0 0.0
    %1993 = vmatprep.subr.mxu0 0.0
    %1994 = vmatpush1.msra.mxu0 0.0
    %1995 = vmatprep.subr.mxu0 0.0
    %1996 = vmatpush1.msra.mxu0 0.0
    %1997 = vmatprep.subr.mxu0 0.0
    %1998 = vmatpush1.msra.mxu0 0.0
    %1999 = vmatprep.subr.mxu0 0.0
    %2000 = vmatpush1.msra.mxu0 0.0
    %2001 = vmatprep.subr.mxu0 0.0
    %2002 = vmatpush1.msra.mxu0 0.0
    %2003 = vmatprep.mubr.f32.mxu0 0.0
    %2004 = vmatmul.mubr.f32.gmra.mrb[0].mxu0 %v1937
    %v2005 = vpop.f32.mrb[0].mxu0
    %v2006 = vadd.f32 0.0, %v2005
    %v2007 = vpop.f32.mrb[0].mxu0
    %2008 = vdwg.mxu0
    %v2010 = vsel %vm1142, %v1857, 0
    %2012 = vmatprep.subr.mxu0 0.0
    %2013 = vmatpush1.msra.mxu0 %v1070
    %2014 = vmatprep.subr.mxu0 0.0
    %2015 = vmatpush1.msra.mxu0 0.0
    %2016 = vmatprep.subr.mxu0 0.0
    %2017 = vmatpush1.msra.mxu0 0.0
    %2018 = vmatprep.subr.mxu0 0.0
    %2019 = vmatpush1.msra.mxu0 0.0
    %2020 = vmatprep.subr.mxu0 0.0
    %2021 = vmatpush1.msra.mxu0 0.0
    %2022 = vmatprep.subr.mxu0 0.0
    %2023 = vmatpush1.msra.mxu0 0.0
    %2024 = vmatprep.subr.mxu0 0.0
    %2025 = vmatpush1.msra.mxu0 0.0
    %2026 = vmatprep.subr.mxu0 0.0
    %2027 = vmatpush1.msra.mxu0 0.0
    %2028 = vmatprep.subr.mxu0 0.0
    %2029 = vmatpush1.msra.mxu0 0.0
    %2030 = vmatprep.subr.mxu0 0.0
    %2031 = vmatpush1.msra.mxu0 0.0
    %2032 = vmatprep.subr.mxu0 0.0
    %2033 = vmatpush1.msra.mxu0 0.0
    %2034 = vmatprep.subr.mxu0 0.0
    %2035 = vmatpush1.msra.mxu0 0.0
    %2036 = vmatprep.subr.mxu0 0.0
    %2037 = vmatpush1.msra.mxu0 0.0
    %2038 = vmatprep.subr.mxu0 0.0
    %2039 = vmatpush1.msra.mxu0 0.0
    %2040 = vmatprep.subr.mxu0 0.0
    %2041 = vmatpush1.msra.mxu0 0.0
    %2042 = vmatprep.subr.mxu0 0.0
    %2043 = vmatpush1.msra.mxu0 0.0
    %2044 = vmatprep.subr.mxu0 0.0
    %2045 = vmatpush1.msra.mxu0 0.0
    %2046 = vmatprep.subr.mxu0 0.0
    %2047 = vmatpush1.msra.mxu0 0.0
    %2048 = vmatprep.subr.mxu0 0.0
    %2049 = vmatpush1.msra.mxu0 0.0
    %2050 = vmatprep.subr.mxu0 0.0
    %2051 = vmatpush1.msra.mxu0 0.0
    %2052 = vmatprep.subr.mxu0 0.0
    %2053 = vmatpush1.msra.mxu0 0.0
    %2054 = vmatprep.subr.mxu0 0.0
    %2055 = vmatpush1.msra.mxu0 0.0
    %2056 = vmatprep.subr.mxu0 0.0
    %2057 = vmatpush1.msra.mxu0 0.0
    %2058 = vmatprep.subr.mxu0 0.0
    %2059 = vmatpush1.msra.mxu0 0.0
    %2060 = vmatprep.subr.mxu0 0.0
    %2061 = vmatpush1.msra.mxu0 0.0
    %2062 = vmatprep.subr.mxu0 0.0
    %2063 = vmatpush1.msra.mxu0 0.0
    %2064 = vmatprep.subr.mxu0 0.0
    %2065 = vmatpush1.msra.mxu0 0.0
    %2066 = vmatprep.subr.mxu0 0.0
    %2067 = vmatpush1.msra.mxu0 0.0
    %2068 = vmatprep.subr.mxu0 0.0
    %2069 = vmatpush1.msra.mxu0 0.0
    %2070 = vmatprep.subr.mxu0 0.0
    %2071 = vmatpush1.msra.mxu0 0.0
    %2072 = vmatprep.subr.mxu0 0.0
    %2073 = vmatpush1.msra.mxu0 0.0
    %2074 = vmatprep.subr.mxu0 0.0
    %2075 = vmatpush1.msra.mxu0 0.0
    %2076 = vmatprep.mubr.f32.mxu0 0.0
    %2077 = vmatmul.mubr.f32.gmra.mrb[0].mxu0 %v2010
    %v2078 = vpop.f32.mrb[0].mxu0
    %v2079 = vadd.f32 0.0, %v2078
    %v2080 = vpop.f32.mrb[0].mxu0
    %2081 = vdwg.mxu0
    %v2083 = vsel %vm1142, %v1858, 0
    %2085 = vmatprep.subr.mxu0 0.0
    %2086 = vmatpush1.msra.mxu0 %v1071
    %2087 = vmatprep.subr.mxu0 0.0
    %2088 = vmatpush1.msra.mxu0 0.0
    %2089 = vmatprep.subr.mxu0 0.0
    %2090 = vmatpush1.msra.mxu0 0.0
    %2091 = vmatprep.subr.mxu0 0.0
    %2092 = vmatpush1.msra.mxu0 0.0
    %2093 = vmatprep.subr.mxu0 0.0
    %2094 = vmatpush1.msra.mxu0 0.0
    %2095 = vmatprep.subr.mxu0 0.0
    %2096 = vmatpush1.msra.mxu0 0.0
    %2097 = vmatprep.subr.mxu0 0.0
    %2098 = vmatpush1.msra.mxu0 0.0
    %2099 = vmatprep.subr.mxu0 0.0
    %2100 = vmatpush1.msra.mxu0 0.0
    %2101 = vmatprep.subr.mxu0 0.0
    %2102 = vmatpush1.msra.mxu0 0.0
    %2103 = vmatprep.subr.mxu0 0.0
    %2104 = vmatpush1.msra.mxu0 0.0
    %2105 = vmatprep.subr.mxu0 0.0
    %2106 = vmatpush1.msra.mxu0 0.0
    %2107 = vmatprep.subr.mxu0 0.0
    %2108 = vmatpush1.msra.mxu0 0.0
    %2109 = vmatprep.subr.mxu0 0.0
    %2110 = vmatpush1.msra.mxu0 0.0
    %2111 = vmatprep.subr.mxu0 0.0
    %2112 = vmatpush1.msra.mxu0 0.0
    %2113 = vmatprep.subr.mxu0 0.0
    %2114 = vmatpush1.msra.mxu0 0.0
    %2115 = vmatprep.subr.mxu0 0.0
    %2116 = vmatpush1.msra.mxu0 0.0
    %2117 = vmatprep.subr.mxu0 0.0
    %2118 = vmatpush1.msra.mxu0 0.0
    %2119 = vmatprep.subr.mxu0 0.0
    %2120 = vmatpush1.msra.mxu0 0.0
    %2121 = vmatprep.subr.mxu0 0.0
    %2122 = vmatpush1.msra.mxu0 0.0
    %2123 = vmatprep.subr.mxu0 0.0
    %2124 = vmatpush1.msra.mxu0 0.0
    %2125 = vmatprep.subr.mxu0 0.0
    %2126 = vmatpush1.msra.mxu0 0.0
    %2127 = vmatprep.subr.mxu0 0.0
    %2128 = vmatpush1.msra.mxu0 0.0
    %2129 = vmatprep.subr.mxu0 0.0
    %2130 = vmatpush1.msra.mxu0 0.0
    %2131 = vmatprep.subr.mxu0 0.0
    %2132 = vmatpush1.msra.mxu0 0.0
    %2133 = vmatprep.subr.mxu0 0.0
    %2134 = vmatpush1.msra.mxu0 0.0
    %2135 = vmatprep.subr.mxu0 0.0
    %2136 = vmatpush1.msra.mxu0 0.0
    %2137 = vmatprep.subr.mxu0 0.0
    %2138 = vmatpush1.msra.mxu0 0.0
    %2139 = vmatprep.subr.mxu0 0.0
    %2140 = vmatpush1.msra.mxu0 0.0
    %2141 = vmatprep.subr.mxu0 0.0
    %2142 = vmatpush1.msra.mxu0 0.0
    %2143 = vmatprep.subr.mxu0 0.0
    %2144 = vmatpush1.msra.mxu0 0.0
    %2145 = vmatprep.subr.mxu0 0.0
    %2146 = vmatpush1.msra.mxu0 0.0
    %2147 = vmatprep.subr.mxu0 0.0
    %2148 = vmatpush1.msra.mxu0 0.0
    %2149 = vmatprep.mubr.f32.mxu0 0.0
    %2150 = vmatmul.mubr.f32.gmra.mrb[0].mxu0 %v2083
    %v2151 = vpop.f32.mrb[0].mxu0
    %v2152 = vadd.f32 0.0, %v2151
    %v2153 = vpop.f32.mrb[0].mxu0
    %2154 = vdwg.mxu0
    %v2156 = vsel %vm1142, %v1859, 0
    %2158 = vmatprep.subr.mxu0 0.0
    %2159 = vmatpush1.msra.mxu0 %v1136
    %2160 = vmatprep.subr.mxu0 0.0
    %2161 = vmatpush1.msra.mxu0 0.0
    %2162 = vmatprep.subr.mxu0 0.0
    %2163 = vmatpush1.msra.mxu0 0.0
    %2164 = vmatprep.subr.mxu0 0.0
    %2165 = vmatpush1.msra.mxu0 0.0
    %2166 = vmatprep.subr.mxu0 0.0
    %2167 = vmatpush1.msra.mxu0 0.0
    %2168 = vmatprep.subr.mxu0 0.0
    %2169 = vmatpush1.msra.mxu0 0.0
    %2170 = vmatprep.subr.mxu0 0.0
    %2171 = vmatpush1.msra.mxu0 0.0
    %2172 = vmatprep.subr.mxu0 0.0
    %2173 = vmatpush1.msra.mxu0 0.0
    %2174 = vmatprep.subr.mxu0 0.0
    %2175 = vmatpush1.msra.mxu0 0.0
    %2176 = vmatprep.subr.mxu0 0.0
    %2177 = vmatpush1.msra.mxu0 0.0
    %2178 = vmatprep.subr.mxu0 0.0
    %2179 = vmatpush1.msra.mxu0 0.0
    %2180 = vmatprep.subr.mxu0 0.0
    %2181 = vmatpush1.msra.mxu0 0.0
    %2182 = vmatprep.subr.mxu0 0.0
    %2183 = vmatpush1.msra.mxu0 0.0
    %2184 = vmatprep.subr.mxu0 0.0
    %2185 = vmatpush1.msra.mxu0 0.0
    %2186 = vmatprep.subr.mxu0 0.0
    %2187 = vmatpush1.msra.mxu0 0.0
    %2188 = vmatprep.subr.mxu0 0.0
    %2189 = vmatpush1.msra.mxu0 0.0
    %2190 = vmatprep.subr.mxu0 0.0
    %2191 = vmatpush1.msra.mxu0 0.0
    %2192 = vmatprep.subr.mxu0 0.0
    %2193 = vmatpush1.msra.mxu0 0.0
    %2194 = vmatprep.subr.mxu0 0.0
    %2195 = vmatpush1.msra.mxu0 0.0
    %2196 = vmatprep.subr.mxu0 0.0
    %2197 = vmatpush1.msra.mxu0 0.0
    %2198 = vmatprep.subr.mxu0 0.0
    %2199 = vmatpush1.msra.mxu0 0.0
    %2200 = vmatprep.subr.mxu0 0.0
    %2201 = vmatpush1.msra.mxu0 0.0
    %2202 = vmatprep.subr.mxu0 0.0
    %2203 = vmatpush1.msra.mxu0 0.0
    %2204 = vmatprep.subr.mxu0 0.0
    %2205 = vmatpush1.msra.mxu0 0.0
    %2206 = vmatprep.subr.mxu0 0.0
    %2207 = vmatpush1.msra.mxu0 0.0
    %2208 = vmatprep.subr.mxu0 0.0
    %2209 = vmatpush1.msra.mxu0 0.0
    %2210 = vmatprep.subr.mxu0 0.0
    %2211 = vmatpush1.msra.mxu0 0.0
    %2212 = vmatprep.subr.mxu0 0.0
    %2213 = vmatpush1.msra.mxu0 0.0
    %2214 = vmatprep.subr.mxu0 0.0
    %2215 = vmatpush1.msra.mxu0 0.0
    %2216 = vmatprep.subr.mxu0 0.0
    %2217 = vmatpush1.msra.mxu0 0.0
    %2218 = vmatprep.subr.mxu0 0.0
    %2219 = vmatpush1.msra.mxu0 0.0
    %2220 = vmatprep.subr.mxu0 0.0
    %2221 = vmatpush1.msra.mxu0 0.0
    %2222 = vmatprep.mubr.f32.mxu0 0.0
    %2223 = vmatmul.mubr.f32.gmra.mrb[0].mxu0 %v2156
    %v2224 = vpop.f32.mrb[0].mxu0
    %v2225 = vadd.f32 0.0, %v2224
    %v2226 = vpop.f32.mrb[0].mxu0
    %2227 = vdwg.mxu0
    %v2229 = vsel %vm1142, %v1860, 0
    %2231 = vmatprep.subr.mxu0 0.0
    %2232 = vmatpush1.msra.mxu0 %v1137
    %2233 = vmatprep.subr.mxu0 0.0
    %2234 = vmatpush1.msra.mxu0 0.0
    %2235 = vmatprep.subr.mxu0 0.0
    %2236 = vmatpush1.msra.mxu0 0.0
    %2237 = vmatprep.subr.mxu0 0.0
    %2238 = vmatpush1.msra.mxu0 0.0
    %2239 = vmatprep.subr.mxu0 0.0
    %2240 = vmatpush1.msra.mxu0 0.0
    %2241 = vmatprep.subr.mxu0 0.0
    %2242 = vmatpush1.msra.mxu0 0.0
    %2243 = vmatprep.subr.mxu0 0.0
    %2244 = vmatpush1.msra.mxu0 0.0
    %2245 = vmatprep.subr.mxu0 0.0
    %2246 = vmatpush1.msra.mxu0 0.0
    %2247 = vmatprep.subr.mxu0 0.0
    %2248 = vmatpush1.msra.mxu0 0.0
    %2249 = vmatprep.subr.mxu0 0.0
    %2250 = vmatpush1.msra.mxu0 0.0
    %2251 = vmatprep.subr.mxu0 0.0
    %2252 = vmatpush1.msra.mxu0 0.0
    %2253 = vmatprep.subr.mxu0 0.0
    %2254 = vmatpush1.msra.mxu0 0.0
    %2255 = vmatprep.subr.mxu0 0.0
    %2256 = vmatpush1.msra.mxu0 0.0
    %2257 = vmatprep.subr.mxu0 0.0
    %2258 = vmatpush1.msra.mxu0 0.0
    %2259 = vmatprep.subr.mxu0 0.0
    %2260 = vmatpush1.msra.mxu0 0.0
    %2261 = vmatprep.subr.mxu0 0.0
    %2262 = vmatpush1.msra.mxu0 0.0
    %2263 = vmatprep.subr.mxu0 0.0
    %2264 = vmatpush1.msra.mxu0 0.0
    %2265 = vmatprep.subr.mxu0 0.0
    %2266 = vmatpush1.msra.mxu0 0.0
    %2267 = vmatprep.subr.mxu0 0.0
    %2268 = vmatpush1.msra.mxu0 0.0
    %2269 = vmatprep.subr.mxu0 0.0
    %2270 = vmatpush1.msra.mxu0 0.0
    %2271 = vmatprep.subr.mxu0 0.0
    %2272 = vmatpush1.msra.mxu0 0.0
    %2273 = vmatprep.subr.mxu0 0.0
    %2274 = vmatpush1.msra.mxu0 0.0
    %2275 = vmatprep.subr.mxu0 0.0
    %2276 = vmatpush1.msra.mxu0 0.0
    %2277 = vmatprep.subr.mxu0 0.0
    %2278 = vmatpush1.msra.mxu0 0.0
    %2279 = vmatprep.subr.mxu0 0.0
    %2280 = vmatpush1.msra.mxu0 0.0
    %2281 = vmatprep.subr.mxu0 0.0
    %2282 = vmatpush1.msra.mxu0 0.0
    %2283 = vmatprep.subr.mxu0 0.0
    %2284 = vmatpush1.msra.mxu0 0.0
    %2285 = vmatprep.subr.mxu0 0.0
    %2286 = vmatpush1.msra.mxu0 0.0
    %2287 = vmatprep.subr.mxu0 0.0
    %2288 = vmatpush1.msra.mxu0 0.0
    %2289 = vmatprep.subr.mxu0 0.0
    %2290 = vmatpush1.msra.mxu0 0.0
    %2291 = vmatprep.subr.mxu0 0.0
    %2292 = vmatpush1.msra.mxu0 0.0
    %2293 = vmatprep.subr.mxu0 0.0
    %2294 = vmatpush1.msra.mxu0 0.0
    %2295 = vmatprep.mubr.f32.mxu0 0.0
    %2296 = vmatmul.mubr.f32.gmra.mrb[0].mxu0 %v2229
    %v2297 = vpop.f32.mrb[0].mxu0
    %v2298 = vadd.f32 0.0, %v2297
    %v2299 = vpop.f32.mrb[0].mxu0
    %2300 = vdwg.mxu0
    %v2302 = vsel %vm1142, %v1861, 0
    %2304 = vmatprep.subr.mxu0 0.0
    %2305 = vmatpush1.msra.mxu0 %v1138
    %2306 = vmatprep.subr.mxu0 0.0
    %2307 = vmatpush1.msra.mxu0 0.0
    %2308 = vmatprep.subr.mxu0 0.0
    %2309 = vmatpush1.msra.mxu0 0.0
    %2310 = vmatprep.subr.mxu0 0.0
    %2311 = vmatpush1.msra.mxu0 0.0
    %2312 = vmatprep.subr.mxu0 0.0
    %2313 = vmatpush1.msra.mxu0 0.0
    %2314 = vmatprep.subr.mxu0 0.0
    %2315 = vmatpush1.msra.mxu0 0.0
    %2316 = vmatprep.subr.mxu0 0.0
    %2317 = vmatpush1.msra.mxu0 0.0
    %2318 = vmatprep.subr.mxu0 0.0
    %2319 = vmatpush1.msra.mxu0 0.0
    %2320 = vmatprep.subr.mxu0 0.0
    %2321 = vmatpush1.msra.mxu0 0.0
    %2322 = vmatprep.subr.mxu0 0.0
    %2323 = vmatpush1.msra.mxu0 0.0
    %2324 = vmatprep.subr.mxu0 0.0
    %2325 = vmatpush1.msra.mxu0 0.0
    %2326 = vmatprep.subr.mxu0 0.0
    %2327 = vmatpush1.msra.mxu0 0.0
    %2328 = vmatprep.subr.mxu0 0.0
    %2329 = vmatpush1.msra.mxu0 0.0
    %2330 = vmatprep.subr.mxu0 0.0
    %2331 = vmatpush1.msra.mxu0 0.0
    %2332 = vmatprep.subr.mxu0 0.0
    %2333 = vmatpush1.msra.mxu0 0.0
    %2334 = vmatprep.subr.mxu0 0.0
    %2335 = vmatpush1.msra.mxu0 0.0
    %2336 = vmatprep.subr.mxu0 0.0
    %2337 = vmatpush1.msra.mxu0 0.0
    %2338 = vmatprep.subr.mxu0 0.0
    %2339 = vmatpush1.msra.mxu0 0.0
    %2340 = vmatprep.subr.mxu0 0.0
    %2341 = vmatpush1.msra.mxu0 0.0
    %2342 = vmatprep.subr.mxu0 0.0
    %2343 = vmatpush1.msra.mxu0 0.0
    %2344 = vmatprep.subr.mxu0 0.0
    %2345 = vmatpush1.msra.mxu0 0.0
    %2346 = vmatprep.subr.mxu0 0.0
    %2347 = vmatpush1.msra.mxu0 0.0
    %2348 = vmatprep.subr.mxu0 0.0
    %2349 = vmatpush1.msra.mxu0 0.0
    %2350 = vmatprep.subr.mxu0 0.0
    %2351 = vmatpush1.msra.mxu0 0.0
    %2352 = vmatprep.subr.mxu0 0.0
    %2353 = vmatpush1.msra.mxu0 0.0
    %2354 = vmatprep.subr.mxu0 0.0
    %2355 = vmatpush1.msra.mxu0 0.0
    %2356 = vmatprep.subr.mxu0 0.0
    %2357 = vmatpush1.msra.mxu0 0.0
    %2358 = vmatprep.subr.mxu0 0.0
    %2359 = vmatpush1.msra.mxu0 0.0
    %2360 = vmatprep.subr.mxu0 0.0
    %2361 = vmatpush1.msra.mxu0 0.0
    %2362 = vmatprep.subr.mxu0 0.0
    %2363 = vmatpush1.msra.mxu0 0.0
    %2364 = vmatprep.subr.mxu0 0.0
    %2365 = vmatpush1.msra.mxu0 0.0
    %2366 = vmatprep.subr.mxu0 0.0
    %2367 = vmatpush1.msra.mxu0 0.0
    %2368 = vmatprep.mubr.f32.mxu0 0.0
    %2369 = vmatmul.mubr.f32.gmra.mrb[0].mxu0 %v2302
    %v2370 = vpop.f32.mrb[0].mxu0
    %v2371 = vadd.f32 0.0, %v2370
    %v2372 = vpop.f32.mrb[0].mxu0
    %2373 = vdwg.mxu0
    %v2375 = vsel %vm1142, %v1862, 0
    %2377 = vmatprep.subr.mxu0 0.0
    %2378 = vmatpush1.msra.mxu0 %v1139
    %2379 = vmatprep.subr.mxu0 0.0
    %2380 = vmatpush1.msra.mxu0 0.0
    %2381 = vmatprep.subr.mxu0 0.0
    %2382 = vmatpush1.msra.mxu0 0.0
    %2383 = vmatprep.subr.mxu0 0.0
    %2384 = vmatpush1.msra.mxu0 0.0
    %2385 = vmatprep.subr.mxu0 0.0
    %2386 = vmatpush1.msra.mxu0 0.0
    %2387 = vmatprep.subr.mxu0 0.0
    %2388 = vmatpush1.msra.mxu0 0.0
    %2389 = vmatprep.subr.mxu0 0.0
    %2390 = vmatpush1.msra.mxu0 0.0
    %2391 = vmatprep.subr.mxu0 0.0
    %2392 = vmatpush1.msra.mxu0 0.0
    %2393 = vmatprep.subr.mxu0 0.0
    %2394 = vmatpush1.msra.mxu0 0.0
    %2395 = vmatprep.subr.mxu0 0.0
    %2396 = vmatpush1.msra.mxu0 0.0
    %2397 = vmatprep.subr.mxu0 0.0
    %2398 = vmatpush1.msra.mxu0 0.0
    %2399 = vmatprep.subr.mxu0 0.0
    %2400 = vmatpush1.msra.mxu0 0.0
    %2401 = vmatprep.subr.mxu0 0.0
    %2402 = vmatpush1.msra.mxu0 0.0
    %2403 = vmatprep.subr.mxu0 0.0
    %2404 = vmatpush1.msra.mxu0 0.0
    %2405 = vmatprep.subr.mxu0 0.0
    %2406 = vmatpush1.msra.mxu0 0.0
    %2407 = vmatprep.subr.mxu0 0.0
    %2408 = vmatpush1.msra.mxu0 0.0
    %2409 = vmatprep.subr.mxu0 0.0
    %2410 = vmatpush1.msra.mxu0 0.0
    %2411 = vmatprep.subr.mxu0 0.0
    %2412 = vmatpush1.msra.mxu0 0.0
    %2413 = vmatprep.subr.mxu0 0.0
    %2414 = vmatpush1.msra.mxu0 0.0
    %2415 = vmatprep.subr.mxu0 0.0
    %2416 = vmatpush1.msra.mxu0 0.0
    %2417 = vmatprep.subr.mxu0 0.0
    %2418 = vmatpush1.msra.mxu0 0.0
    %2419 = vmatprep.subr.mxu0 0.0
    %2420 = vmatpush1.msra.mxu0 0.0
    %2421 = vmatprep.subr.mxu0 0.0
    %2422 = vmatpush1.msra.mxu0 0.0
    %2423 = vmatprep.subr.mxu0 0.0
    %2424 = vmatpush1.msra.mxu0 0.0
    %2425 = vmatprep.subr.mxu0 0.0
    %2426 = vmatpush1.msra.mxu0 0.0
    %2427 = vmatprep.subr.mxu0 0.0
    %2428 = vmatpush1.msra.mxu0 0.0
    %2429 = vmatprep.subr.mxu0 0.0
    %2430 = vmatpush1.msra.mxu0 0.0
    %2431 = vmatprep.subr.mxu0 0.0
    %2432 = vmatpush1.msra.mxu0 0.0
    %2433 = vmatprep.subr.mxu0 0.0
    %2434 = vmatpush1.msra.mxu0 0.0
    %2435 = vmatprep.subr.mxu0 0.0
    %2436 = vmatpush1.msra.mxu0 0.0
    %2437 = vmatprep.subr.mxu0 0.0
    %2438 = vmatpush1.msra.mxu0 0.0
    %2439 = vmatprep.subr.mxu0 0.0
    %2440 = vmatpush1.msra.mxu0 0.0
    %2441 = vmatprep.mubr.f32.mxu0 0.0
    %2442 = vmatmul.mubr.f32.gmra.mrb[0].mxu0 %v2375
    %v2443 = vpop.f32.mrb[0].mxu0
    %v2444 = vadd.f32 0.0, %v2443
    %v2445 = vpop.f32.mrb[0].mxu0
    %2446 = vdwg.mxu0
    %v2447 = vcombine.low %v1933, %v2079
    %v2448 = vcombine.high %v1933, %v2079
    %v2450 = vunpack.c.l.s4 1983009808
    %v2451 = vunpack.c.0.s8 %v2450
    %v2452 = vlaneseq
    %v2453 = vshrl.u32 %v2452, 7
    %v2454 = vsub.s32 %v2451, %v2453
    %v2455 = vrot.slane %v2447, %v2454
    %v2457 = vunpack.c.l.s4 1983009808
    %v2458 = vunpack.c.0.s8 %v2457
    %v2459 = vlaneseq
    %v2460 = vshrl.u32 %v2459, 7
    %v2461 = vsub.s32 %v2458, %v2460
    %v2462 = vrot.slane %v2448, %v2461
    %v2463 = vcombine.low %v2006, %v2152
    %v2464 = vcombine.high %v2006, %v2152
    %v2466 = vunpack.c.l.s4 1983009808
    %v2467 = vunpack.c.0.s8 %v2466
    %v2468 = vlaneseq
    %v2469 = vshrl.u32 %v2468, 7
    %v2470 = vsub.s32 %v2467, %v2469
    %v2471 = vrot.slane %v2463, %v2470
    %v2473 = vunpack.c.l.s4 1983009808
    %v2474 = vunpack.c.0.s8 %v2473
    %v2475 = vlaneseq
    %v2476 = vshrl.u32 %v2475, 7
    %v2477 = vsub.s32 %v2474, %v2476
    %v2478 = vrot.slane %v2464, %v2477
    %v2479 = vcombine.low %v2455, %v2471
    %v2480 = vcombine.high %v2455, %v2471
    %v2482 = vunpack.c.l.s4 1934713408
    %v2483 = vunpack.c.0.s8 %v2482
    %v2484 = vlaneseq
    %v2485 = vshrl.u32 %v2484, 7
    %v2486 = vsub.s32 %v2483, %v2485
    %v2487 = vrot.slane %v2479, %v2486
    %v2489 = vunpack.c.l.s4 1934713408
    %v2490 = vunpack.c.0.s8 %v2489
    %v2491 = vlaneseq
    %v2492 = vshrl.u32 %v2491, 7
    %v2493 = vsub.s32 %v2490, %v2492
    %v2494 = vrot.slane %v2480, %v2493
    %v2495 = vcombine.low %v2462, %v2478
    %v2496 = vcombine.high %v2462, %v2478
    %v2498 = vunpack.c.l.s4 1934713408
    %v2499 = vunpack.c.0.s8 %v2498
    %v2500 = vlaneseq
    %v2501 = vshrl.u32 %v2500, 7
    %v2502 = vsub.s32 %v2499, %v2501
    %v2503 = vrot.slane %v2495, %v2502
    %v2505 = vunpack.c.l.s4 1934713408
    %v2506 = vunpack.c.0.s8 %v2505
    %v2507 = vlaneseq
    %v2508 = vshrl.u32 %v2507, 7
    %v2509 = vsub.s32 %v2506, %v2508
    %v2510 = vrot.slane %v2496, %v2509
    %v2511 = vcombine.high %v2487, 0.0
    %v2512 = vcombine.high %v2494, 0.0
    %v2513 = vcombine.high %v2503, 0.0
    %v2514 = vcombine.high %v2510, 0.0
    %v2515 = vcombine.low %v2225, %v2371
    %v2516 = vcombine.high %v2225, %v2371
    %v2518 = vunpack.c.l.s4 1983009808
    %v2519 = vunpack.c.0.s8 %v2518
    %v2520 = vlaneseq
    %v2521 = vshrl.u32 %v2520, 7
    %v2522 = vsub.s32 %v2519, %v2521
    %v2523 = vrot.slane %v2515, %v2522
    %v2525 = vunpack.c.l.s4 1983009808
    %v2526 = vunpack.c.0.s8 %v2525
    %v2527 = vlaneseq
    %v2528 = vshrl.u32 %v2527, 7
    %v2529 = vsub.s32 %v2526, %v2528
    %v2530 = vrot.slane %v2516, %v2529
    %v2531 = vcombine.low %v2298, %v2444
    %v2532 = vcombine.high %v2298, %v2444
    %v2534 = vunpack.c.l.s4 1983009808
    %v2535 = vunpack.c.0.s8 %v2534
    %v2536 = vlaneseq
    %v2537 = vshrl.u32 %v2536, 7
    %v2538 = vsub.s32 %v2535, %v2537
    %v2539 = vrot.slane %v2531, %v2538
    %v2541 = vunpack.c.l.s4 1983009808
    %v2542 = vunpack.c.0.s8 %v2541
    %v2543 = vlaneseq
    %v2544 = vshrl.u32 %v2543, 7
    %v2545 = vsub.s32 %v2542, %v2544
    %v2546 = vrot.slane %v2532, %v2545
    %v2547 = vcombine.low %v2523, %v2539
    %v2548 = vcombine.high %v2523, %v2539
    %v2550 = vunpack.c.l.s4 1934713408
    %v2551 = vunpack.c.0.s8 %v2550
    %v2552 = vlaneseq
    %v2553 = vshrl.u32 %v2552, 7
    %v2554 = vsub.s32 %v2551, %v2553
    %v2555 = vrot.slane %v2547, %v2554
    %v2557 = vunpack.c.l.s4 1934713408
    %v2558 = vunpack.c.0.s8 %v2557
    %v2559 = vlaneseq
    %v2560 = vshrl.u32 %v2559, 7
    %v2561 = vsub.s32 %v2558, %v2560
    %v2562 = vrot.slane %v2548, %v2561
    %v2563 = vcombine.low %v2530, %v2546
    %v2564 = vcombine.high %v2530, %v2546
    %v2566 = vunpack.c.l.s4 1934713408
    %v2567 = vunpack.c.0.s8 %v2566
    %v2568 = vlaneseq
    %v2569 = vshrl.u32 %v2568, 7
    %v2570 = vsub.s32 %v2567, %v2569
    %v2571 = vrot.slane %v2563, %v2570
    %v2573 = vunpack.c.l.s4 1934713408
    %v2574 = vunpack.c.0.s8 %v2573
    %v2575 = vlaneseq
    %v2576 = vshrl.u32 %v2575, 7
    %v2577 = vsub.s32 %v2574, %v2576
    %v2578 = vrot.slane %v2564, %v2577
    %v2579 = vcombine.high %v2555, 0.0
    %v2580 = vcombine.high %v2562, 0.0
    %v2581 = vcombine.high %v2571, 0.0
    %v2582 = vcombine.high %v2578, 0.0
    %v2583 = vcombine.low %v2487, %v2494
    %v2585 = vunpack.c.l.s4 1983009808
    %v2586 = vunpack.c.0.s8 %v2585
    %v2587 = vlaneseq
    %v2588 = vshrl.u32 %v2587, 7
    %v2589 = vsub.s32 %v2586, %v2588
    %v2590 = vrot.slane %v2583, %v2589
    %v2591 = vcombine.low %v2511, %v2512
    %v2593 = vunpack.c.l.s4 1983009808
    %v2594 = vunpack.c.0.s8 %v2593
    %v2595 = vlaneseq
    %v2596 = vshrl.u32 %v2595, 7
    %v2597 = vsub.s32 %v2594, %v2596
    %v2598 = vrot.slane %v2591, %v2597
    %v2599 = vcombine.low %v2503, %v2510
    %v2601 = vunpack.c.l.s4 1983009808
    %v2602 = vunpack.c.0.s8 %v2601
    %v2603 = vlaneseq
    %v2604 = vshrl.u32 %v2603, 7
    %v2605 = vsub.s32 %v2602, %v2604
    %v2606 = vrot.slane %v2599, %v2605
    %v2607 = vcombine.low %v2513, %v2514
    %v2609 = vunpack.c.l.s4 1983009808
    %v2610 = vunpack.c.0.s8 %v2609
    %v2611 = vlaneseq
    %v2612 = vshrl.u32 %v2611, 7
    %v2613 = vsub.s32 %v2610, %v2612
    %v2614 = vrot.slane %v2607, %v2613
    %v2615 = vcombine.low %v2590, %v2598
    %v2616 = vcombine.high %v2590, %v2598
    %v2618 = vunpack.c.l.s4 1934713408
    %v2619 = vunpack.c.0.s8 %v2618
    %v2620 = vlaneseq
    %v2621 = vshrl.u32 %v2620, 7
    %v2622 = vsub.s32 %v2619, %v2621
    %v2623 = vrot.slane %v2615, %v2622
    %v2625 = vunpack.c.l.s4 1934713408
    %v2626 = vunpack.c.0.s8 %v2625
    %v2627 = vlaneseq
    %v2628 = vshrl.u32 %v2627, 7
    %v2629 = vsub.s32 %v2626, %v2628
    %v2630 = vrot.slane %v2616, %v2629
    %v2631 = vcombine.low %v2606, %v2614
    %v2632 = vcombine.high %v2606, %v2614
    %v2634 = vunpack.c.l.s4 1934713408
    %v2635 = vunpack.c.0.s8 %v2634
    %v2636 = vlaneseq
    %v2637 = vshrl.u32 %v2636, 7
    %v2638 = vsub.s32 %v2635, %v2637
    %v2639 = vrot.slane %v2631, %v2638
    %v2641 = vunpack.c.l.s4 1934713408
    %v2642 = vunpack.c.0.s8 %v2641
    %v2643 = vlaneseq
    %v2644 = vshrl.u32 %v2643, 7
    %v2645 = vsub.s32 %v2642, %v2644
    %v2646 = vrot.slane %v2632, %v2645
    %v2647 = vcombine.low %v2623, %v2639
    %v2648 = vcombine.high %v2623, %v2639
    %v2649 = vcombine.low %v2630, %v2646
    %v2650 = vcombine.high %v2630, %v2646
    %v2651 = vcombine.low %v2555, %v2562
    %v2653 = vunpack.c.l.s4 1983009808
    %v2654 = vunpack.c.0.s8 %v2653
    %v2655 = vlaneseq
    %v2656 = vshrl.u32 %v2655, 7
    %v2657 = vsub.s32 %v2654, %v2656
    %v2658 = vrot.slane %v2651, %v2657
    %v2659 = vcombine.low %v2579, %v2580
    %v2661 = vunpack.c.l.s4 1983009808
    %v2662 = vunpack.c.0.s8 %v2661
    %v2663 = vlaneseq
    %v2664 = vshrl.u32 %v2663, 7
    %v2665 = vsub.s32 %v2662, %v2664
    %v2666 = vrot.slane %v2659, %v2665
    %v2667 = vcombine.low %v2571, %v2578
    %v2669 = vunpack.c.l.s4 1983009808
    %v2670 = vunpack.c.0.s8 %v2669
    %v2671 = vlaneseq
    %v2672 = vshrl.u32 %v2671, 7
    %v2673 = vsub.s32 %v2670, %v2672
    %v2674 = vrot.slane %v2667, %v2673
    %v2675 = vcombine.low %v2581, %v2582
    %v2677 = vunpack.c.l.s4 1983009808
    %v2678 = vunpack.c.0.s8 %v2677
    %v2679 = vlaneseq
    %v2680 = vshrl.u32 %v2679, 7
    %v2681 = vsub.s32 %v2678, %v2680
    %v2682 = vrot.slane %v2675, %v2681
    %v2683 = vcombine.low %v2658, %v2666
    %v2684 = vcombine.high %v2658, %v2666
    %v2686 = vunpack.c.l.s4 1934713408
    %v2687 = vunpack.c.0.s8 %v2686
    %v2688 = vlaneseq
    %v2689 = vshrl.u32 %v2688, 7
    %v2690 = vsub.s32 %v2687, %v2689
    %v2691 = vrot.slane %v2683, %v2690
    %v2693 = vunpack.c.l.s4 1934713408
    %v2694 = vunpack.c.0.s8 %v2693
    %v2695 = vlaneseq
    %v2696 = vshrl.u32 %v2695, 7
    %v2697 = vsub.s32 %v2694, %v2696
    %v2698 = vrot.slane %v2684, %v2697
    %v2699 = vcombine.low %v2674, %v2682
    %v2700 = vcombine.high %v2674, %v2682
    %v2702 = vunpack.c.l.s4 1934713408
    %v2703 = vunpack.c.0.s8 %v2702
    %v2704 = vlaneseq
    %v2705 = vshrl.u32 %v2704, 7
    %v2706 = vsub.s32 %v2703, %v2705
    %v2707 = vrot.slane %v2699, %v2706
    %v2709 = vunpack.c.l.s4 1934713408
    %v2710 = vunpack.c.0.s8 %v2709
    %v2711 = vlaneseq
    %v2712 = vshrl.u32 %v2711, 7
    %v2713 = vsub.s32 %v2710, %v2712
    %v2714 = vrot.slane %v2700, %v2713
    %v2715 = vcombine.low %v2691, %v2707
    %v2716 = vcombine.high %v2691, %v2707
    %v2717 = vcombine.low %v2698, %v2714
    %v2718 = vcombine.high %v2698, %v2714
    %2721 = vrot.lane.b32.xlu0 %v2648, 8
    %v2722 = vpop.permute.xlu0 %2721
    %2723 = vrot.lane.b32.xlu0 %v2716, 8
    %v2724 = vpop.permute.xlu0 %2723
    %2729 = vrot.lane.b32.xlu0 %v2649, 16
    %v2730 = vpop.permute.xlu0 %2729
    %2731 = vrot.lane.b32.xlu0 %v2717, 16
    %v2732 = vpop.permute.xlu0 %2731
    %2737 = vrot.lane.b32.xlu0 %v2650, 24
    %v2738 = vpop.permute.xlu0 %2737
    %2739 = vrot.lane.b32.xlu0 %v2718, 24
    %v2740 = vpop.permute.xlu0 %2739
    %v2743 = vsel %vm1142, %v2647, %v2722
    %v2744 = vsel %vm1142, %v2715, %v2724
    %vm2745 = vcmask 130048
    %v2746 = vsel %vm2745, %v2743, %v2730
    %v2747 = vsel %vm2745, %v2744, %v2732
    %vm2748 = vcmask 195584
    %v2749 = vsel %vm2748, %v2746, %v2738
    %v2750 = vsel %vm2748, %v2747, %v2740
    %v2751 = vld [vmem:[%s6] sm:$0xff]
    %v2752 = vld [vmem:[%s6 + $0x8] sm:$0xff]
    %v2753 = vld [vmem:[%s6 + $0x10] sm:$0xff]
    %v2754 = vld [vmem:[%s6 + $0x18] sm:$0xff]
    %v2756 = vsel %vm131, %v2749, 0
    %v2759 = vsel %vm131, %v2750, 0
    %2761 = vmatprep.subr.mxu0 0.0
    %2762 = vmatpush1.msra.mxu0 %v2751
    %2763 = vmatprep.subr.mxu0 0.0
    %2764 = vmatpush1.msra.mxu0 %v2752
    %2765 = vmatprep.subr.mxu0 0.0
    %2766 = vmatpush1.msra.mxu0 %v2753
    %2767 = vmatprep.subr.mxu0 0.0
    %2768 = vmatpush1.msra.mxu0 %v2754
    %2769 = vmatprep.subr.mxu0 0.0
    %2770 = vmatpush1.msra.mxu0 0.0
    %2771 = vmatprep.subr.mxu0 0.0
    %2772 = vmatpush1.msra.mxu0 0.0
    %2773 = vmatprep.subr.mxu0 0.0
    %2774 = vmatpush1.msra.mxu0 0.0
    %2775 = vmatprep.subr.mxu0 0.0
    %2776 = vmatpush1.msra.mxu0 0.0
    %2777 = vmatprep.subr.mxu0 0.0
    %2778 = vmatpush1.msra.mxu0 0.0
    %2779 = vmatprep.subr.mxu0 0.0
    %2780 = vmatpush1.msra.mxu0 0.0
    %2781 = vmatprep.subr.mxu0 0.0
    %2782 = vmatpush1.msra.mxu0 0.0
    %2783 = vmatprep.subr.mxu0 0.0
    %2784 = vmatpush1.msra.mxu0 0.0
    %2785 = vmatprep.subr.mxu0 0.0
    %2786 = vmatpush1.msra.mxu0 0.0
    %2787 = vmatprep.subr.mxu0 0.0
    %2788 = vmatpush1.msra.mxu0 0.0
    %2789 = vmatprep.subr.mxu0 0.0
    %2790 = vmatpush1.msra.mxu0 0.0
    %2791 = vmatprep.subr.mxu0 0.0
    %2792 = vmatpush1.msra.mxu0 0.0
    %2793 = vmatprep.subr.mxu0 0.0
    %2794 = vmatpush1.msra.mxu0 0.0
    %2795 = vmatprep.subr.mxu0 0.0
    %2796 = vmatpush1.msra.mxu0 0.0
    %2797 = vmatprep.subr.mxu0 0.0
    %2798 = vmatpush1.msra.mxu0 0.0
    %2799 = vmatprep.subr.mxu0 0.0
    %2800 = vmatpush1.msra.mxu0 0.0
    %2801 = vmatprep.subr.mxu0 0.0
    %2802 = vmatpush1.msra.mxu0 0.0
    %2803 = vmatprep.subr.mxu0 0.0
    %2804 = vmatpush1.msra.mxu0 0.0
    %2805 = vmatprep.subr.mxu0 0.0
    %2806 = vmatpush1.msra.mxu0 0.0
    %2807 = vmatprep.subr.mxu0 0.0
    %2808 = vmatpush1.msra.mxu0 0.0
    %2809 = vmatprep.subr.mxu0 0.0
    %2810 = vmatpush1.msra.mxu0 0.0
    %2811 = vmatprep.subr.mxu0 0.0
    %2812 = vmatpush1.msra.mxu0 0.0
    %2813 = vmatprep.subr.mxu0 0.0
    %2814 = vmatpush1.msra.mxu0 0.0
    %2815 = vmatprep.subr.mxu0 0.0
    %2816 = vmatpush1.msra.mxu0 0.0
    %2817 = vmatprep.subr.mxu0 0.0
    %2818 = vmatpush1.msra.mxu0 0.0
    %2819 = vmatprep.subr.mxu0 0.0
    %2820 = vmatpush1.msra.mxu0 0.0
    %2821 = vmatprep.subr.mxu0 0.0
    %2822 = vmatpush1.msra.mxu0 0.0
    %2823 = vmatprep.subr.mxu0 0.0
    %2824 = vmatpush1.msra.mxu0 0.0
    %2825 = vmatprep.mubr.f32.mxu0 0.0
    %2826 = vmatmul.mubr.f32.gmra.mrb[0].mxu0 %v2756
    %v2827 = vpop.f32.mrb[0].mxu0
    %v2828 = vadd.f32 0.0, %v2827
    %v2829 = vpop.f32.mrb[0].mxu0
    %2830 = vmatprep.mubr.f32.mxu0 0.0
    %2831 = vmatmul.mubr.f32.gmra.mrb[0].mxu0 %v2759
    %v2832 = vpop.f32.mrb[0].mxu0
    %v2833 = vadd.f32 0.0, %v2832
    %v2834 = vpop.f32.mrb[0].mxu0
    %2835 = vdwg.mxu0
    %v2836 = vadd.f32 %v124, %v2828
    %v2837 = vadd.f32 %v125, %v2833
    %v2838 = vsel %vm131, %v2836, 0.0
    %2839 = vadd.xlane.f32.xlu0 %v2838
    %v2840 = vpop.xlane.xlu0 %2839
    %v2841 = vsel %vm131, %v2837, 0.0
    %2842 = vadd.xlane.f32.xlu0 %v2841
    %v2843 = vpop.xlane.xlu0 %2842
    %v2844 = vmul.f32 %v2840, %v138
    %v2845 = vmul.f32 %v2843, %v138
    %v2846 = vsub.f32 %v2836, %v2844
    %v2847 = vsub.f32 %v2837, %v2845
    %v2848 = vmul.f32 %v2846, %v2846
    %v2849 = vmul.f32 %v2847, %v2847
    %v2850 = vsel %vm131, %v2848, 0.0
    %2851 = vadd.xlane.f32.xlu0 %v2850
    %v2852 = vpop.xlane.xlu0 %2851
    %v2853 = vsel %vm131, %v2849, 0.0
    %2854 = vadd.xlane.f32.xlu0 %v2853
    %v2855 = vpop.xlane.xlu0 %2854
    %v2856 = vmul.f32 %v2852, %v138
    %v2857 = vmul.f32 %v2855, %v138
    %v2858 = vadd.f32 %v2856, 1e-06
    %v2859 = vadd.f32 %v2857, 1e-06
    %v2860 = vrsqrt.pop %v2858
    %v2861 = vrsqrt.pop %v2859
    %v2862 = vmul.f32 %v2846, %v2860
    %v2863 = vmul.f32 %v2847, %v2861
    %v2864 = vlaneseq
    %v2865 = vshrl.u32 %v2864, 7
    %v2866 = vsub.s32 2, %v2865
    %v2867 = vrot.slane %v130, %v2866
    %v2868 = vmul.f32 %v2862, %v2867
    %v2869 = vmul.f32 %v2863, %v2867
    %v2870 = vlaneseq
    %v2871 = vshrl.u32 %v2870, 7
    %v2872 = vsub.s32 3, %v2871
    %v2873 = vrot.slane %v130, %v2872
    %v2874 = vadd.f32 %v2868, %v2873
    %v2875 = vadd.f32 %v2869, %v2873
    %v2876 = vld [vmem:[#allocation7] sm:$0xff]
    %v2877 = vld [vmem:[#allocation7 + $0x8] sm:$0xff]
    %v2878 = vld [vmem:[#allocation7 + $0x10] sm:$0xff]
    %v2879 = vld [vmem:[#allocation7 + $0x18] sm:$0xff]
    %v2881 = vsel %vm131, %v2874, 0
    %v2884 = vsel %vm131, %v2875, 0
    %2886 = vmatprep.subr.mxu0 0.0
    %2887 = vmatpush1.msra.mxu0 %v2876
    %2888 = vmatprep.subr.mxu0 0.0
    %2889 = vmatpush1.msra.mxu0 %v2877
    %2890 = vmatprep.subr.mxu0 0.0
    %2891 = vmatpush1.msra.mxu0 %v2878
    %2892 = vmatprep.subr.mxu0 0.0
    %2893 = vmatpush1.msra.mxu0 %v2879
    %2894 = vmatprep.subr.mxu0 0.0
    %2895 = vmatpush1.msra.mxu0 0.0
    %2896 = vmatprep.subr.mxu0 0.0
    %2897 = vmatpush1.msra.mxu0 0.0
    %2898 = vmatprep.subr.mxu0 0.0
    %2899 = vmatpush1.msra.mxu0 0.0
    %2900 = vmatprep.subr.mxu0 0.0
    %2901 = vmatpush1.msra.mxu0 0.0
    %2902 = vmatprep.subr.mxu0 0.0
    %2903 = vmatpush1.msra.mxu0 0.0
    %2904 = vmatprep.subr.mxu0 0.0
    %2905 = vmatpush1.msra.mxu0 0.0
    %2906 = vmatprep.subr.mxu0 0.0
    %2907 = vmatpush1.msra.mxu0 0.0
    %2908 = vmatprep.subr.mxu0 0.0
    %2909 = vmatpush1.msra.mxu0 0.0
    %2910 = vmatprep.subr.mxu0 0.0
    %2911 = vmatpush1.msra.mxu0 0.0
    %2912 = vmatprep.subr.mxu0 0.0
    %2913 = vmatpush1.msra.mxu0 0.0
    %2914 = vmatprep.subr.mxu0 0.0
    %2915 = vmatpush1.msra.mxu0 0.0
    %2916 = vmatprep.subr.mxu0 0.0
    %2917 = vmatpush1.msra.mxu0 0.0
    %2918 = vmatprep.subr.mxu0 0.0
    %2919 = vmatpush1.msra.mxu0 0.0
    %2920 = vmatprep.subr.mxu0 0.0
    %2921 = vmatpush1.msra.mxu0 0.0
    %2922 = vmatprep.subr.mxu0 0.0
    %2923 = vmatpush1.msra.mxu0 0.0
    %2924 = vmatprep.subr.mxu0 0.0
    %2925 = vmatpush1.msra.mxu0 0.0
    %2926 = vmatprep.subr.mxu0 0.0
    %2927 = vmatpush1.msra.mxu0 0.0
    %2928 = vmatprep.subr.mxu0 0.0
    %2929 = vmatpush1.msra.mxu0 0.0
    %2930 = vmatprep.subr.mxu0 0.0
    %2931 = vmatpush1.msra.mxu0 0.0
    %2932 = vmatprep.subr.mxu0 0.0
    %2933 = vmatpush1.msra.mxu0 0.0
    %2934 = vmatprep.subr.mxu0 0.0
    %2935 = vmatpush1.msra.mxu0 0.0
    %2936 = vmatprep.subr.mxu0 0.0
    %2937 = vmatpush1.msra.mxu0 0.0
    %2938 = vmatprep.subr.mxu0 0.0
    %2939 = vmatpush1.msra.mxu0 0.0
    %2940 = vmatprep.subr.mxu0 0.0
    %2941 = vmatpush1.msra.mxu0 0.0
    %2942 = vmatprep.subr.mxu0 0.0
    %2943 = vmatpush1.msra.mxu0 0.0
    %2944 = vmatprep.subr.mxu0 0.0
    %2945 = vmatpush1.msra.mxu0 0.0
    %2946 = vmatprep.subr.mxu0 0.0
    %2947 = vmatpush1.msra.mxu0 0.0
    %2948 = vmatprep.subr.mxu0 0.0
    %2949 = vmatpush1.msra.mxu0 0.0
    %2950 = vmatprep.mubr.f32.mxu0 0.0
    %2951 = vmatmul.mubr.f32.gmra.mrb[0].mxu0 %v2881
    %v2952 = vpop.f32.mrb[0].mxu0
    %v2953 = vadd.f32 0.0, %v2952
    %v2954 = vpop.f32.mrb[0].mxu0
    %2955 = vmatprep.mubr.f32.mxu0 0.0
    %2956 = vmatmul.mubr.f32.gmra.mrb[0].mxu0 %v2884
    %v2957 = vpop.f32.mrb[0].mxu0
    %v2958 = vadd.f32 0.0, %v2957
    %v2959 = vpop.f32.mrb[0].mxu0
    %2960 = vdwg.mxu0
    %2963 = vrot.lane.b32.xlu0 %v2953, 120
    %v2964 = vpop.permute.xlu0 %2963
    %2965 = vrot.lane.b32.xlu0 %v2958, 120
    %v2966 = vpop.permute.xlu0 %2965
    %2969 = vrot.lane.b32.xlu0 %v2953, 112
    %v2970 = vpop.permute.xlu0 %2969
    %2971 = vrot.lane.b32.xlu0 %v2958, 112
    %v2972 = vpop.permute.xlu0 %2971
    %2975 = vrot.lane.b32.xlu0 %v2953, 104
    %v2976 = vpop.permute.xlu0 %2975
    %2977 = vrot.lane.b32.xlu0 %v2958, 104
    %v2978 = vpop.permute.xlu0 %2977
    %v2981 = vcombine.low %v2953, %v2970
    %v2982 = vcombine.high %v2953, %v2970
    %v2984 = vunpack.c.l.s4 1983009808
    %v2985 = vunpack.c.0.s8 %v2984
    %v2986 = vlaneseq
    %v2987 = vshrl.u32 %v2986, 7
    %v2988 = vsub.s32 %v2985, %v2987
    %v2989 = vrot.slane %v2981, %v2988
    %v2991 = vunpack.c.l.s4 1983009808
    %v2992 = vunpack.c.0.s8 %v2991
    %v2993 = vlaneseq
    %v2994 = vshrl.u32 %v2993, 7
    %v2995 = vsub.s32 %v2992, %v2994
    %v2996 = vrot.slane %v2982, %v2995
    %v2997 = vcombine.low %v2964, %v2976
    %v2998 = vcombine.high %v2964, %v2976
    %v3000 = vunpack.c.l.s4 1983009808
    %v3001 = vunpack.c.0.s8 %v3000
    %v3002 = vlaneseq
    %v3003 = vshrl.u32 %v3002, 7
    %v3004 = vsub.s32 %v3001, %v3003
    %v3005 = vrot.slane %v2997, %v3004
    %v3007 = vunpack.c.l.s4 1983009808
    %v3008 = vunpack.c.0.s8 %v3007
    %v3009 = vlaneseq
    %v3010 = vshrl.u32 %v3009, 7
    %v3011 = vsub.s32 %v3008, %v3010
    %v3012 = vrot.slane %v2998, %v3011
    %v3013 = vcombine.low %v2989, %v3005
    %v3014 = vcombine.high %v2989, %v3005
    %v3016 = vunpack.c.l.s4 1934713408
    %v3017 = vunpack.c.0.s8 %v3016
    %v3018 = vlaneseq
    %v3019 = vshrl.u32 %v3018, 7
    %v3020 = vsub.s32 %v3017, %v3019
    %v3021 = vrot.slane %v3013, %v3020
    %v3023 = vunpack.c.l.s4 1934713408
    %v3024 = vunpack.c.0.s8 %v3023
    %v3025 = vlaneseq
    %v3026 = vshrl.u32 %v3025, 7
    %v3027 = vsub.s32 %v3024, %v3026
    %v3028 = vrot.slane %v3014, %v3027
    %v3029 = vcombine.low %v2996, %v3012
    %v3030 = vcombine.high %v2996, %v3012
    %v3032 = vunpack.c.l.s4 1934713408
    %v3033 = vunpack.c.0.s8 %v3032
    %v3034 = vlaneseq
    %v3035 = vshrl.u32 %v3034, 7
    %v3036 = vsub.s32 %v3033, %v3035
    %v3037 = vrot.slane %v3029, %v3036
    %v3039 = vunpack.c.l.s4 1934713408
    %v3040 = vunpack.c.0.s8 %v3039
    %v3041 = vlaneseq
    %v3042 = vshrl.u32 %v3041, 7
    %v3043 = vsub.s32 %v3040, %v3042
    %v3044 = vrot.slane %v3030, %v3043
    %v3045 = vcombine.high %v3021, 0.0
    %v3046 = vcombine.high %v3028, 0.0
    %v3047 = vcombine.high %v3037, 0.0
    %v3048 = vcombine.high %v3044, 0.0
    %v3049 = vcombine.low %v2958, %v2972
    %v3050 = vcombine.high %v2958, %v2972
    %v3052 = vunpack.c.l.s4 1983009808
    %v3053 = vunpack.c.0.s8 %v3052
    %v3054 = vlaneseq
    %v3055 = vshrl.u32 %v3054, 7
    %v3056 = vsub.s32 %v3053, %v3055
    %v3057 = vrot.slane %v3049, %v3056
    %v3059 = vunpack.c.l.s4 1983009808
    %v3060 = vunpack.c.0.s8 %v3059
    %v3061 = vlaneseq
    %v3062 = vshrl.u32 %v3061, 7
    %v3063 = vsub.s32 %v3060, %v3062
    %v3064 = vrot.slane %v3050, %v3063
    %v3065 = vcombine.low %v2966, %v2978
    %v3066 = vcombine.high %v2966, %v2978
    %v3068 = vunpack.c.l.s4 1983009808
    %v3069 = vunpack.c.0.s8 %v3068
    %v3070 = vlaneseq
    %v3071 = vshrl.u32 %v3070, 7
    %v3072 = vsub.s32 %v3069, %v3071
    %v3073 = vrot.slane %v3065, %v3072
    %v3075 = vunpack.c.l.s4 1983009808
    %v3076 = vunpack.c.0.s8 %v3075
    %v3077 = vlaneseq
    %v3078 = vshrl.u32 %v3077, 7
    %v3079 = vsub.s32 %v3076, %v3078
    %v3080 = vrot.slane %v3066, %v3079
    %v3081 = vcombine.low %v3057, %v3073
    %v3082 = vcombine.high %v3057, %v3073
    %v3084 = vunpack.c.l.s4 1934713408
    %v3085 = vunpack.c.0.s8 %v3084
    %v3086 = vlaneseq
    %v3087 = vshrl.u32 %v3086, 7
    %v3088 = vsub.s32 %v3085, %v3087
    %v3089 = vrot.slane %v3081, %v3088
    %v3091 = vunpack.c.l.s4 1934713408
    %v3092 = vunpack.c.0.s8 %v3091
    %v3093 = vlaneseq
    %v3094 = vshrl.u32 %v3093, 7
    %v3095 = vsub.s32 %v3092, %v3094
    %v3096 = vrot.slane %v3082, %v3095
    %v3097 = vcombine.low %v3064, %v3080
    %v3098 = vcombine.high %v3064, %v3080
    %v3100 = vunpack.c.l.s4 1934713408
    %v3101 = vunpack.c.0.s8 %v3100
    %v3102 = vlaneseq
    %v3103 = vshrl.u32 %v3102, 7
    %v3104 = vsub.s32 %v3101, %v3103
    %v3105 = vrot.slane %v3097, %v3104
    %v3107 = vunpack.c.l.s4 1934713408
    %v3108 = vunpack.c.0.s8 %v3107
    %v3109 = vlaneseq
    %v3110 = vshrl.u32 %v3109, 7
    %v3111 = vsub.s32 %v3108, %v3110
    %v3112 = vrot.slane %v3098, %v3111
    %v3113 = vcombine.high %v3089, 0.0
    %v3114 = vcombine.high %v3096, 0.0
    %v3115 = vcombine.high %v3105, 0.0
    %v3116 = vcombine.high %v3112, 0.0
    %v3117 = vcombine.low %v3021, %v3028
    %v3119 = vunpack.c.l.s4 1983009808
    %v3120 = vunpack.c.0.s8 %v3119
    %v3121 = vlaneseq
    %v3122 = vshrl.u32 %v3121, 7
    %v3123 = vsub.s32 %v3120, %v3122
    %v3124 = vrot.slane %v3117, %v3123
    %v3125 = vcombine.low %v3045, %v3046
    %v3127 = vunpack.c.l.s4 1983009808
    %v3128 = vunpack.c.0.s8 %v3127
    %v3129 = vlaneseq
    %v3130 = vshrl.u32 %v3129, 7
    %v3131 = vsub.s32 %v3128, %v3130
    %v3132 = vrot.slane %v3125, %v3131
    %v3133 = vcombine.low %v3037, %v3044
    %v3135 = vunpack.c.l.s4 1983009808
    %v3136 = vunpack.c.0.s8 %v3135
    %v3137 = vlaneseq
    %v3138 = vshrl.u32 %v3137, 7
    %v3139 = vsub.s32 %v3136, %v3138
    %v3140 = vrot.slane %v3133, %v3139
    %v3141 = vcombine.low %v3047, %v3048
    %v3143 = vunpack.c.l.s4 1983009808
    %v3144 = vunpack.c.0.s8 %v3143
    %v3145 = vlaneseq
    %v3146 = vshrl.u32 %v3145, 7
    %v3147 = vsub.s32 %v3144, %v3146
    %v3148 = vrot.slane %v3141, %v3147
    %v3149 = vcombine.low %v3124, %v3132
    %v3150 = vcombine.high %v3124, %v3132
    %v3152 = vunpack.c.l.s4 1934713408
    %v3153 = vunpack.c.0.s8 %v3152
    %v3154 = vlaneseq
    %v3155 = vshrl.u32 %v3154, 7
    %v3156 = vsub.s32 %v3153, %v3155
    %v3157 = vrot.slane %v3149, %v3156
    %v3159 = vunpack.c.l.s4 1934713408
    %v3160 = vunpack.c.0.s8 %v3159
    %v3161 = vlaneseq
    %v3162 = vshrl.u32 %v3161, 7
    %v3163 = vsub.s32 %v3160, %v3162
    %v3164 = vrot.slane %v3150, %v3163
    %v3165 = vcombine.low %v3140, %v3148
    %v3166 = vcombine.high %v3140, %v3148
    %v3168 = vunpack.c.l.s4 1934713408
    %v3169 = vunpack.c.0.s8 %v3168
    %v3170 = vlaneseq
    %v3171 = vshrl.u32 %v3170, 7
    %v3172 = vsub.s32 %v3169, %v3171
    %v3173 = vrot.slane %v3165, %v3172
    %v3175 = vunpack.c.l.s4 1934713408
    %v3176 = vunpack.c.0.s8 %v3175
    %v3177 = vlaneseq
    %v3178 = vshrl.u32 %v3177, 7
    %v3179 = vsub.s32 %v3176, %v3178
    %v3180 = vrot.slane %v3166, %v3179
    %v3181 = vcombine.low %v3157, %v3173
    %v3182 = vcombine.high %v3157, %v3173
    %v3183 = vcombine.low %v3164, %v3180
    %v3184 = vcombine.high %v3164, %v3180
    %v3185 = vcombine.low %v3089, %v3096
    %v3187 = vunpack.c.l.s4 1983009808
    %v3188 = vunpack.c.0.s8 %v3187
    %v3189 = vlaneseq
    %v3190 = vshrl.u32 %v3189, 7
    %v3191 = vsub.s32 %v3188, %v3190
    %v3192 = vrot.slane %v3185, %v3191
    %v3193 = vcombine.low %v3113, %v3114
    %v3195 = vunpack.c.l.s4 1983009808
    %v3196 = vunpack.c.0.s8 %v3195
    %v3197 = vlaneseq
    %v3198 = vshrl.u32 %v3197, 7
    %v3199 = vsub.s32 %v3196, %v3198
    %v3200 = vrot.slane %v3193, %v3199
    %v3201 = vcombine.low %v3105, %v3112
    %v3203 = vunpack.c.l.s4 1983009808
    %v3204 = vunpack.c.0.s8 %v3203
    %v3205 = vlaneseq
    %v3206 = vshrl.u32 %v3205, 7
    %v3207 = vsub.s32 %v3204, %v3206
    %v3208 = vrot.slane %v3201, %v3207
    %v3209 = vcombine.low %v3115, %v3116
    %v3211 = vunpack.c.l.s4 1983009808
    %v3212 = vunpack.c.0.s8 %v3211
    %v3213 = vlaneseq
    %v3214 = vshrl.u32 %v3213, 7
    %v3215 = vsub.s32 %v3212, %v3214
    %v3216 = vrot.slane %v3209, %v3215
    %v3217 = vcombine.low %v3192, %v3200
    %v3218 = vcombine.high %v3192, %v3200
    %v3220 = vunpack.c.l.s4 1934713408
    %v3221 = vunpack.c.0.s8 %v3220
    %v3222 = vlaneseq
    %v3223 = vshrl.u32 %v3222, 7
    %v3224 = vsub.s32 %v3221, %v3223
    %v3225 = vrot.slane %v3217, %v3224
    %v3227 = vunpack.c.l.s4 1934713408
    %v3228 = vunpack.c.0.s8 %v3227
    %v3229 = vlaneseq
    %v3230 = vshrl.u32 %v3229, 7
    %v3231 = vsub.s32 %v3228, %v3230
    %v3232 = vrot.slane %v3218, %v3231
    %v3233 = vcombine.low %v3208, %v3216
    %v3234 = vcombine.high %v3208, %v3216
    %v3236 = vunpack.c.l.s4 1934713408
    %v3237 = vunpack.c.0.s8 %v3236
    %v3238 = vlaneseq
    %v3239 = vshrl.u32 %v3238, 7
    %v3240 = vsub.s32 %v3237, %v3239
    %v3241 = vrot.slane %v3233, %v3240
    %v3243 = vunpack.c.l.s4 1934713408
    %v3244 = vunpack.c.0.s8 %v3243
    %v3245 = vlaneseq
    %v3246 = vshrl.u32 %v3245, 7
    %v3247 = vsub.s32 %v3244, %v3246
    %v3248 = vrot.slane %v3234, %v3247
    %v3249 = vcombine.low %v3225, %v3241
    %v3250 = vcombine.high %v3225, %v3241
    %v3251 = vcombine.low %v3232, %v3248
    %v3252 = vcombine.high %v3232, %v3248
    %v3253 = vld [vmem:[#allocation8] sm:$0xff]
    %v3254 = vld [vmem:[#allocation8 + $0x8] sm:$0xff]
    %v3255 = vld [vmem:[#allocation8 + $0x10] sm:$0xff]
    %v3256 = vld [vmem:[#allocation8 + $0x18] sm:$0xff]
    %v3258 = vsel %vm131, %v126, 0
    %v3261 = vsel %vm131, %v127, 0
    %v3264 = vsel %vm131, %v128, 0
    %v3267 = vsel %vm131, %v129, 0
    %3269 = vmatprep.subr.mxu0 0.0
    %3270 = vmatpush1.msra.mxu0 %v3253
    %3271 = vmatprep.subr.mxu0 0.0
    %3272 = vmatpush1.msra.mxu0 %v3254
    %3273 = vmatprep.subr.mxu0 0.0
    %3274 = vmatpush1.msra.mxu0 %v3255
    %3275 = vmatprep.subr.mxu0 0.0
    %3276 = vmatpush1.msra.mxu0 %v3256
    %3277 = vmatprep.subr.mxu0 0.0
    %3278 = vmatpush1.msra.mxu0 0.0
    %3279 = vmatprep.subr.mxu0 0.0
    %3280 = vmatpush1.msra.mxu0 0.0
    %3281 = vmatprep.subr.mxu0 0.0
    %3282 = vmatpush1.msra.mxu0 0.0
    %3283 = vmatprep.subr.mxu0 0.0
    %3284 = vmatpush1.msra.mxu0 0.0
    %3285 = vmatprep.subr.mxu0 0.0
    %3286 = vmatpush1.msra.mxu0 0.0
    %3287 = vmatprep.subr.mxu0 0.0
    %3288 = vmatpush1.msra.mxu0 0.0
    %3289 = vmatprep.subr.mxu0 0.0
    %3290 = vmatpush1.msra.mxu0 0.0
    %3291 = vmatprep.subr.mxu0 0.0
    %3292 = vmatpush1.msra.mxu0 0.0
    %3293 = vmatprep.subr.mxu0 0.0
    %3294 = vmatpush1.msra.mxu0 0.0
    %3295 = vmatprep.subr.mxu0 0.0
    %3296 = vmatpush1.msra.mxu0 0.0
    %3297 = vmatprep.subr.mxu0 0.0
    %3298 = vmatpush1.msra.mxu0 0.0
    %3299 = vmatprep.subr.mxu0 0.0
    %3300 = vmatpush1.msra.mxu0 0.0
    %3301 = vmatprep.subr.mxu0 0.0
    %3302 = vmatpush1.msra.mxu0 0.0
    %3303 = vmatprep.subr.mxu0 0.0
    %3304 = vmatpush1.msra.mxu0 0.0
    %3305 = vmatprep.subr.mxu0 0.0
    %3306 = vmatpush1.msra.mxu0 0.0
    %3307 = vmatprep.subr.mxu0 0.0
    %3308 = vmatpush1.msra.mxu0 0.0
    %3309 = vmatprep.subr.mxu0 0.0
    %3310 = vmatpush1.msra.mxu0 0.0
    %3311 = vmatprep.subr.mxu0 0.0
    %3312 = vmatpush1.msra.mxu0 0.0
    %3313 = vmatprep.subr.mxu0 0.0
    %3314 = vmatpush1.msra.mxu0 0.0
    %3315 = vmatprep.subr.mxu0 0.0
    %3316 = vmatpush1.msra.mxu0 0.0
    %3317 = vmatprep.subr.mxu0 0.0
    %3318 = vmatpush1.msra.mxu0 0.0
    %3319 = vmatprep.subr.mxu0 0.0
    %3320 = vmatpush1.msra.mxu0 0.0
    %3321 = vmatprep.subr.mxu0 0.0
    %3322 = vmatpush1.msra.mxu0 0.0
    %3323 = vmatprep.subr.mxu0 0.0
    %3324 = vmatpush1.msra.mxu0 0.0
    %3325 = vmatprep.subr.mxu0 0.0
    %3326 = vmatpush1.msra.mxu0 0.0
    %3327 = vmatprep.subr.mxu0 0.0
    %3328 = vmatpush1.msra.mxu0 0.0
    %3329 = vmatprep.subr.mxu0 0.0
    %3330 = vmatpush1.msra.mxu0 0.0
    %3331 = vmatprep.subr.mxu0 0.0
    %3332 = vmatpush1.msra.mxu0 0.0
    %3333 = vmatprep.mubr.f32.mxu0 0.0
    %3334 = vmatmul.mubr.f32.gmra.mrb[0].mxu0 %v3258
    %v3335 = vpop.f32.mrb[0].mxu0
    %v3336 = vadd.f32 0.0, %v3335
    %v3337 = vpop.f32.mrb[0].mxu0
    %3338 = vmatprep.mubr.f32.mxu0 0.0
    %3339 = vmatmul.mubr.f32.gmra.mrb[0].mxu0 %v3261
    %v3340 = vpop.f32.mrb[0].mxu0
    %v3341 = vadd.f32 0.0, %v3340
    %v3342 = vpop.f32.mrb[0].mxu0
    %3343 = vmatprep.mubr.f32.mxu0 0.0
    %3344 = vmatmul.mubr.f32.gmra.mrb[0].mxu0 %v3264
    %v3345 = vpop.f32.mrb[0].mxu0
    %v3346 = vadd.f32 0.0, %v3345
    %v3347 = vpop.f32.mrb[0].mxu0
    %3348 = vmatprep.mubr.f32.mxu0 0.0
    %3349 = vmatmul.mubr.f32.gmra.mrb[0].mxu0 %v3267
    %v3350 = vpop.f32.mrb[0].mxu0
    %v3351 = vadd.f32 0.0, %v3350
    %v3352 = vpop.f32.mrb[0].mxu0
    %3353 = vdwg.mxu0
    %3358 = vrot.lane.b32.xlu0 %v3336, 120
    %v3359 = vpop.permute.xlu0 %3358
    %3360 = vrot.lane.b32.xlu0 %v3341, 120
    %v3361 = vpop.permute.xlu0 %3360
    %3362 = vrot.lane.b32.xlu0 %v3346, 120
    %v3363 = vpop.permute.xlu0 %3362
    %3364 = vrot.lane.b32.xlu0 %v3351, 120
    %v3365 = vpop.permute.xlu0 %3364
    %3370 = vrot.lane.b32.xlu0 %v3336, 112
    %v3371 = vpop.permute.xlu0 %3370
    %3372 = vrot.lane.b32.xlu0 %v3341, 112
    %v3373 = vpop.permute.xlu0 %3372
    %3374 = vrot.lane.b32.xlu0 %v3346, 112
    %v3375 = vpop.permute.xlu0 %3374
    %3376 = vrot.lane.b32.xlu0 %v3351, 112
    %v3377 = vpop.permute.xlu0 %3376
    %3382 = vrot.lane.b32.xlu0 %v3336, 104
    %v3383 = vpop.permute.xlu0 %3382
    %3384 = vrot.lane.b32.xlu0 %v3341, 104
    %v3385 = vpop.permute.xlu0 %3384
    %3386 = vrot.lane.b32.xlu0 %v3346, 104
    %v3387 = vpop.permute.xlu0 %3386
    %3388 = vrot.lane.b32.xlu0 %v3351, 104
    %v3389 = vpop.permute.xlu0 %3388
    %v3394 = vcombine.low %v3336, %v3371
    %v3395 = vcombine.high %v3336, %v3371
    %v3397 = vunpack.c.l.s4 1983009808
    %v3398 = vunpack.c.0.s8 %v3397
    %v3399 = vlaneseq
    %v3400 = vshrl.u32 %v3399, 7
    %v3401 = vsub.s32 %v3398, %v3400
    %v3402 = vrot.slane %v3394, %v3401
    %v3404 = vunpack.c.l.s4 1983009808
    %v3405 = vunpack.c.0.s8 %v3404
    %v3406 = vlaneseq
    %v3407 = vshrl.u32 %v3406, 7
    %v3408 = vsub.s32 %v3405, %v3407
    %v3409 = vrot.slane %v3395, %v3408
    %v3410 = vcombine.low %v3359, %v3383
    %v3411 = vcombine.high %v3359, %v3383
    %v3413 = vunpack.c.l.s4 1983009808
    %v3414 = vunpack.c.0.s8 %v3413
    %v3415 = vlaneseq
    %v3416 = vshrl.u32 %v3415, 7
    %v3417 = vsub.s32 %v3414, %v3416
    %v3418 = vrot.slane %v3410, %v3417
    %v3420 = vunpack.c.l.s4 1983009808
    %v3421 = vunpack.c.0.s8 %v3420
    %v3422 = vlaneseq
    %v3423 = vshrl.u32 %v3422, 7
    %v3424 = vsub.s32 %v3421, %v3423
    %v3425 = vrot.slane %v3411, %v3424
    %v3426 = vcombine.low %v3402, %v3418
    %v3427 = vcombine.high %v3402, %v3418
    %v3429 = vunpack.c.l.s4 1934713408
    %v3430 = vunpack.c.0.s8 %v3429
    %v3431 = vlaneseq
    %v3432 = vshrl.u32 %v3431, 7
    %v3433 = vsub.s32 %v3430, %v3432
    %v3434 = vrot.slane %v3426, %v3433
    %v3436 = vunpack.c.l.s4 1934713408
    %v3437 = vunpack.c.0.s8 %v3436
    %v3438 = vlaneseq
    %v3439 = vshrl.u32 %v3438, 7
    %v3440 = vsub.s32 %v3437, %v3439
    %v3441 = vrot.slane %v3427, %v3440
    %v3442 = vcombine.low %v3409, %v3425
    %v3443 = vcombine.high %v3409, %v3425
    %v3445 = vunpack.c.l.s4 1934713408
    %v3446 = vunpack.c.0.s8 %v3445
    %v3447 = vlaneseq
    %v3448 = vshrl.u32 %v3447, 7
    %v3449 = vsub.s32 %v3446, %v3448
    %v3450 = vrot.slane %v3442, %v3449
    %v3452 = vunpack.c.l.s4 1934713408
    %v3453 = vunpack.c.0.s8 %v3452
    %v3454 = vlaneseq
    %v3455 = vshrl.u32 %v3454, 7
    %v3456 = vsub.s32 %v3453, %v3455
    %v3457 = vrot.slane %v3443, %v3456
    %v3458 = vcombine.high %v3434, 0.0
    %v3459 = vcombine.high %v3441, 0.0
    %v3460 = vcombine.high %v3450, 0.0
    %v3461 = vcombine.high %v3457, 0.0
    %v3462 = vcombine.low %v3341, %v3373
    %v3463 = vcombine.high %v3341, %v3373
    %v3465 = vunpack.c.l.s4 1983009808
    %v3466 = vunpack.c.0.s8 %v3465
    %v3467 = vlaneseq
    %v3468 = vshrl.u32 %v3467, 7
    %v3469 = vsub.s32 %v3466, %v3468
    %v3470 = vrot.slane %v3462, %v3469
    %v3472 = vunpack.c.l.s4 1983009808
    %v3473 = vunpack.c.0.s8 %v3472
    %v3474 = vlaneseq
    %v3475 = vshrl.u32 %v3474, 7
    %v3476 = vsub.s32 %v3473, %v3475
    %v3477 = vrot.slane %v3463, %v3476
    %v3478 = vcombine.low %v3361, %v3385
    %v3479 = vcombine.high %v3361, %v3385
    %v3481 = vunpack.c.l.s4 1983009808
    %v3482 = vunpack.c.0.s8 %v3481
    %v3483 = vlaneseq
    %v3484 = vshrl.u32 %v3483, 7
    %v3485 = vsub.s32 %v3482, %v3484
    %v3486 = vrot.slane %v3478, %v3485
    %v3488 = vunpack.c.l.s4 1983009808
    %v3489 = vunpack.c.0.s8 %v3488
    %v3490 = vlaneseq
    %v3491 = vshrl.u32 %v3490, 7
    %v3492 = vsub.s32 %v3489, %v3491
    %v3493 = vrot.slane %v3479, %v3492
    %v3494 = vcombine.low %v3470, %v3486
    %v3495 = vcombine.high %v3470, %v3486
    %v3497 = vunpack.c.l.s4 1934713408
    %v3498 = vunpack.c.0.s8 %v3497
    %v3499 = vlaneseq
    %v3500 = vshrl.u32 %v3499, 7
    %v3501 = vsub.s32 %v3498, %v3500
    %v3502 = vrot.slane %v3494, %v3501
    %v3504 = vunpack.c.l.s4 1934713408
    %v3505 = vunpack.c.0.s8 %v3504
    %v3506 = vlaneseq
    %v3507 = vshrl.u32 %v3506, 7
    %v3508 = vsub.s32 %v3505, %v3507
    %v3509 = vrot.slane %v3495, %v3508
    %v3510 = vcombine.low %v3477, %v3493
    %v3511 = vcombine.high %v3477, %v3493
    %v3513 = vunpack.c.l.s4 1934713408
    %v3514 = vunpack.c.0.s8 %v3513
    %v3515 = vlaneseq
    %v3516 = vshrl.u32 %v3515, 7
    %v3517 = vsub.s32 %v3514, %v3516
    %v3518 = vrot.slane %v3510, %v3517
    %v3520 = vunpack.c.l.s4 1934713408
    %v3521 = vunpack.c.0.s8 %v3520
    %v3522 = vlaneseq
    %v3523 = vshrl.u32 %v3522, 7
    %v3524 = vsub.s32 %v3521, %v3523
    %v3525 = vrot.slane %v3511, %v3524
    %v3526 = vcombine.high %v3502, 0.0
    %v3527 = vcombine.high %v3509, 0.0
    %v3528 = vcombine.high %v3518, 0.0
    %v3529 = vcombine.high %v3525, 0.0
    %v3530 = vcombine.low %v3346, %v3375
    %v3531 = vcombine.high %v3346, %v3375
    %v3533 = vunpack.c.l.s4 1983009808
    %v3534 = vunpack.c.0.s8 %v3533
    %v3535 = vlaneseq
    %v3536 = vshrl.u32 %v3535, 7
    %v3537 = vsub.s32 %v3534, %v3536
    %v3538 = vrot.slane %v3530, %v3537
    %v3540 = vunpack.c.l.s4 1983009808
    %v3541 = vunpack.c.0.s8 %v3540
    %v3542 = vlaneseq
    %v3543 = vshrl.u32 %v3542, 7
    %v3544 = vsub.s32 %v3541, %v3543
    %v3545 = vrot.slane %v3531, %v3544
    %v3546 = vcombine.low %v3363, %v3387
    %v3547 = vcombine.high %v3363, %v3387
    %v3549 = vunpack.c.l.s4 1983009808
    %v3550 = vunpack.c.0.s8 %v3549
    %v3551 = vlaneseq
    %v3552 = vshrl.u32 %v3551, 7
    %v3553 = vsub.s32 %v3550, %v3552
    %v3554 = vrot.slane %v3546, %v3553
    %v3556 = vunpack.c.l.s4 1983009808
    %v3557 = vunpack.c.0.s8 %v3556
    %v3558 = vlaneseq
    %v3559 = vshrl.u32 %v3558, 7
    %v3560 = vsub.s32 %v3557, %v3559
    %v3561 = vrot.slane %v3547, %v3560
    %v3562 = vcombine.low %v3538, %v3554
    %v3563 = vcombine.high %v3538, %v3554
    %v3565 = vunpack.c.l.s4 1934713408
    %v3566 = vunpack.c.0.s8 %v3565
    %v3567 = vlaneseq
    %v3568 = vshrl.u32 %v3567, 7
    %v3569 = vsub.s32 %v3566, %v3568
    %v3570 = vrot.slane %v3562, %v3569
    %v3572 = vunpack.c.l.s4 1934713408
    %v3573 = vunpack.c.0.s8 %v3572
    %v3574 = vlaneseq
    %v3575 = vshrl.u32 %v3574, 7
    %v3576 = vsub.s32 %v3573, %v3575
    %v3577 = vrot.slane %v3563, %v3576
    %v3578 = vcombine.low %v3545, %v3561
    %v3579 = vcombine.high %v3545, %v3561
    %v3581 = vunpack.c.l.s4 1934713408
    %v3582 = vunpack.c.0.s8 %v3581
    %v3583 = vlaneseq
    %v3584 = vshrl.u32 %v3583, 7
    %v3585 = vsub.s32 %v3582, %v3584
    %v3586 = vrot.slane %v3578, %v3585
    %v3588 = vunpack.c.l.s4 1934713408
    %v3589 = vunpack.c.0.s8 %v3588
    %v3590 = vlaneseq
    %v3591 = vshrl.u32 %v3590, 7
    %v3592 = vsub.s32 %v3589, %v3591
    %v3593 = vrot.slane %v3579, %v3592
    %v3594 = vcombine.high %v3570, 0.0
    %v3595 = vcombine.high %v3577, 0.0
    %v3596 = vcombine.high %v3586, 0.0
    %v3597 = vcombine.high %v3593, 0.0
    %v3598 = vcombine.low %v3351, %v3377
    %v3599 = vcombine.high %v3351, %v3377
    %v3601 = vunpack.c.l.s4 1983009808
    %v3602 = vunpack.c.0.s8 %v3601
    %v3603 = vlaneseq
    %v3604 = vshrl.u32 %v3603, 7
    %v3605 = vsub.s32 %v3602, %v3604
    %v3606 = vrot.slane %v3598, %v3605
    %v3608 = vunpack.c.l.s4 1983009808
    %v3609 = vunpack.c.0.s8 %v3608
    %v3610 = vlaneseq
    %v3611 = vshrl.u32 %v3610, 7
    %v3612 = vsub.s32 %v3609, %v3611
    %v3613 = vrot.slane %v3599, %v3612
    %v3614 = vcombine.low %v3365, %v3389
    %v3615 = vcombine.high %v3365, %v3389
    %v3617 = vunpack.c.l.s4 1983009808
    %v3618 = vunpack.c.0.s8 %v3617
    %v3619 = vlaneseq
    %v3620 = vshrl.u32 %v3619, 7
    %v3621 = vsub.s32 %v3618, %v3620
    %v3622 = vrot.slane %v3614, %v3621
    %v3624 = vunpack.c.l.s4 1983009808
    %v3625 = vunpack.c.0.s8 %v3624
    %v3626 = vlaneseq
    %v3627 = vshrl.u32 %v3626, 7
    %v3628 = vsub.s32 %v3625, %v3627
    %v3629 = vrot.slane %v3615, %v3628
    %v3630 = vcombine.low %v3606, %v3622
    %v3631 = vcombine.high %v3606, %v3622
    %v3633 = vunpack.c.l.s4 1934713408
    %v3634 = vunpack.c.0.s8 %v3633
    %v3635 = vlaneseq
    %v3636 = vshrl.u32 %v3635, 7
    %v3637 = vsub.s32 %v3634, %v3636
    %v3638 = vrot.slane %v3630, %v3637
    %v3640 = vunpack.c.l.s4 1934713408
    %v3641 = vunpack.c.0.s8 %v3640
    %v3642 = vlaneseq
    %v3643 = vshrl.u32 %v3642, 7
    %v3644 = vsub.s32 %v3641, %v3643
    %v3645 = vrot.slane %v3631, %v3644
    %v3646 = vcombine.low %v3613, %v3629
    %v3647 = vcombine.high %v3613, %v3629
    %v3649 = vunpack.c.l.s4 1934713408
    %v3650 = vunpack.c.0.s8 %v3649
    %v3651 = vlaneseq
    %v3652 = vshrl.u32 %v3651, 7
    %v3653 = vsub.s32 %v3650, %v3652
    %v3654 = vrot.slane %v3646, %v3653
    %v3656 = vunpack.c.l.s4 1934713408
    %v3657 = vunpack.c.0.s8 %v3656
    %v3658 = vlaneseq
    %v3659 = vshrl.u32 %v3658, 7
    %v3660 = vsub.s32 %v3657, %v3659
    %v3661 = vrot.slane %v3647, %v3660
    %v3662 = vcombine.high %v3638, 0.0
    %v3663 = vcombine.high %v3645, 0.0
    %v3664 = vcombine.high %v3654, 0.0
    %v3665 = vcombine.high %v3661, 0.0
    %v3666 = vcombine.low %v3434, %v3441
    %v3668 = vunpack.c.l.s4 1983009808
    %v3669 = vunpack.c.0.s8 %v3668
    %v3670 = vlaneseq
    %v3671 = vshrl.u32 %v3670, 7
    %v3672 = vsub.s32 %v3669, %v3671
    %v3673 = vrot.slane %v3666, %v3672
    %v3674 = vcombine.low %v3458, %v3459
    %v3676 = vunpack.c.l.s4 1983009808
    %v3677 = vunpack.c.0.s8 %v3676
    %v3678 = vlaneseq
    %v3679 = vshrl.u32 %v3678, 7
    %v3680 = vsub.s32 %v3677, %v3679
    %v3681 = vrot.slane %v3674, %v3680
    %v3682 = vcombine.low %v3450, %v3457
    %v3684 = vunpack.c.l.s4 1983009808
    %v3685 = vunpack.c.0.s8 %v3684
    %v3686 = vlaneseq
    %v3687 = vshrl.u32 %v3686, 7
    %v3688 = vsub.s32 %v3685, %v3687
    %v3689 = vrot.slane %v3682, %v3688
    %v3690 = vcombine.low %v3460, %v3461
    %v3692 = vunpack.c.l.s4 1983009808
    %v3693 = vunpack.c.0.s8 %v3692
    %v3694 = vlaneseq
    %v3695 = vshrl.u32 %v3694, 7
    %v3696 = vsub.s32 %v3693, %v3695
    %v3697 = vrot.slane %v3690, %v3696
    %v3698 = vcombine.low %v3673, %v3681
    %v3699 = vcombine.high %v3673, %v3681
    %v3701 = vunpack.c.l.s4 1934713408
    %v3702 = vunpack.c.0.s8 %v3701
    %v3703 = vlaneseq
    %v3704 = vshrl.u32 %v3703, 7
    %v3705 = vsub.s32 %v3702, %v3704
    %v3706 = vrot.slane %v3698, %v3705
    %v3708 = vunpack.c.l.s4 1934713408
    %v3709 = vunpack.c.0.s8 %v3708
    %v3710 = vlaneseq
    %v3711 = vshrl.u32 %v3710, 7
    %v3712 = vsub.s32 %v3709, %v3711
    %v3713 = vrot.slane %v3699, %v3712
    %v3714 = vcombine.low %v3689, %v3697
    %v3715 = vcombine.high %v3689, %v3697
    %v3717 = vunpack.c.l.s4 1934713408
    %v3718 = vunpack.c.0.s8 %v3717
    %v3719 = vlaneseq
    %v3720 = vshrl.u32 %v3719, 7
    %v3721 = vsub.s32 %v3718, %v3720
    %v3722 = vrot.slane %v3714, %v3721
    %v3724 = vunpack.c.l.s4 1934713408
    %v3725 = vunpack.c.0.s8 %v3724
    %v3726 = vlaneseq
    %v3727 = vshrl.u32 %v3726, 7
    %v3728 = vsub.s32 %v3725, %v3727
    %v3729 = vrot.slane %v3715, %v3728
    %v3730 = vcombine.low %v3706, %v3722
    %v3731 = vcombine.high %v3706, %v3722
    %v3732 = vcombine.low %v3713, %v3729
    %v3733 = vcombine.high %v3713, %v3729
    %v3734 = vcombine.low %v3502, %v3509
    %v3736 = vunpack.c.l.s4 1983009808
    %v3737 = vunpack.c.0.s8 %v3736
    %v3738 = vlaneseq
    %v3739 = vshrl.u32 %v3738, 7
    %v3740 = vsub.s32 %v3737, %v3739
    %v3741 = vrot.slane %v3734, %v3740
    %v3742 = vcombine.low %v3526, %v3527
    %v3744 = vunpack.c.l.s4 1983009808
    %v3745 = vunpack.c.0.s8 %v3744
    %v3746 = vlaneseq
    %v3747 = vshrl.u32 %v3746, 7
    %v3748 = vsub.s32 %v3745, %v3747
    %v3749 = vrot.slane %v3742, %v3748
    %v3750 = vcombine.low %v3518, %v3525
    %v3752 = vunpack.c.l.s4 1983009808
    %v3753 = vunpack.c.0.s8 %v3752
    %v3754 = vlaneseq
    %v3755 = vshrl.u32 %v3754, 7
    %v3756 = vsub.s32 %v3753, %v3755
    %v3757 = vrot.slane %v3750, %v3756
    %v3758 = vcombine.low %v3528, %v3529
    %v3760 = vunpack.c.l.s4 1983009808
    %v3761 = vunpack.c.0.s8 %v3760
    %v3762 = vlaneseq
    %v3763 = vshrl.u32 %v3762, 7
    %v3764 = vsub.s32 %v3761, %v3763
    %v3765 = vrot.slane %v3758, %v3764
    %v3766 = vcombine.low %v3741, %v3749
    %v3767 = vcombine.high %v3741, %v3749
    %v3769 = vunpack.c.l.s4 1934713408
    %v3770 = vunpack.c.0.s8 %v3769
    %v3771 = vlaneseq
    %v3772 = vshrl.u32 %v3771, 7
    %v3773 = vsub.s32 %v3770, %v3772
    %v3774 = vrot.slane %v3766, %v3773
    %v3776 = vunpack.c.l.s4 1934713408
    %v3777 = vunpack.c.0.s8 %v3776
    %v3778 = vlaneseq
    %v3779 = vshrl.u32 %v3778, 7
    %v3780 = vsub.s32 %v3777, %v3779
    %v3781 = vrot.slane %v3767, %v3780
    %v3782 = vcombine.low %v3757, %v3765
    %v3783 = vcombine.high %v3757, %v3765
    %v3785 = vunpack.c.l.s4 1934713408
    %v3786 = vunpack.c.0.s8 %v3785
    %v3787 = vlaneseq
    %v3788 = vshrl.u32 %v3787, 7
    %v3789 = vsub.s32 %v3786, %v3788
    %v3790 = vrot.slane %v3782, %v3789
    %v3792 = vunpack.c.l.s4 1934713408
    %v3793 = vunpack.c.0.s8 %v3792
    %v3794 = vlaneseq
    %v3795 = vshrl.u32 %v3794, 7
    %v3796 = vsub.s32 %v3793, %v3795
    %v3797 = vrot.slane %v3783, %v3796
    %v3798 = vcombine.low %v3774, %v3790
    %v3799 = vcombine.high %v3774, %v3790
    %v3800 = vcombine.low %v3781, %v3797
    %v3801 = vcombine.high %v3781, %v3797
    %v3802 = vcombine.low %v3570, %v3577
    %v3804 = vunpack.c.l.s4 1983009808
    %v3805 = vunpack.c.0.s8 %v3804
    %v3806 = vlaneseq
    %v3807 = vshrl.u32 %v3806, 7
    %v3808 = vsub.s32 %v3805, %v3807
    %v3809 = vrot.slane %v3802, %v3808
    %v3810 = vcombine.low %v3594, %v3595
    %v3812 = vunpack.c.l.s4 1983009808
    %v3813 = vunpack.c.0.s8 %v3812
    %v3814 = vlaneseq
    %v3815 = vshrl.u32 %v3814, 7
    %v3816 = vsub.s32 %v3813, %v3815
    %v3817 = vrot.slane %v3810, %v3816
    %v3818 = vcombine.low %v3586, %v3593
    %v3820 = vunpack.c.l.s4 1983009808
    %v3821 = vunpack.c.0.s8 %v3820
    %v3822 = vlaneseq
    %v3823 = vshrl.u32 %v3822, 7
    %v3824 = vsub.s32 %v3821, %v3823
    %v3825 = vrot.slane %v3818, %v3824
    %v3826 = vcombine.low %v3596, %v3597
    %v3828 = vunpack.c.l.s4 1983009808
    %v3829 = vunpack.c.0.s8 %v3828
    %v3830 = vlaneseq
    %v3831 = vshrl.u32 %v3830, 7
    %v3832 = vsub.s32 %v3829, %v3831
    %v3833 = vrot.slane %v3826, %v3832
    %v3834 = vcombine.low %v3809, %v3817
    %v3835 = vcombine.high %v3809, %v3817
    %v3837 = vunpack.c.l.s4 1934713408
    %v3838 = vunpack.c.0.s8 %v3837
    %v3839 = vlaneseq
    %v3840 = vshrl.u32 %v3839, 7
    %v3841 = vsub.s32 %v3838, %v3840
    %v3842 = vrot.slane %v3834, %v3841
    %v3844 = vunpack.c.l.s4 1934713408
    %v3845 = vunpack.c.0.s8 %v3844
    %v3846 = vlaneseq
    %v3847 = vshrl.u32 %v3846, 7
    %v3848 = vsub.s32 %v3845, %v3847
    %v3849 = vrot.slane %v3835, %v3848
    %v3850 = vcombine.low %v3825, %v3833
    %v3851 = vcombine.high %v3825, %v3833
    %v3853 = vunpack.c.l.s4 1934713408
    %v3854 = vunpack.c.0.s8 %v3853
    %v3855 = vlaneseq
    %v3856 = vshrl.u32 %v3855, 7
    %v3857 = vsub.s32 %v3854, %v3856
    %v3858 = vrot.slane %v3850, %v3857
    %v3860 = vunpack.c.l.s4 1934713408
    %v3861 = vunpack.c.0.s8 %v3860
    %v3862 = vlaneseq
    %v3863 = vshrl.u32 %v3862, 7
    %v3864 = vsub.s32 %v3861, %v3863
    %v3865 = vrot.slane %v3851, %v3864
    %v3866 = vcombine.low %v3842, %v3858
    %v3867 = vcombine.high %v3842, %v3858
    %v3868 = vcombine.low %v3849, %v3865
    %v3869 = vcombine.high %v3849, %v3865
    %v3870 = vcombine.low %v3638, %v3645
    %v3872 = vunpack.c.l.s4 1983009808
    %v3873 = vunpack.c.0.s8 %v3872
    %v3874 = vlaneseq
    %v3875 = vshrl.u32 %v3874, 7
    %v3876 = vsub.s32 %v3873, %v3875
    %v3877 = vrot.slane %v3870, %v3876
    %v3878 = vcombine.low %v3662, %v3663
    %v3880 = vunpack.c.l.s4 1983009808
    %v3881 = vunpack.c.0.s8 %v3880
    %v3882 = vlaneseq
    %v3883 = vshrl.u32 %v3882, 7
    %v3884 = vsub.s32 %v3881, %v3883
    %v3885 = vrot.slane %v3878, %v3884
    %v3886 = vcombine.low %v3654, %v3661
    %v3888 = vunpack.c.l.s4 1983009808
    %v3889 = vunpack.c.0.s8 %v3888
    %v3890 = vlaneseq
    %v3891 = vshrl.u32 %v3890, 7
    %v3892 = vsub.s32 %v3889, %v3891
    %v3893 = vrot.slane %v3886, %v3892
    %v3894 = vcombine.low %v3664, %v3665
    %v3896 = vunpack.c.l.s4 1983009808
    %v3897 = vunpack.c.0.s8 %v3896
    %v3898 = vlaneseq
    %v3899 = vshrl.u32 %v3898, 7
    %v3900 = vsub.s32 %v3897, %v3899
    %v3901 = vrot.slane %v3894, %v3900
    %v3902 = vcombine.low %v3877, %v3885
    %v3903 = vcombine.high %v3877, %v3885
    %v3905 = vunpack.c.l.s4 1934713408
    %v3906 = vunpack.c.0.s8 %v3905
    %v3907 = vlaneseq
    %v3908 = vshrl.u32 %v3907, 7
    %v3909 = vsub.s32 %v3906, %v3908
    %v3910 = vrot.slane %v3902, %v3909
    %v3912 = vunpack.c.l.s4 1934713408
    %v3913 = vunpack.c.0.s8 %v3912
    %v3914 = vlaneseq
    %v3915 = vshrl.u32 %v3914, 7
    %v3916 = vsub.s32 %v3913, %v3915
    %v3917 = vrot.slane %v3903, %v3916
    %v3918 = vcombine.low %v3893, %v3901
    %v3919 = vcombine.high %v3893, %v3901
    %v3921 = vunpack.c.l.s4 1934713408
    %v3922 = vunpack.c.0.s8 %v3921
    %v3923 = vlaneseq
    %v3924 = vshrl.u32 %v3923, 7
    %v3925 = vsub.s32 %v3922, %v3924
    %v3926 = vrot.slane %v3918, %v3925
    %v3928 = vunpack.c.l.s4 1934713408
    %v3929 = vunpack.c.0.s8 %v3928
    %v3930 = vlaneseq
    %v3931 = vshrl.u32 %v3930, 7
    %v3932 = vsub.s32 %v3929, %v3931
    %v3933 = vrot.slane %v3919, %v3932
    %v3934 = vcombine.low %v3910, %v3926
    %v3935 = vcombine.high %v3910, %v3926
    %v3936 = vcombine.low %v3917, %v3933
    %v3937 = vcombine.high %v3917, %v3933
    %3938 = vrot.lane.b32.xlu0 %v3336, 96
    %v3939 = vpop.permute.xlu0 %3938
    %3940 = vrot.lane.b32.xlu0 %v3341, 96
    %v3941 = vpop.permute.xlu0 %3940
    %3942 = vrot.lane.b32.xlu0 %v3346, 96
    %v3943 = vpop.permute.xlu0 %3942
    %3944 = vrot.lane.b32.xlu0 %v3351, 96
    %v3945 = vpop.permute.xlu0 %3944
    %3946 = vrot.lane.b32.xlu0 %v3359, 96
    %v3947 = vpop.permute.xlu0 %3946
    %3948 = vrot.lane.b32.xlu0 %v3361, 96
    %v3949 = vpop.permute.xlu0 %3948
    %3950 = vrot.lane.b32.xlu0 %v3363, 96
    %v3951 = vpop.permute.xlu0 %3950
    %3952 = vrot.lane.b32.xlu0 %v3365, 96
    %v3953 = vpop.permute.xlu0 %3952
    %3954 = vrot.lane.b32.xlu0 %v3371, 96
    %v3955 = vpop.permute.xlu0 %3954
    %3956 = vrot.lane.b32.xlu0 %v3373, 96
    %v3957 = vpop.permute.xlu0 %3956
    %3958 = vrot.lane.b32.xlu0 %v3375, 96
    %v3959 = vpop.permute.xlu0 %3958
    %3960 = vrot.lane.b32.xlu0 %v3377, 96
    %v3961 = vpop.permute.xlu0 %3960
    %3962 = vrot.lane.b32.xlu0 %v3383, 96
    %v3963 = vpop.permute.xlu0 %3962
    %3964 = vrot.lane.b32.xlu0 %v3385, 96
    %v3965 = vpop.permute.xlu0 %3964
    %3966 = vrot.lane.b32.xlu0 %v3387, 96
    %v3967 = vpop.permute.xlu0 %3966
    %3968 = vrot.lane.b32.xlu0 %v3389, 96
    %v3969 = vpop.permute.xlu0 %3968
    %v3986 = vcombine.low %v3939, %v3955
    %v3987 = vcombine.high %v3939, %v3955
    %v3989 = vunpack.c.l.s4 1983009808
    %v3990 = vunpack.c.0.s8 %v3989
    %v3991 = vlaneseq
    %v3992 = vshrl.u32 %v3991, 7
    %v3993 = vsub.s32 %v3990, %v3992
    %v3994 = vrot.slane %v3986, %v3993
    %v3996 = vunpack.c.l.s4 1983009808
    %v3997 = vunpack.c.0.s8 %v3996
    %v3998 = vlaneseq
    %v3999 = vshrl.u32 %v3998, 7
    %v4000 = vsub.s32 %v3997, %v3999
    %v4001 = vrot.slane %v3987, %v4000
    %v4002 = vcombine.low %v3947, %v3963
    %v4003 = vcombine.high %v3947, %v3963
    %v4005 = vunpack.c.l.s4 1983009808
    %v4006 = vunpack.c.0.s8 %v4005
    %v4007 = vlaneseq
    %v4008 = vshrl.u32 %v4007, 7
    %v4009 = vsub.s32 %v4006, %v4008
    %v4010 = vrot.slane %v4002, %v4009
    %v4012 = vunpack.c.l.s4 1983009808
    %v4013 = vunpack.c.0.s8 %v4012
    %v4014 = vlaneseq
    %v4015 = vshrl.u32 %v4014, 7
    %v4016 = vsub.s32 %v4013, %v4015
    %v4017 = vrot.slane %v4003, %v4016
    %v4018 = vcombine.low %v3994, %v4010
    %v4019 = vcombine.high %v3994, %v4010
    %v4021 = vunpack.c.l.s4 1934713408
    %v4022 = vunpack.c.0.s8 %v4021
    %v4023 = vlaneseq
    %v4024 = vshrl.u32 %v4023, 7
    %v4025 = vsub.s32 %v4022, %v4024
    %v4026 = vrot.slane %v4018, %v4025
    %v4028 = vunpack.c.l.s4 1934713408
    %v4029 = vunpack.c.0.s8 %v4028
    %v4030 = vlaneseq
    %v4031 = vshrl.u32 %v4030, 7
    %v4032 = vsub.s32 %v4029, %v4031
    %v4033 = vrot.slane %v4019, %v4032
    %v4034 = vcombine.low %v4001, %v4017
    %v4035 = vcombine.high %v4001, %v4017
    %v4037 = vunpack.c.l.s4 1934713408
    %v4038 = vunpack.c.0.s8 %v4037
    %v4039 = vlaneseq
    %v4040 = vshrl.u32 %v4039, 7
    %v4041 = vsub.s32 %v4038, %v4040
    %v4042 = vrot.slane %v4034, %v4041
    %v4044 = vunpack.c.l.s4 1934713408
    %v4045 = vunpack.c.0.s8 %v4044
    %v4046 = vlaneseq
    %v4047 = vshrl.u32 %v4046, 7
    %v4048 = vsub.s32 %v4045, %v4047
    %v4049 = vrot.slane %v4035, %v4048
    %v4050 = vcombine.high %v4026, 0.0
    %v4051 = vcombine.high %v4033, 0.0
    %v4052 = vcombine.high %v4042, 0.0
    %v4053 = vcombine.high %v4049, 0.0
    %v4054 = vcombine.low %v3941, %v3957
    %v4055 = vcombine.high %v3941, %v3957
    %v4057 = vunpack.c.l.s4 1983009808
    %v4058 = vunpack.c.0.s8 %v4057
    %v4059 = vlaneseq
    %v4060 = vshrl.u32 %v4059, 7
    %v4061 = vsub.s32 %v4058, %v4060
    %v4062 = vrot.slane %v4054, %v4061
    %v4064 = vunpack.c.l.s4 1983009808
    %v4065 = vunpack.c.0.s8 %v4064
    %v4066 = vlaneseq
    %v4067 = vshrl.u32 %v4066, 7
    %v4068 = vsub.s32 %v4065, %v4067
    %v4069 = vrot.slane %v4055, %v4068
    %v4070 = vcombine.low %v3949, %v3965
    %v4071 = vcombine.high %v3949, %v3965
    %v4073 = vunpack.c.l.s4 1983009808
    %v4074 = vunpack.c.0.s8 %v4073
    %v4075 = vlaneseq
    %v4076 = vshrl.u32 %v4075, 7
    %v4077 = vsub.s32 %v4074, %v4076
    %v4078 = vrot.slane %v4070, %v4077
    %v4080 = vunpack.c.l.s4 1983009808
    %v4081 = vunpack.c.0.s8 %v4080
    %v4082 = vlaneseq
    %v4083 = vshrl.u32 %v4082, 7
    %v4084 = vsub.s32 %v4081, %v4083
    %v4085 = vrot.slane %v4071, %v4084
    %v4086 = vcombine.low %v4062, %v4078
    %v4087 = vcombine.high %v4062, %v4078
    %v4089 = vunpack.c.l.s4 1934713408
    %v4090 = vunpack.c.0.s8 %v4089
    %v4091 = vlaneseq
    %v4092 = vshrl.u32 %v4091, 7
    %v4093 = vsub.s32 %v4090, %v4092
    %v4094 = vrot.slane %v4086, %v4093
    %v4096 = vunpack.c.l.s4 1934713408
    %v4097 = vunpack.c.0.s8 %v4096
    %v4098 = vlaneseq
    %v4099 = vshrl.u32 %v4098, 7
    %v4100 = vsub.s32 %v4097, %v4099
    %v4101 = vrot.slane %v4087, %v4100
    %v4102 = vcombine.low %v4069, %v4085
    %v4103 = vcombine.high %v4069, %v4085
    %v4105 = vunpack.c.l.s4 1934713408
    %v4106 = vunpack.c.0.s8 %v4105
    %v4107 = vlaneseq
    %v4108 = vshrl.u32 %v4107, 7
    %v4109 = vsub.s32 %v4106, %v4108
    %v4110 = vrot.slane %v4102, %v4109
    %v4112 = vunpack.c.l.s4 1934713408
    %v4113 = vunpack.c.0.s8 %v4112
    %v4114 = vlaneseq
    %v4115 = vshrl.u32 %v4114, 7
    %v4116 = vsub.s32 %v4113, %v4115
    %v4117 = vrot.slane %v4103, %v4116
    %v4118 = vcombine.high %v4094, 0.0
    %v4119 = vcombine.high %v4101, 0.0
    %v4120 = vcombine.high %v4110, 0.0
    %v4121 = vcombine.high %v4117, 0.0
    %v4122 = vcombine.low %v3943, %v3959
    %v4123 = vcombine.high %v3943, %v3959
    %v4125 = vunpack.c.l.s4 1983009808
    %v4126 = vunpack.c.0.s8 %v4125
    %v4127 = vlaneseq
    %v4128 = vshrl.u32 %v4127, 7
    %v4129 = vsub.s32 %v4126, %v4128
    %v4130 = vrot.slane %v4122, %v4129
    %v4132 = vunpack.c.l.s4 1983009808
    %v4133 = vunpack.c.0.s8 %v4132
    %v4134 = vlaneseq
    %v4135 = vshrl.u32 %v4134, 7
    %v4136 = vsub.s32 %v4133, %v4135
    %v4137 = vrot.slane %v4123, %v4136
    %v4138 = vcombine.low %v3951, %v3967
    %v4139 = vcombine.high %v3951, %v3967
    %v4141 = vunpack.c.l.s4 1983009808
    %v4142 = vunpack.c.0.s8 %v4141
    %v4143 = vlaneseq
    %v4144 = vshrl.u32 %v4143, 7
    %v4145 = vsub.s32 %v4142, %v4144
    %v4146 = vrot.slane %v4138, %v4145
    %v4148 = vunpack.c.l.s4 1983009808
    %v4149 = vunpack.c.0.s8 %v4148
    %v4150 = vlaneseq
    %v4151 = vshrl.u32 %v4150, 7
    %v4152 = vsub.s32 %v4149, %v4151
    %v4153 = vrot.slane %v4139, %v4152
    %v4154 = vcombine.low %v4130, %v4146
    %v4155 = vcombine.high %v4130, %v4146
    %v4157 = vunpack.c.l.s4 1934713408
    %v4158 = vunpack.c.0.s8 %v4157
    %v4159 = vlaneseq
    %v4160 = vshrl.u32 %v4159, 7
    %v4161 = vsub.s32 %v4158, %v4160
    %v4162 = vrot.slane %v4154, %v4161
    %v4164 = vunpack.c.l.s4 1934713408
    %v4165 = vunpack.c.0.s8 %v4164
    %v4166 = vlaneseq
    %v4167 = vshrl.u32 %v4166, 7
    %v4168 = vsub.s32 %v4165, %v4167
    %v4169 = vrot.slane %v4155, %v4168
    %v4170 = vcombine.low %v4137, %v4153
    %v4171 = vcombine.high %v4137, %v4153
    %v4173 = vunpack.c.l.s4 1934713408
    %v4174 = vunpack.c.0.s8 %v4173
    %v4175 = vlaneseq
    %v4176 = vshrl.u32 %v4175, 7
    %v4177 = vsub.s32 %v4174, %v4176
    %v4178 = vrot.slane %v4170, %v4177
    %v4180 = vunpack.c.l.s4 1934713408
    %v4181 = vunpack.c.0.s8 %v4180
    %v4182 = vlaneseq
    %v4183 = vshrl.u32 %v4182, 7
    %v4184 = vsub.s32 %v4181, %v4183
    %v4185 = vrot.slane %v4171, %v4184
    %v4186 = vcombine.high %v4162, 0.0
    %v4187 = vcombine.high %v4169, 0.0
    %v4188 = vcombine.high %v4178, 0.0
    %v4189 = vcombine.high %v4185, 0.0
    %v4190 = vcombine.low %v3945, %v3961
    %v4191 = vcombine.high %v3945, %v3961
    %v4193 = vunpack.c.l.s4 1983009808
    %v4194 = vunpack.c.0.s8 %v4193
    %v4195 = vlaneseq
    %v4196 = vshrl.u32 %v4195, 7
    %v4197 = vsub.s32 %v4194, %v4196
    %v4198 = vrot.slane %v4190, %v4197
    %v4200 = vunpack.c.l.s4 1983009808
    %v4201 = vunpack.c.0.s8 %v4200
    %v4202 = vlaneseq
    %v4203 = vshrl.u32 %v4202, 7
    %v4204 = vsub.s32 %v4201, %v4203
    %v4205 = vrot.slane %v4191, %v4204
    %v4206 = vcombine.low %v3953, %v3969
    %v4207 = vcombine.high %v3953, %v3969
    %v4209 = vunpack.c.l.s4 1983009808
    %v4210 = vunpack.c.0.s8 %v4209
    %v4211 = vlaneseq
    %v4212 = vshrl.u32 %v4211, 7
    %v4213 = vsub.s32 %v4210, %v4212
    %v4214 = vrot.slane %v4206, %v4213
    %v4216 = vunpack.c.l.s4 1983009808
    %v4217 = vunpack.c.0.s8 %v4216
    %v4218 = vlaneseq
    %v4219 = vshrl.u32 %v4218, 7
    %v4220 = vsub.s32 %v4217, %v4219
    %v4221 = vrot.slane %v4207, %v4220
    %v4222 = vcombine.low %v4198, %v4214
    %v4223 = vcombine.high %v4198, %v4214
    %v4225 = vunpack.c.l.s4 1934713408
    %v4226 = vunpack.c.0.s8 %v4225
    %v4227 = vlaneseq
    %v4228 = vshrl.u32 %v4227, 7
    %v4229 = vsub.s32 %v4226, %v4228
    %v4230 = vrot.slane %v4222, %v4229
    %v4232 = vunpack.c.l.s4 1934713408
    %v4233 = vunpack.c.0.s8 %v4232
    %v4234 = vlaneseq
    %v4235 = vshrl.u32 %v4234, 7
    %v4236 = vsub.s32 %v4233, %v4235
    %v4237 = vrot.slane %v4223, %v4236
    %v4238 = vcombine.low %v4205, %v4221
    %v4239 = vcombine.high %v4205, %v4221
    %v4241 = vunpack.c.l.s4 1934713408
    %v4242 = vunpack.c.0.s8 %v4241
    %v4243 = vlaneseq
    %v4244 = vshrl.u32 %v4243, 7
    %v4245 = vsub.s32 %v4242, %v4244
    %v4246 = vrot.slane %v4238, %v4245
    %v4248 = vunpack.c.l.s4 1934713408
    %v4249 = vunpack.c.0.s8 %v4248
    %v4250 = vlaneseq
    %v4251 = vshrl.u32 %v4250, 7
    %v4252 = vsub.s32 %v4249, %v4251
    %v4253 = vrot.slane %v4239, %v4252
    %v4254 = vcombine.high %v4230, 0.0
    %v4255 = vcombine.high %v4237, 0.0
    %v4256 = vcombine.high %v4246, 0.0
    %v4257 = vcombine.high %v4253, 0.0
    %v4258 = vcombine.low %v4026, %v4033
    %v4260 = vunpack.c.l.s4 1983009808
    %v4261 = vunpack.c.0.s8 %v4260
    %v4262 = vlaneseq
    %v4263 = vshrl.u32 %v4262, 7
    %v4264 = vsub.s32 %v4261, %v4263
    %v4265 = vrot.slane %v4258, %v4264
    %v4266 = vcombine.low %v4050, %v4051
    %v4268 = vunpack.c.l.s4 1983009808
    %v4269 = vunpack.c.0.s8 %v4268
    %v4270 = vlaneseq
    %v4271 = vshrl.u32 %v4270, 7
    %v4272 = vsub.s32 %v4269, %v4271
    %v4273 = vrot.slane %v4266, %v4272
    %v4274 = vcombine.low %v4042, %v4049
    %v4276 = vunpack.c.l.s4 1983009808
    %v4277 = vunpack.c.0.s8 %v4276
    %v4278 = vlaneseq
    %v4279 = vshrl.u32 %v4278, 7
    %v4280 = vsub.s32 %v4277, %v4279
    %v4281 = vrot.slane %v4274, %v4280
    %v4282 = vcombine.low %v4052, %v4053
    %v4284 = vunpack.c.l.s4 1983009808
    %v4285 = vunpack.c.0.s8 %v4284
    %v4286 = vlaneseq
    %v4287 = vshrl.u32 %v4286, 7
    %v4288 = vsub.s32 %v4285, %v4287
    %v4289 = vrot.slane %v4282, %v4288
    %v4290 = vcombine.low %v4265, %v4273
    %v4291 = vcombine.high %v4265, %v4273
    %v4293 = vunpack.c.l.s4 1934713408
    %v4294 = vunpack.c.0.s8 %v4293
    %v4295 = vlaneseq
    %v4296 = vshrl.u32 %v4295, 7
    %v4297 = vsub.s32 %v4294, %v4296
    %v4298 = vrot.slane %v4290, %v4297
    %v4300 = vunpack.c.l.s4 1934713408
    %v4301 = vunpack.c.0.s8 %v4300
    %v4302 = vlaneseq
    %v4303 = vshrl.u32 %v4302, 7
    %v4304 = vsub.s32 %v4301, %v4303
    %v4305 = vrot.slane %v4291, %v4304
    %v4306 = vcombine.low %v4281, %v4289
    %v4307 = vcombine.high %v4281, %v4289
    %v4309 = vunpack.c.l.s4 1934713408
    %v4310 = vunpack.c.0.s8 %v4309
    %v4311 = vlaneseq
    %v4312 = vshrl.u32 %v4311, 7
    %v4313 = vsub.s32 %v4310, %v4312
    %v4314 = vrot.slane %v4306, %v4313
    %v4316 = vunpack.c.l.s4 1934713408
    %v4317 = vunpack.c.0.s8 %v4316
    %v4318 = vlaneseq
    %v4319 = vshrl.u32 %v4318, 7
    %v4320 = vsub.s32 %v4317, %v4319
    %v4321 = vrot.slane %v4307, %v4320
    %v4322 = vcombine.low %v4298, %v4314
    %v4323 = vcombine.high %v4298, %v4314
    %v4324 = vcombine.low %v4305, %v4321
    %v4325 = vcombine.high %v4305, %v4321
    %v4326 = vcombine.low %v4094, %v4101
    %v4328 = vunpack.c.l.s4 1983009808
    %v4329 = vunpack.c.0.s8 %v4328
    %v4330 = vlaneseq
    %v4331 = vshrl.u32 %v4330, 7
    %v4332 = vsub.s32 %v4329, %v4331
    %v4333 = vrot.slane %v4326, %v4332
    %v4334 = vcombine.low %v4118, %v4119
    %v4336 = vunpack.c.l.s4 1983009808
    %v4337 = vunpack.c.0.s8 %v4336
    %v4338 = vlaneseq
    %v4339 = vshrl.u32 %v4338, 7
    %v4340 = vsub.s32 %v4337, %v4339
    %v4341 = vrot.slane %v4334, %v4340
    %v4342 = vcombine.low %v4110, %v4117
    %v4344 = vunpack.c.l.s4 1983009808
    %v4345 = vunpack.c.0.s8 %v4344
    %v4346 = vlaneseq
    %v4347 = vshrl.u32 %v4346, 7
    %v4348 = vsub.s32 %v4345, %v4347
    %v4349 = vrot.slane %v4342, %v4348
    %v4350 = vcombine.low %v4120, %v4121
    %v4352 = vunpack.c.l.s4 1983009808
    %v4353 = vunpack.c.0.s8 %v4352
    %v4354 = vlaneseq
    %v4355 = vshrl.u32 %v4354, 7
    %v4356 = vsub.s32 %v4353, %v4355
    %v4357 = vrot.slane %v4350, %v4356
    %v4358 = vcombine.low %v4333, %v4341
    %v4359 = vcombine.high %v4333, %v4341
    %v4361 = vunpack.c.l.s4 1934713408
    %v4362 = vunpack.c.0.s8 %v4361
    %v4363 = vlaneseq
    %v4364 = vshrl.u32 %v4363, 7
    %v4365 = vsub.s32 %v4362, %v4364
    %v4366 = vrot.slane %v4358, %v4365
    %v4368 = vunpack.c.l.s4 1934713408
    %v4369 = vunpack.c.0.s8 %v4368
    %v4370 = vlaneseq
    %v4371 = vshrl.u32 %v4370, 7
    %v4372 = vsub.s32 %v4369, %v4371
    %v4373 = vrot.slane %v4359, %v4372
    %v4374 = vcombine.low %v4349, %v4357
    %v4375 = vcombine.high %v4349, %v4357
    %v4377 = vunpack.c.l.s4 1934713408
    %v4378 = vunpack.c.0.s8 %v4377
    %v4379 = vlaneseq
    %v4380 = vshrl.u32 %v4379, 7
    %v4381 = vsub.s32 %v4378, %v4380
    %v4382 = vrot.slane %v4374, %v4381
    %v4384 = vunpack.c.l.s4 1934713408
    %v4385 = vunpack.c.0.s8 %v4384
    %v4386 = vlaneseq
    %v4387 = vshrl.u32 %v4386, 7
    %v4388 = vsub.s32 %v4385, %v4387
    %v4389 = vrot.slane %v4375, %v4388
    %v4390 = vcombine.low %v4366, %v4382
    %v4391 = vcombine.high %v4366, %v4382
    %v4392 = vcombine.low %v4373, %v4389
    %v4393 = vcombine.high %v4373, %v4389
    %v4394 = vcombine.low %v4162, %v4169
    %v4396 = vunpack.c.l.s4 1983009808
    %v4397 = vunpack.c.0.s8 %v4396
    %v4398 = vlaneseq
    %v4399 = vshrl.u32 %v4398, 7
    %v4400 = vsub.s32 %v4397, %v4399
    %v4401 = vrot.slane %v4394, %v4400
    %v4402 = vcombine.low %v4186, %v4187
    %v4404 = vunpack.c.l.s4 1983009808
    %v4405 = vunpack.c.0.s8 %v4404
    %v4406 = vlaneseq
    %v4407 = vshrl.u32 %v4406, 7
    %v4408 = vsub.s32 %v4405, %v4407
    %v4409 = vrot.slane %v4402, %v4408
    %v4410 = vcombine.low %v4178, %v4185
    %v4412 = vunpack.c.l.s4 1983009808
    %v4413 = vunpack.c.0.s8 %v4412
    %v4414 = vlaneseq
    %v4415 = vshrl.u32 %v4414, 7
    %v4416 = vsub.s32 %v4413, %v4415
    %v4417 = vrot.slane %v4410, %v4416
    %v4418 = vcombine.low %v4188, %v4189
    %v4420 = vunpack.c.l.s4 1983009808
    %v4421 = vunpack.c.0.s8 %v4420
    %v4422 = vlaneseq
    %v4423 = vshrl.u32 %v4422, 7
    %v4424 = vsub.s32 %v4421, %v4423
    %v4425 = vrot.slane %v4418, %v4424
    %v4426 = vcombine.low %v4401, %v4409
    %v4427 = vcombine.high %v4401, %v4409
    %v4429 = vunpack.c.l.s4 1934713408
    %v4430 = vunpack.c.0.s8 %v4429
    %v4431 = vlaneseq
    %v4432 = vshrl.u32 %v4431, 7
    %v4433 = vsub.s32 %v4430, %v4432
    %v4434 = vrot.slane %v4426, %v4433
    %v4436 = vunpack.c.l.s4 1934713408
    %v4437 = vunpack.c.0.s8 %v4436
    %v4438 = vlaneseq
    %v4439 = vshrl.u32 %v4438, 7
    %v4440 = vsub.s32 %v4437, %v4439
    %v4441 = vrot.slane %v4427, %v4440
    %v4442 = vcombine.low %v4417, %v4425
    %v4443 = vcombine.high %v4417, %v4425
    %v4445 = vunpack.c.l.s4 1934713408
    %v4446 = vunpack.c.0.s8 %v4445
    %v4447 = vlaneseq
    %v4448 = vshrl.u32 %v4447, 7
    %v4449 = vsub.s32 %v4446, %v4448
    %v4450 = vrot.slane %v4442, %v4449
    %v4452 = vunpack.c.l.s4 1934713408
    %v4453 = vunpack.c.0.s8 %v4452
    %v4454 = vlaneseq
    %v4455 = vshrl.u32 %v4454, 7
    %v4456 = vsub.s32 %v4453, %v4455
    %v4457 = vrot.slane %v4443, %v4456
    %v4458 = vcombine.low %v4434, %v4450
    %v4459 = vcombine.high %v4434, %v4450
    %v4460 = vcombine.low %v4441, %v4457
    %v4461 = vcombine.high %v4441, %v4457
    %v4462 = vcombine.low %v4230, %v4237
    %v4464 = vunpack.c.l.s4 1983009808
    %v4465 = vunpack.c.0.s8 %v4464
    %v4466 = vlaneseq
    %v4467 = vshrl.u32 %v4466, 7
    %v4468 = vsub.s32 %v4465, %v4467
    %v4469 = vrot.slane %v4462, %v4468
    %v4470 = vcombine.low %v4254, %v4255
    %v4472 = vunpack.c.l.s4 1983009808
    %v4473 = vunpack.c.0.s8 %v4472
    %v4474 = vlaneseq
    %v4475 = vshrl.u32 %v4474, 7
    %v4476 = vsub.s32 %v4473, %v4475
    %v4477 = vrot.slane %v4470, %v4476
    %v4478 = vcombine.low %v4246, %v4253
    %v4480 = vunpack.c.l.s4 1983009808
    %v4481 = vunpack.c.0.s8 %v4480
    %v4482 = vlaneseq
    %v4483 = vshrl.u32 %v4482, 7
    %v4484 = vsub.s32 %v4481, %v4483
    %v4485 = vrot.slane %v4478, %v4484
    %v4486 = vcombine.low %v4256, %v4257
    %v4488 = vunpack.c.l.s4 1983009808
    %v4489 = vunpack.c.0.s8 %v4488
    %v4490 = vlaneseq
    %v4491 = vshrl.u32 %v4490, 7
    %v4492 = vsub.s32 %v4489, %v4491
    %v4493 = vrot.slane %v4486, %v4492
    %v4494 = vcombine.low %v4469, %v4477
    %v4495 = vcombine.high %v4469, %v4477
    %v4497 = vunpack.c.l.s4 1934713408
    %v4498 = vunpack.c.0.s8 %v4497
    %v4499 = vlaneseq
    %v4500 = vshrl.u32 %v4499, 7
    %v4501 = vsub.s32 %v4498, %v4500
    %v4502 = vrot.slane %v4494, %v4501
    %v4504 = vunpack.c.l.s4 1934713408
    %v4505 = vunpack.c.0.s8 %v4504
    %v4506 = vlaneseq
    %v4507 = vshrl.u32 %v4506, 7
    %v4508 = vsub.s32 %v4505, %v4507
    %v4509 = vrot.slane %v4495, %v4508
    %v4510 = vcombine.low %v4485, %v4493
    %v4511 = vcombine.high %v4485, %v4493
    %v4513 = vunpack.c.l.s4 1934713408
    %v4514 = vunpack.c.0.s8 %v4513
    %v4515 = vlaneseq
    %v4516 = vshrl.u32 %v4515, 7
    %v4517 = vsub.s32 %v4514, %v4516
    %v4518 = vrot.slane %v4510, %v4517
    %v4520 = vunpack.c.l.s4 1934713408
    %v4521 = vunpack.c.0.s8 %v4520
    %v4522 = vlaneseq
    %v4523 = vshrl.u32 %v4522, 7
    %v4524 = vsub.s32 %v4521, %v4523
    %v4525 = vrot.slane %v4511, %v4524
    %v4526 = vcombine.low %v4502, %v4518
    %v4527 = vcombine.high %v4502, %v4518
    %v4528 = vcombine.low %v4509, %v4525
    %v4529 = vcombine.high %v4509, %v4525
    %v4530 = vld [vmem:[%s3] sm:$0x1]
    %v4531 = vld [vmem:[%s3 + $0x1] sm:$0x1]
    %v4534 = vlaneseq
    %v4535 = vshrl.u32 %v4534, 7
    %v4536 = vsub.s32 0, %v4535
    %v4537 = vrot.slane %v4530, %v4536
    %v4538 = vlaneseq
    %v4539 = vshrl.u32 %v4538, 7
    %v4540 = vsub.s32 0, %v4539
    %v4541 = vrot.slane %v4531, %v4540
    %v4545 = vsel %vm1142, %v3181, 0
    %v4548 = vsel %vm1142, %v3730, 0
    %v4551 = vsel %vm1142, %v3798, 0
    %4553 = vmatprep.subr.mxu0 0.0
    %4554 = vmatpush1.xpose.msra.mxu0 %v4548
    %4555 = vmatprep.subr.mxu0 0.0
    %4556 = vmatpush1.xpose.msra.mxu0 %v4551
    %4557 = vmatprep.subr.mxu0 0.0
    %4558 = vmatpush1.xpose.msra.mxu0 0.0
    %4559 = vmatprep.subr.mxu0 0.0
    %4560 = vmatpush1.xpose.msra.mxu0 0.0
    %4561 = vmatprep.subr.mxu0 0.0
    %4562 = vmatpush1.xpose.msra.mxu0 0.0
    %4563 = vmatprep.subr.mxu0 0.0
    %4564 = vmatpush1.xpose.msra.mxu0 0.0
    %4565 = vmatprep.subr.mxu0 0.0
    %4566 = vmatpush1.xpose.msra.mxu0 0.0
    %4567 = vmatprep.subr.mxu0 0.0
    %4568 = vmatpush1.xpose.msra.mxu0 0.0
    %4569 = vmatprep.subr.mxu0 0.0
    %4570 = vmatpush1.xpose.msra.mxu0 0.0
    %4571 = vmatprep.subr.mxu0 0.0
    %4572 = vmatpush1.xpose.msra.mxu0 0.0
    %4573 = vmatprep.subr.mxu0 0.0
    %4574 = vmatpush1.xpose.msra.mxu0 0.0
    %4575 = vmatprep.subr.mxu0 0.0
    %4576 = vmatpush1.xpose.msra.mxu0 0.0
    %4577 = vmatprep.subr.mxu0 0.0
    %4578 = vmatpush1.xpose.msra.mxu0 0.0
    %4579 = vmatprep.subr.mxu0 0.0
    %4580 = vmatpush1.xpose.msra.mxu0 0.0
    %4581 = vmatprep.subr.mxu0 0.0
    %4582 = vmatpush1.xpose.msra.mxu0 0.0
    %4583 = vmatprep.subr.mxu0 0.0
    %4584 = vmatpush1.xpose.msra.mxu0 0.0
    %4585 = vmatprep.subr.mxu0 0.0
    %4586 = vmatpush1.xpose.msra.mxu0 0.0
    %4587 = vmatprep.subr.mxu0 0.0
    %4588 = vmatpush1.xpose.msra.mxu0 0.0
    %4589 = vmatprep.subr.mxu0 0.0
    %4590 = vmatpush1.xpose.msra.mxu0 0.0
    %4591 = vmatprep.subr.mxu0 0.0
    %4592 = vmatpush1.xpose.msra.mxu0 0.0
    %4593 = vmatprep.subr.mxu0 0.0
    %4594 = vmatpush1.xpose.msra.mxu0 0.0
    %4595 = vmatprep.subr.mxu0 0.0
    %4596 = vmatpush1.xpose.msra.mxu0 0.0
    %4597 = vmatprep.subr.mxu0 0.0
    %4598 = vmatpush1.xpose.msra.mxu0 0.0
    %4599 = vmatprep.subr.mxu0 0.0
    %4600 = vmatpush1.xpose.msra.mxu0 0.0
    %4601 = vmatprep.subr.mxu0 0.0
    %4602 = vmatpush1.xpose.msra.mxu0 0.0
    %4603 = vmatprep.subr.mxu0 0.0
    %4604 = vmatpush1.xpose.msra.mxu0 0.0
    %4605 = vmatprep.subr.mxu0 0.0
    %4606 = vmatpush1.xpose.msra.mxu0 0.0
    %4607 = vmatprep.subr.mxu0 0.0
    %4608 = vmatpush1.xpose.msra.mxu0 0.0
    %4609 = vmatprep.subr.mxu0 0.0
    %4610 = vmatpush1.xpose.msra.mxu0 0.0
    %4611 = vmatprep.subr.mxu0 0.0
    %4612 = vmatpush1.xpose.msra.mxu0 0.0
    %4613 = vmatprep.subr.mxu0 0.0
    %4614 = vmatpush1.xpose.msra.mxu0 0.0
    %4615 = vmatprep.subr.mxu0 0.0
    %4616 = vmatpush1.xpose.msra.mxu0 0.0
    %4617 = vmatprep.mubr.f32.mxu0 0.0
    %4618 = vmatmul.mubr.f32.gmra.mrb[0].mxu0 %v4545
    %v4619 = vpop.f32.mrb[0].mxu0
    %v4620 = vadd.f32 %v4537, %v4619
    %v4621 = vpop.f32.mrb[0].mxu0
    %4622 = vdwg.mxu0
    %v4624 = vsel %vm1142, %v3182, 0
    %v4627 = vsel %vm1142, %v3731, 0
    %v4630 = vsel %vm1142, %v3799, 0
    %4632 = vmatprep.subr.mxu0 0.0
    %4633 = vmatpush1.xpose.msra.mxu0 %v4627
    %4634 = vmatprep.subr.mxu0 0.0
    %4635 = vmatpush1.xpose.msra.mxu0 %v4630
    %4636 = vmatprep.subr.mxu0 0.0
    %4637 = vmatpush1.xpose.msra.mxu0 0.0
    %4638 = vmatprep.subr.mxu0 0.0
    %4639 = vmatpush1.xpose.msra.mxu0 0.0
    %4640 = vmatprep.subr.mxu0 0.0
    %4641 = vmatpush1.xpose.msra.mxu0 0.0
    %4642 = vmatprep.subr.mxu0 0.0
    %4643 = vmatpush1.xpose.msra.mxu0 0.0
    %4644 = vmatprep.subr.mxu0 0.0
    %4645 = vmatpush1.xpose.msra.mxu0 0.0
    %4646 = vmatprep.subr.mxu0 0.0
    %4647 = vmatpush1.xpose.msra.mxu0 0.0
    %4648 = vmatprep.subr.mxu0 0.0
    %4649 = vmatpush1.xpose.msra.mxu0 0.0
    %4650 = vmatprep.subr.mxu0 0.0
    %4651 = vmatpush1.xpose.msra.mxu0 0.0
    %4652 = vmatprep.subr.mxu0 0.0
    %4653 = vmatpush1.xpose.msra.mxu0 0.0
    %4654 = vmatprep.subr.mxu0 0.0
    %4655 = vmatpush1.xpose.msra.mxu0 0.0
    %4656 = vmatprep.subr.mxu0 0.0
    %4657 = vmatpush1.xpose.msra.mxu0 0.0
    %4658 = vmatprep.subr.mxu0 0.0
    %4659 = vmatpush1.xpose.msra.mxu0 0.0
    %4660 = vmatprep.subr.mxu0 0.0
    %4661 = vmatpush1.xpose.msra.mxu0 0.0
    %4662 = vmatprep.subr.mxu0 0.0
    %4663 = vmatpush1.xpose.msra.mxu0 0.0
    %4664 = vmatprep.subr.mxu0 0.0
    %4665 = vmatpush1.xpose.msra.mxu0 0.0
    %4666 = vmatprep.subr.mxu0 0.0
    %4667 = vmatpush1.xpose.msra.mxu0 0.0
    %4668 = vmatprep.subr.mxu0 0.0
    %4669 = vmatpush1.xpose.msra.mxu0 0.0
    %4670 = vmatprep.subr.mxu0 0.0
    %4671 = vmatpush1.xpose.msra.mxu0 0.0
    %4672 = vmatprep.subr.mxu0 0.0
    %4673 = vmatpush1.xpose.msra.mxu0 0.0
    %4674 = vmatprep.subr.mxu0 0.0
    %4675 = vmatpush1.xpose.msra.mxu0 0.0
    %4676 = vmatprep.subr.mxu0 0.0
    %4677 = vmatpush1.xpose.msra.mxu0 0.0
    %4678 = vmatprep.subr.mxu0 0.0
    %4679 = vmatpush1.xpose.msra.mxu0 0.0
    %4680 = vmatprep.subr.mxu0 0.0
    %4681 = vmatpush1.xpose.msra.mxu0 0.0
    %4682 = vmatprep.subr.mxu0 0.0
    %4683 = vmatpush1.xpose.msra.mxu0 0.0
    %4684 = vmatprep.subr.mxu0 0.0
    %4685 = vmatpush1.xpose.msra.mxu0 0.0
    %4686 = vmatprep.subr.mxu0 0.0
    %4687 = vmatpush1.xpose.msra.mxu0 0.0
    %4688 = vmatprep.subr.mxu0 0.0
    %4689 = vmatpush1.xpose.msra.mxu0 0.0
    %4690 = vmatprep.subr.mxu0 0.0
    %4691 = vmatpush1.xpose.msra.mxu0 0.0
    %4692 = vmatprep.subr.mxu0 0.0
    %4693 = vmatpush1.xpose.msra.mxu0 0.0
    %4694 = vmatprep.subr.mxu0 0.0
    %4695 = vmatpush1.xpose.msra.mxu0 0.0
    %4696 = vmatprep.mubr.f32.mxu0 0.0
    %4697 = vmatmul.mubr.f32.gmra.mrb[0].mxu0 %v4624
    %v4698 = vpop.f32.mrb[0].mxu0
    %v4699 = vadd.f32 %v4537, %v4698
    %v4700 = vpop.f32.mrb[0].mxu0
    %4701 = vdwg.mxu0
    %v4703 = vsel %vm1142, %v3183, 0
    %v4706 = vsel %vm1142, %v3732, 0
    %v4709 = vsel %vm1142, %v3800, 0
    %4711 = vmatprep.subr.mxu0 0.0
    %4712 = vmatpush1.xpose.msra.mxu0 %v4706
    %4713 = vmatprep.subr.mxu0 0.0
    %4714 = vmatpush1.xpose.msra.mxu0 %v4709
    %4715 = vmatprep.subr.mxu0 0.0
    %4716 = vmatpush1.xpose.msra.mxu0 0.0
    %4717 = vmatprep.subr.mxu0 0.0
    %4718 = vmatpush1.xpose.msra.mxu0 0.0
    %4719 = vmatprep.subr.mxu0 0.0
    %4720 = vmatpush1.xpose.msra.mxu0 0.0
    %4721 = vmatprep.subr.mxu0 0.0
    %4722 = vmatpush1.xpose.msra.mxu0 0.0
    %4723 = vmatprep.subr.mxu0 0.0
    %4724 = vmatpush1.xpose.msra.mxu0 0.0
    %4725 = vmatprep.subr.mxu0 0.0
    %4726 = vmatpush1.xpose.msra.mxu0 0.0
    %4727 = vmatprep.subr.mxu0 0.0
    %4728 = vmatpush1.xpose.msra.mxu0 0.0
    %4729 = vmatprep.subr.mxu0 0.0
    %4730 = vmatpush1.xpose.msra.mxu0 0.0
    %4731 = vmatprep.subr.mxu0 0.0
    %4732 = vmatpush1.xpose.msra.mxu0 0.0
    %4733 = vmatprep.subr.mxu0 0.0
    %4734 = vmatpush1.xpose.msra.mxu0 0.0
    %4735 = vmatprep.subr.mxu0 0.0
    %4736 = vmatpush1.xpose.msra.mxu0 0.0
    %4737 = vmatprep.subr.mxu0 0.0
    %4738 = vmatpush1.xpose.msra.mxu0 0.0
    %4739 = vmatprep.subr.mxu0 0.0
    %4740 = vmatpush1.xpose.msra.mxu0 0.0
    %4741 = vmatprep.subr.mxu0 0.0
    %4742 = vmatpush1.xpose.msra.mxu0 0.0
    %4743 = vmatprep.subr.mxu0 0.0
    %4744 = vmatpush1.xpose.msra.mxu0 0.0
    %4745 = vmatprep.subr.mxu0 0.0
    %4746 = vmatpush1.xpose.msra.mxu0 0.0
    %4747 = vmatprep.subr.mxu0 0.0
    %4748 = vmatpush1.xpose.msra.mxu0 0.0
    %4749 = vmatprep.subr.mxu0 0.0
    %4750 = vmatpush1.xpose.msra.mxu0 0.0
    %4751 = vmatprep.subr.mxu0 0.0
    %4752 = vmatpush1.xpose.msra.mxu0 0.0
    %4753 = vmatprep.subr.mxu0 0.0
    %4754 = vmatpush1.xpose.msra.mxu0 0.0
    %4755 = vmatprep.subr.mxu0 0.0
    %4756 = vmatpush1.xpose.msra.mxu0 0.0
    %4757 = vmatprep.subr.mxu0 0.0
    %4758 = vmatpush1.xpose.msra.mxu0 0.0
    %4759 = vmatprep.subr.mxu0 0.0
    %4760 = vmatpush1.xpose.msra.mxu0 0.0
    %4761 = vmatprep.subr.mxu0 0.0
    %4762 = vmatpush1.xpose.msra.mxu0 0.0
    %4763 = vmatprep.subr.mxu0 0.0
    %4764 = vmatpush1.xpose.msra.mxu0 0.0
    %4765 = vmatprep.subr.mxu0 0.0
    %4766 = vmatpush1.xpose.msra.mxu0 0.0
    %4767 = vmatprep.subr.mxu0 0.0
    %4768 = vmatpush1.xpose.msra.mxu0 0.0
    %4769 = vmatprep.subr.mxu0 0.0
    %4770 = vmatpush1.xpose.msra.mxu0 0.0
    %4771 = vmatprep.subr.mxu0 0.0
    %4772 = vmatpush1.xpose.msra.mxu0 0.0
    %4773 = vmatprep.subr.mxu0 0.0
    %4774 = vmatpush1.xpose.msra.mxu0 0.0
    %4775 = vmatprep.mubr.f32.mxu0 0.0
    %4776 = vmatmul.mubr.f32.gmra.mrb[0].mxu0 %v4703
    %v4777 = vpop.f32.mrb[0].mxu0
    %v4778 = vadd.f32 %v4537, %v4777
    %v4779 = vpop.f32.mrb[0].mxu0
    %4780 = vdwg.mxu0
    %v4782 = vsel %vm1142, %v3184, 0
    %v4785 = vsel %vm1142, %v3733, 0
    %v4788 = vsel %vm1142, %v3801, 0
    %4790 = vmatprep.subr.mxu0 0.0
    %4791 = vmatpush1.xpose.msra.mxu0 %v4785
    %4792 = vmatprep.subr.mxu0 0.0
    %4793 = vmatpush1.xpose.msra.mxu0 %v4788
    %4794 = vmatprep.subr.mxu0 0.0
    %4795 = vmatpush1.xpose.msra.mxu0 0.0
    %4796 = vmatprep.subr.mxu0 0.0
    %4797 = vmatpush1.xpose.msra.mxu0 0.0
    %4798 = vmatprep.subr.mxu0 0.0
    %4799 = vmatpush1.xpose.msra.mxu0 0.0
    %4800 = vmatprep.subr.mxu0 0.0
    %4801 = vmatpush1.xpose.msra.mxu0 0.0
    %4802 = vmatprep.subr.mxu0 0.0
    %4803 = vmatpush1.xpose.msra.mxu0 0.0
    %4804 = vmatprep.subr.mxu0 0.0
    %4805 = vmatpush1.xpose.msra.mxu0 0.0
    %4806 = vmatprep.subr.mxu0 0.0
    %4807 = vmatpush1.xpose.msra.mxu0 0.0
    %4808 = vmatprep.subr.mxu0 0.0
    %4809 = vmatpush1.xpose.msra.mxu0 0.0
    %4810 = vmatprep.subr.mxu0 0.0
    %4811 = vmatpush1.xpose.msra.mxu0 0.0
    %4812 = vmatprep.subr.mxu0 0.0
    %4813 = vmatpush1.xpose.msra.mxu0 0.0
    %4814 = vmatprep.subr.mxu0 0.0
    %4815 = vmatpush1.xpose.msra.mxu0 0.0
    %4816 = vmatprep.subr.mxu0 0.0
    %4817 = vmatpush1.xpose.msra.mxu0 0.0
    %4818 = vmatprep.subr.mxu0 0.0
    %4819 = vmatpush1.xpose.msra.mxu0 0.0
    %4820 = vmatprep.subr.mxu0 0.0
    %4821 = vmatpush1.xpose.msra.mxu0 0.0
    %4822 = vmatprep.subr.mxu0 0.0
    %4823 = vmatpush1.xpose.msra.mxu0 0.0
    %4824 = vmatprep.subr.mxu0 0.0
    %4825 = vmatpush1.xpose.msra.mxu0 0.0
    %4826 = vmatprep.subr.mxu0 0.0
    %4827 = vmatpush1.xpose.msra.mxu0 0.0
    %4828 = vmatprep.subr.mxu0 0.0
    %4829 = vmatpush1.xpose.msra.mxu0 0.0
    %4830 = vmatprep.subr.mxu0 0.0
    %4831 = vmatpush1.xpose.msra.mxu0 0.0
    %4832 = vmatprep.subr.mxu0 0.0
    %4833 = vmatpush1.xpose.msra.mxu0 0.0
    %4834 = vmatprep.subr.mxu0 0.0
    %4835 = vmatpush1.xpose.msra.mxu0 0.0
    %4836 = vmatprep.subr.mxu0 0.0
    %4837 = vmatpush1.xpose.msra.mxu0 0.0
    %4838 = vmatprep.subr.mxu0 0.0
    %4839 = vmatpush1.xpose.msra.mxu0 0.0
    %4840 = vmatprep.subr.mxu0 0.0
    %4841 = vmatpush1.xpose.msra.mxu0 0.0
    %4842 = vmatprep.subr.mxu0 0.0
    %4843 = vmatpush1.xpose.msra.mxu0 0.0
    %4844 = vmatprep.subr.mxu0 0.0
    %4845 = vmatpush1.xpose.msra.mxu0 0.0
    %4846 = vmatprep.subr.mxu0 0.0
    %4847 = vmatpush1.xpose.msra.mxu0 0.0
    %4848 = vmatprep.subr.mxu0 0.0
    %4849 = vmatpush1.xpose.msra.mxu0 0.0
    %4850 = vmatprep.subr.mxu0 0.0
    %4851 = vmatpush1.xpose.msra.mxu0 0.0
    %4852 = vmatprep.subr.mxu0 0.0
    %4853 = vmatpush1.xpose.msra.mxu0 0.0
    %4854 = vmatprep.mubr.f32.mxu0 0.0
    %4855 = vmatmul.mubr.f32.gmra.mrb[0].mxu0 %v4782
    %v4856 = vpop.f32.mrb[0].mxu0
    %v4857 = vadd.f32 %v4537, %v4856
    %v4858 = vpop.f32.mrb[0].mxu0
    %4859 = vdwg.mxu0
    %v4861 = vsel %vm1142, %v3249, 0
    %v4864 = vsel %vm1142, %v3866, 0
    %v4867 = vsel %vm1142, %v3934, 0
    %4869 = vmatprep.subr.mxu0 0.0
    %4870 = vmatpush1.xpose.msra.mxu0 %v4864
    %4871 = vmatprep.subr.mxu0 0.0
    %4872 = vmatpush1.xpose.msra.mxu0 %v4867
    %4873 = vmatprep.subr.mxu0 0.0
    %4874 = vmatpush1.xpose.msra.mxu0 0.0
    %4875 = vmatprep.subr.mxu0 0.0
    %4876 = vmatpush1.xpose.msra.mxu0 0.0
    %4877 = vmatprep.subr.mxu0 0.0
    %4878 = vmatpush1.xpose.msra.mxu0 0.0
    %4879 = vmatprep.subr.mxu0 0.0
    %4880 = vmatpush1.xpose.msra.mxu0 0.0
    %4881 = vmatprep.subr.mxu0 0.0
    %4882 = vmatpush1.xpose.msra.mxu0 0.0
    %4883 = vmatprep.subr.mxu0 0.0
    %4884 = vmatpush1.xpose.msra.mxu0 0.0
    %4885 = vmatprep.subr.mxu0 0.0
    %4886 = vmatpush1.xpose.msra.mxu0 0.0
    %4887 = vmatprep.subr.mxu0 0.0
    %4888 = vmatpush1.xpose.msra.mxu0 0.0
    %4889 = vmatprep.subr.mxu0 0.0
    %4890 = vmatpush1.xpose.msra.mxu0 0.0
    %4891 = vmatprep.subr.mxu0 0.0
    %4892 = vmatpush1.xpose.msra.mxu0 0.0
    %4893 = vmatprep.subr.mxu0 0.0
    %4894 = vmatpush1.xpose.msra.mxu0 0.0
    %4895 = vmatprep.subr.mxu0 0.0
    %4896 = vmatpush1.xpose.msra.mxu0 0.0
    %4897 = vmatprep.subr.mxu0 0.0
    %4898 = vmatpush1.xpose.msra.mxu0 0.0
    %4899 = vmatprep.subr.mxu0 0.0
    %4900 = vmatpush1.xpose.msra.mxu0 0.0
    %4901 = vmatprep.subr.mxu0 0.0
    %4902 = vmatpush1.xpose.msra.mxu0 0.0
    %4903 = vmatprep.subr.mxu0 0.0
    %4904 = vmatpush1.xpose.msra.mxu0 0.0
    %4905 = vmatprep.subr.mxu0 0.0
    %4906 = vmatpush1.xpose.msra.mxu0 0.0
    %4907 = vmatprep.subr.mxu0 0.0
    %4908 = vmatpush1.xpose.msra.mxu0 0.0
    %4909 = vmatprep.subr.mxu0 0.0
    %4910 = vmatpush1.xpose.msra.mxu0 0.0
    %4911 = vmatprep.subr.mxu0 0.0
    %4912 = vmatpush1.xpose.msra.mxu0 0.0
    %4913 = vmatprep.subr.mxu0 0.0
    %4914 = vmatpush1.xpose.msra.mxu0 0.0
    %4915 = vmatprep.subr.mxu0 0.0
    %4916 = vmatpush1.xpose.msra.mxu0 0.0
    %4917 = vmatprep.subr.mxu0 0.0
    %4918 = vmatpush1.xpose.msra.mxu0 0.0
    %4919 = vmatprep.subr.mxu0 0.0
    %4920 = vmatpush1.xpose.msra.mxu0 0.0
    %4921 = vmatprep.subr.mxu0 0.0
    %4922 = vmatpush1.xpose.msra.mxu0 0.0
    %4923 = vmatprep.subr.mxu0 0.0
    %4924 = vmatpush1.xpose.msra.mxu0 0.0
    %4925 = vmatprep.subr.mxu0 0.0
    %4926 = vmatpush1.xpose.msra.mxu0 0.0
    %4927 = vmatprep.subr.mxu0 0.0
    %4928 = vmatpush1.xpose.msra.mxu0 0.0
    %4929 = vmatprep.subr.mxu0 0.0
    %4930 = vmatpush1.xpose.msra.mxu0 0.0
    %4931 = vmatprep.subr.mxu0 0.0
    %4932 = vmatpush1.xpose.msra.mxu0 0.0
    %4933 = vmatprep.mubr.f32.mxu0 0.0
    %4934 = vmatmul.mubr.f32.gmra.mrb[0].mxu0 %v4861
    %v4935 = vpop.f32.mrb[0].mxu0
    %v4936 = vadd.f32 %v4541, %v4935
    %v4937 = vpop.f32.mrb[0].mxu0
    %4938 = vdwg.mxu0
    %v4940 = vsel %vm1142, %v3250, 0
    %v4943 = vsel %vm1142, %v3867, 0
    %v4946 = vsel %vm1142, %v3935, 0
    %4948 = vmatprep.subr.mxu0 0.0
    %4949 = vmatpush1.xpose.msra.mxu0 %v4943
    %4950 = vmatprep.subr.mxu0 0.0
    %4951 = vmatpush1.xpose.msra.mxu0 %v4946
    %4952 = vmatprep.subr.mxu0 0.0
    %4953 = vmatpush1.xpose.msra.mxu0 0.0
    %4954 = vmatprep.subr.mxu0 0.0
    %4955 = vmatpush1.xpose.msra.mxu0 0.0
    %4956 = vmatprep.subr.mxu0 0.0
    %4957 = vmatpush1.xpose.msra.mxu0 0.0
    %4958 = vmatprep.subr.mxu0 0.0
    %4959 = vmatpush1.xpose.msra.mxu0 0.0
    %4960 = vmatprep.subr.mxu0 0.0
    %4961 = vmatpush1.xpose.msra.mxu0 0.0
    %4962 = vmatprep.subr.mxu0 0.0
    %4963 = vmatpush1.xpose.msra.mxu0 0.0
    %4964 = vmatprep.subr.mxu0 0.0
    %4965 = vmatpush1.xpose.msra.mxu0 0.0
    %4966 = vmatprep.subr.mxu0 0.0
    %4967 = vmatpush1.xpose.msra.mxu0 0.0
    %4968 = vmatprep.subr.mxu0 0.0
    %4969 = vmatpush1.xpose.msra.mxu0 0.0
    %4970 = vmatprep.subr.mxu0 0.0
    %4971 = vmatpush1.xpose.msra.mxu0 0.0
    %4972 = vmatprep.subr.mxu0 0.0
    %4973 = vmatpush1.xpose.msra.mxu0 0.0
    %4974 = vmatprep.subr.mxu0 0.0
    %4975 = vmatpush1.xpose.msra.mxu0 0.0
    %4976 = vmatprep.subr.mxu0 0.0
    %4977 = vmatpush1.xpose.msra.mxu0 0.0
    %4978 = vmatprep.subr.mxu0 0.0
    %4979 = vmatpush1.xpose.msra.mxu0 0.0
    %4980 = vmatprep.subr.mxu0 0.0
    %4981 = vmatpush1.xpose.msra.mxu0 0.0
    %4982 = vmatprep.subr.mxu0 0.0
    %4983 = vmatpush1.xpose.msra.mxu0 0.0
    %4984 = vmatprep.subr.mxu0 0.0
    %4985 = vmatpush1.xpose.msra.mxu0 0.0
    %4986 = vmatprep.subr.mxu0 0.0
    %4987 = vmatpush1.xpose.msra.mxu0 0.0
    %4988 = vmatprep.subr.mxu0 0.0
    %4989 = vmatpush1.xpose.msra.mxu0 0.0
    %4990 = vmatprep.subr.mxu0 0.0
    %4991 = vmatpush1.xpose.msra.mxu0 0.0
    %4992 = vmatprep.subr.mxu0 0.0
    %4993 = vmatpush1.xpose.msra.mxu0 0.0
    %4994 = vmatprep.subr.mxu0 0.0
    %4995 = vmatpush1.xpose.msra.mxu0 0.0
    %4996 = vmatprep.subr.mxu0 0.0
    %4997 = vmatpush1.xpose.msra.mxu0 0.0
    %4998 = vmatprep.subr.mxu0 0.0
    %4999 = vmatpush1.xpose.msra.mxu0 0.0
    %5000 = vmatprep.subr.mxu0 0.0
    %5001 = vmatpush1.xpose.msra.mxu0 0.0
    %5002 = vmatprep.subr.mxu0 0.0
    %5003 = vmatpush1.xpose.msra.mxu0 0.0
    %5004 = vmatprep.subr.mxu0 0.0
    %5005 = vmatpush1.xpose.msra.mxu0 0.0
    %5006 = vmatprep.subr.mxu0 0.0
    %5007 = vmatpush1.xpose.msra.mxu0 0.0
    %5008 = vmatprep.subr.mxu0 0.0
    %5009 = vmatpush1.xpose.msra.mxu0 0.0
    %5010 = vmatprep.subr.mxu0 0.0
    %5011 = vmatpush1.xpose.msra.mxu0 0.0
    %5012 = vmatprep.mubr.f32.mxu0 0.0
    %5013 = vmatmul.mubr.f32.gmra.mrb[0].mxu0 %v4940
    %v5014 = vpop.f32.mrb[0].mxu0
    %v5015 = vadd.f32 %v4541, %v5014
    %v5016 = vpop.f32.mrb[0].mxu0
    %5017 = vdwg.mxu0
    %v5019 = vsel %vm1142, %v3251, 0
    %v5022 = vsel %vm1142, %v3868, 0
    %v5025 = vsel %vm1142, %v3936, 0
    %5027 = vmatprep.subr.mxu0 0.0
    %5028 = vmatpush1.xpose.msra.mxu0 %v5022
    %5029 = vmatprep.subr.mxu0 0.0
    %5030 = vmatpush1.xpose.msra.mxu0 %v5025
    %5031 = vmatprep.subr.mxu0 0.0
    %5032 = vmatpush1.xpose.msra.mxu0 0.0
    %5033 = vmatprep.subr.mxu0 0.0
    %5034 = vmatpush1.xpose.msra.mxu0 0.0
    %5035 = vmatprep.subr.mxu0 0.0
    %5036 = vmatpush1.xpose.msra.mxu0 0.0
    %5037 = vmatprep.subr.mxu0 0.0
    %5038 = vmatpush1.xpose.msra.mxu0 0.0
    %5039 = vmatprep.subr.mxu0 0.0
    %5040 = vmatpush1.xpose.msra.mxu0 0.0
    %5041 = vmatprep.subr.mxu0 0.0
    %5042 = vmatpush1.xpose.msra.mxu0 0.0
    %5043 = vmatprep.subr.mxu0 0.0
    %5044 = vmatpush1.xpose.msra.mxu0 0.0
    %5045 = vmatprep.subr.mxu0 0.0
    %5046 = vmatpush1.xpose.msra.mxu0 0.0
    %5047 = vmatprep.subr.mxu0 0.0
    %5048 = vmatpush1.xpose.msra.mxu0 0.0
    %5049 = vmatprep.subr.mxu0 0.0
    %5050 = vmatpush1.xpose.msra.mxu0 0.0
    %5051 = vmatprep.subr.mxu0 0.0
    %5052 = vmatpush1.xpose.msra.mxu0 0.0
    %5053 = vmatprep.subr.mxu0 0.0
    %5054 = vmatpush1.xpose.msra.mxu0 0.0
    %5055 = vmatprep.subr.mxu0 0.0
    %5056 = vmatpush1.xpose.msra.mxu0 0.0
    %5057 = vmatprep.subr.mxu0 0.0
    %5058 = vmatpush1.xpose.msra.mxu0 0.0
    %5059 = vmatprep.subr.mxu0 0.0
    %5060 = vmatpush1.xpose.msra.mxu0 0.0
    %5061 = vmatprep.subr.mxu0 0.0
    %5062 = vmatpush1.xpose.msra.mxu0 0.0
    %5063 = vmatprep.subr.mxu0 0.0
    %5064 = vmatpush1.xpose.msra.mxu0 0.0
    %5065 = vmatprep.subr.mxu0 0.0
    %5066 = vmatpush1.xpose.msra.mxu0 0.0
    %5067 = vmatprep.subr.mxu0 0.0
    %5068 = vmatpush1.xpose.msra.mxu0 0.0
    %5069 = vmatprep.subr.mxu0 0.0
    %5070 = vmatpush1.xpose.msra.mxu0 0.0
    %5071 = vmatprep.subr.mxu0 0.0
    %5072 = vmatpush1.xpose.msra.mxu0 0.0
    %5073 = vmatprep.subr.mxu0 0.0
    %5074 = vmatpush1.xpose.msra.mxu0 0.0
    %5075 = vmatprep.subr.mxu0 0.0
    %5076 = vmatpush1.xpose.msra.mxu0 0.0
    %5077 = vmatprep.subr.mxu0 0.0
    %5078 = vmatpush1.xpose.msra.mxu0 0.0
    %5079 = vmatprep.subr.mxu0 0.0
    %5080 = vmatpush1.xpose.msra.mxu0 0.0
    %5081 = vmatprep.subr.mxu0 0.0
    %5082 = vmatpush1.xpose.msra.mxu0 0.0
    %5083 = vmatprep.subr.mxu0 0.0
    %5084 = vmatpush1.xpose.msra.mxu0 0.0
    %5085 = vmatprep.subr.mxu0 0.0
    %5086 = vmatpush1.xpose.msra.mxu0 0.0
    %5087 = vmatprep.subr.mxu0 0.0
    %5088 = vmatpush1.xpose.msra.mxu0 0.0
    %5089 = vmatprep.subr.mxu0 0.0
    %5090 = vmatpush1.xpose.msra.mxu0 0.0
    %5091 = vmatprep.mubr.f32.mxu0 0.0
    %5092 = vmatmul.mubr.f32.gmra.mrb[0].mxu0 %v5019
    %v5093 = vpop.f32.mrb[0].mxu0
    %v5094 = vadd.f32 %v4541, %v5093
    %v5095 = vpop.f32.mrb[0].mxu0
    %5096 = vdwg.mxu0
    %v5098 = vsel %vm1142, %v3252, 0
    %v5101 = vsel %vm1142, %v3869, 0
    %v5104 = vsel %vm1142, %v3937, 0
    %5106 = vmatprep.subr.mxu0 0.0
    %5107 = vmatpush1.xpose.msra.mxu0 %v5101
    %5108 = vmatprep.subr.mxu0 0.0
    %5109 = vmatpush1.xpose.msra.mxu0 %v5104
    %5110 = vmatprep.subr.mxu0 0.0
    %5111 = vmatpush1.xpose.msra.mxu0 0.0
    %5112 = vmatprep.subr.mxu0 0.0
    %5113 = vmatpush1.xpose.msra.mxu0 0.0
    %5114 = vmatprep.subr.mxu0 0.0
    %5115 = vmatpush1.xpose.msra.mxu0 0.0
    %5116 = vmatprep.subr.mxu0 0.0
    %5117 = vmatpush1.xpose.msra.mxu0 0.0
    %5118 = vmatprep.subr.mxu0 0.0
    %5119 = vmatpush1.xpose.msra.mxu0 0.0
    %5120 = vmatprep.subr.mxu0 0.0
    %5121 = vmatpush1.xpose.msra.mxu0 0.0
    %5122 = vmatprep.subr.mxu0 0.0
    %5123 = vmatpush1.xpose.msra.mxu0 0.0
    %5124 = vmatprep.subr.mxu0 0.0
    %5125 = vmatpush1.xpose.msra.mxu0 0.0
    %5126 = vmatprep.subr.mxu0 0.0
    %5127 = vmatpush1.xpose.msra.mxu0 0.0
    %5128 = vmatprep.subr.mxu0 0.0
    %5129 = vmatpush1.xpose.msra.mxu0 0.0
    %5130 = vmatprep.subr.mxu0 0.0
    %5131 = vmatpush1.xpose.msra.mxu0 0.0
    %5132 = vmatprep.subr.mxu0 0.0
    %5133 = vmatpush1.xpose.msra.mxu0 0.0
    %5134 = vmatprep.subr.mxu0 0.0
    %5135 = vmatpush1.xpose.msra.mxu0 0.0
    %5136 = vmatprep.subr.mxu0 0.0
    %5137 = vmatpush1.xpose.msra.mxu0 0.0
    %5138 = vmatprep.subr.mxu0 0.0
    %5139 = vmatpush1.xpose.msra.mxu0 0.0
    %5140 = vmatprep.subr.mxu0 0.0
    %5141 = vmatpush1.xpose.msra.mxu0 0.0
    %5142 = vmatprep.subr.mxu0 0.0
    %5143 = vmatpush1.xpose.msra.mxu0 0.0
    %5144 = vmatprep.subr.mxu0 0.0
    %5145 = vmatpush1.xpose.msra.mxu0 0.0
    %5146 = vmatprep.subr.mxu0 0.0
    %5147 = vmatpush1.xpose.msra.mxu0 0.0
    %5148 = vmatprep.subr.mxu0 0.0
    %5149 = vmatpush1.xpose.msra.mxu0 0.0
    %5150 = vmatprep.subr.mxu0 0.0
    %5151 = vmatpush1.xpose.msra.mxu0 0.0
    %5152 = vmatprep.subr.mxu0 0.0
    %5153 = vmatpush1.xpose.msra.mxu0 0.0
    %5154 = vmatprep.subr.mxu0 0.0
    %5155 = vmatpush1.xpose.msra.mxu0 0.0
    %5156 = vmatprep.subr.mxu0 0.0
    %5157 = vmatpush1.xpose.msra.mxu0 0.0
    %5158 = vmatprep.subr.mxu0 0.0
    %5159 = vmatpush1.xpose.msra.mxu0 0.0
    %5160 = vmatprep.subr.mxu0 0.0
    %5161 = vmatpush1.xpose.msra.mxu0 0.0
    %5162 = vmatprep.subr.mxu0 0.0
    %5163 = vmatpush1.xpose.msra.mxu0 0.0
    %5164 = vmatprep.subr.mxu0 0.0
    %5165 = vmatpush1.xpose.msra.mxu0 0.0
    %5166 = vmatprep.subr.mxu0 0.0
    %5167 = vmatpush1.xpose.msra.mxu0 0.0
    %5168 = vmatprep.subr.mxu0 0.0
    %5169 = vmatpush1.xpose.msra.mxu0 0.0
    %5170 = vmatprep.mubr.f32.mxu0 0.0
    %5171 = vmatmul.mubr.f32.gmra.mrb[0].mxu0 %v5098
    %v5172 = vpop.f32.mrb[0].mxu0
    %v5173 = vadd.f32 %v4541, %v5172
    %v5174 = vpop.f32.mrb[0].mxu0
    %5175 = vdwg.mxu0
    %v5176 = vsel %vm2745, %v4620, -inf
    %5177 = vmax.xlane.f32.xlu0 %v5176
    %v5178 = vpop.xlane.xlu0 %5177
    %v5179 = vsel %vm2745, %v4699, -inf
    %5180 = vmax.xlane.f32.xlu0 %v5179
    %v5181 = vpop.xlane.xlu0 %5180
    %v5182 = vsel %vm2745, %v4778, -inf
    %5183 = vmax.xlane.f32.xlu0 %v5182
    %v5184 = vpop.xlane.xlu0 %5183
    %v5185 = vsel %vm2745, %v4857, -inf
    %5186 = vmax.xlane.f32.xlu0 %v5185
    %v5187 = vpop.xlane.xlu0 %5186
    %v5188 = vsel %vm2745, %v4936, -inf
    %5189 = vmax.xlane.f32.xlu0 %v5188
    %v5190 = vpop.xlane.xlu0 %5189
    %v5191 = vsel %vm2745, %v5015, -inf
    %5192 = vmax.xlane.f32.xlu0 %v5191
    %v5193 = vpop.xlane.xlu0 %5192
    %v5194 = vsel %vm2745, %v5094, -inf
    %5195 = vmax.xlane.f32.xlu0 %v5194
    %v5196 = vpop.xlane.xlu0 %5195
    %v5197 = vsel %vm2745, %v5173, -inf
    %5198 = vmax.xlane.f32.xlu0 %v5197
    %v5199 = vpop.xlane.xlu0 %5198
    %v5200 = vsub.f32 %v4620, %v5178
    %v5201 = vsub.f32 %v4699, %v5181
    %v5202 = vsub.f32 %v4778, %v5184
    %v5203 = vsub.f32 %v4857, %v5187
    %v5204 = vsub.f32 %v4936, %v5190
    %v5205 = vsub.f32 %v5015, %v5193
    %v5206 = vsub.f32 %v5094, %v5196
    %v5207 = vsub.f32 %v5173, %v5199
    %v5208 = vmul.f32 %v5200, 1.442695
    %v5209 = vpow.pop %v5208
    %v5210 = vmul.f32 %v5201, 1.442695
    %v5211 = vpow.pop %v5210
    %v5212 = vmul.f32 %v5202, 1.442695
    %v5213 = vpow.pop %v5212
    %v5214 = vmul.f32 %v5203, 1.442695
    %v5215 = vpow.pop %v5214
    %v5216 = vmul.f32 %v5204, 1.442695
    %v5217 = vpow.pop %v5216
    %v5218 = vmul.f32 %v5205, 1.442695
    %v5219 = vpow.pop %v5218
    %v5220 = vmul.f32 %v5206, 1.442695
    %v5221 = vpow.pop %v5220
    %v5222 = vmul.f32 %v5207, 1.442695
    %v5223 = vpow.pop %v5222
    %v5224 = vsel %vm2745, %v5209, 0.0
    %5225 = vadd.xlane.f32.xlu0 %v5224
    %v5226 = vpop.xlane.xlu0 %5225
    %v5227 = vsel %vm2745, %v5211, 0.0
    %5228 = vadd.xlane.f32.xlu0 %v5227
    %v5229 = vpop.xlane.xlu0 %5228
    %v5230 = vsel %vm2745, %v5213, 0.0
    %5231 = vadd.xlane.f32.xlu0 %v5230
    %v5232 = vpop.xlane.xlu0 %5231
    %v5233 = vsel %vm2745, %v5215, 0.0
    %5234 = vadd.xlane.f32.xlu0 %v5233
    %v5235 = vpop.xlane.xlu0 %5234
    %v5236 = vsel %vm2745, %v5217, 0.0
    %5237 = vadd.xlane.f32.xlu0 %v5236
    %v5238 = vpop.xlane.xlu0 %5237
    %v5239 = vsel %vm2745, %v5219, 0.0
    %5240 = vadd.xlane.f32.xlu0 %v5239
    %v5241 = vpop.xlane.xlu0 %5240
    %v5242 = vsel %vm2745, %v5221, 0.0
    %5243 = vadd.xlane.f32.xlu0 %v5242
    %v5244 = vpop.xlane.xlu0 %5243
    %v5245 = vsel %vm2745, %v5223, 0.0
    %5246 = vadd.xlane.f32.xlu0 %v5245
    %v5247 = vpop.xlane.xlu0 %5246
    %v5248 = vrcp.pop %v5226
    %v5249 = vrcp.pop %v5229
    %v5250 = vrcp.pop %v5232
    %v5251 = vrcp.pop %v5235
    %v5252 = vrcp.pop %v5238
    %v5253 = vrcp.pop %v5241
    %v5254 = vrcp.pop %v5244
    %v5255 = vrcp.pop %v5247
    %v5256 = vmul.f32 %v5226, %v5248
    %v5257 = vmul.f32 %v5229, %v5249
    %v5258 = vmul.f32 %v5232, %v5250
    %v5259 = vmul.f32 %v5235, %v5251
    %v5260 = vmul.f32 %v5238, %v5252
    %v5261 = vmul.f32 %v5241, %v5253
    %v5262 = vmul.f32 %v5244, %v5254
    %v5263 = vmul.f32 %v5247, %v5255
    %v5264 = vsub.f32 2.0, %v5256
    %v5265 = vsub.f32 2.0, %v5257
    %v5266 = vsub.f32 2.0, %v5258
    %v5267 = vsub.f32 2.0, %v5259
    %v5268 = vsub.f32 2.0, %v5260
    %v5269 = vsub.f32 2.0, %v5261
    %v5270 = vsub.f32 2.0, %v5262
    %v5271 = vsub.f32 2.0, %v5263
    %v5272 = vmul.f32 %v5248, %v5264
    %v5273 = vmul.f32 %v5249, %v5265
    %v5274 = vmul.f32 %v5250, %v5266
    %v5275 = vmul.f32 %v5251, %v5267
    %v5276 = vmul.f32 %v5252, %v5268
    %v5277 = vmul.f32 %v5253, %v5269
    %v5278 = vmul.f32 %v5254, %v5270
    %v5279 = vmul.f32 %v5255, %v5271
    %v5280 = vmul.f32 %v5209, %v5272
    %v5281 = vmul.f32 %v5211, %v5273
    %v5282 = vmul.f32 %v5213, %v5274
    %v5283 = vmul.f32 %v5215, %v5275
    %v5284 = vmul.f32 %v5217, %v5276
    %v5285 = vmul.f32 %v5219, %v5277
    %v5286 = vmul.f32 %v5221, %v5278
    %v5287 = vmul.f32 %v5223, %v5279
    %v5289 = vsel %vm2745, %v5280, 0
    %5291 = vmatprep.subr.mxu0 0.0
    %5292 = vmatpush1.msra.mxu0 %v4322
    %5293 = vmatprep.subr.mxu0 0.0
    %5294 = vmatpush1.msra.mxu0 %v4390
    %5295 = vmatprep.subr.mxu0 0.0
    %5296 = vmatpush1.msra.mxu0 0.0
    %5297 = vmatprep.subr.mxu0 0.0
    %5298 = vmatpush1.msra.mxu0 0.0
    %5299 = vmatprep.subr.mxu0 0.0
    %5300 = vmatpush1.msra.mxu0 0.0
    %5301 = vmatprep.subr.mxu0 0.0
    %5302 = vmatpush1.msra.mxu0 0.0
    %5303 = vmatprep.subr.mxu0 0.0
    %5304 = vmatpush1.msra.mxu0 0.0
    %5305 = vmatprep.subr.mxu0 0.0
    %5306 = vmatpush1.msra.mxu0 0.0
    %5307 = vmatprep.subr.mxu0 0.0
    %5308 = vmatpush1.msra.mxu0 0.0
    %5309 = vmatprep.subr.mxu0 0.0
    %5310 = vmatpush1.msra.mxu0 0.0
    %5311 = vmatprep.subr.mxu0 0.0
    %5312 = vmatpush1.msra.mxu0 0.0
    %5313 = vmatprep.subr.mxu0 0.0
    %5314 = vmatpush1.msra.mxu0 0.0
    %5315 = vmatprep.subr.mxu0 0.0
    %5316 = vmatpush1.msra.mxu0 0.0
    %5317 = vmatprep.subr.mxu0 0.0
    %5318 = vmatpush1.msra.mxu0 0.0
    %5319 = vmatprep.subr.mxu0 0.0
    %5320 = vmatpush1.msra.mxu0 0.0
    %5321 = vmatprep.subr.mxu0 0.0
    %5322 = vmatpush1.msra.mxu0 0.0
    %5323 = vmatprep.subr.mxu0 0.0
    %5324 = vmatpush1.msra.mxu0 0.0
    %5325 = vmatprep.subr.mxu0 0.0
    %5326 = vmatpush1.msra.mxu0 0.0
    %5327 = vmatprep.subr.mxu0 0.0
    %5328 = vmatpush1.msra.mxu0 0.0
    %5329 = vmatprep.subr.mxu0 0.0
    %5330 = vmatpush1.msra.mxu0 0.0
    %5331 = vmatprep.subr.mxu0 0.0
    %5332 = vmatpush1.msra.mxu0 0.0
    %5333 = vmatprep.subr.mxu0 0.0
    %5334 = vmatpush1.msra.mxu0 0.0
    %5335 = vmatprep.subr.mxu0 0.0
    %5336 = vmatpush1.msra.mxu0 0.0
    %5337 = vmatprep.subr.mxu0 0.0
    %5338 = vmatpush1.msra.mxu0 0.0
    %5339 = vmatprep.subr.mxu0 0.0
    %5340 = vmatpush1.msra.mxu0 0.0
    %5341 = vmatprep.subr.mxu0 0.0
    %5342 = vmatpush1.msra.mxu0 0.0
    %5343 = vmatprep.subr.mxu0 0.0
    %5344 = vmatpush1.msra.mxu0 0.0
    %5345 = vmatprep.subr.mxu0 0.0
    %5346 = vmatpush1.msra.mxu0 0.0
    %5347 = vmatprep.subr.mxu0 0.0
    %5348 = vmatpush1.msra.mxu0 0.0
    %5349 = vmatprep.subr.mxu0 0.0
    %5350 = vmatpush1.msra.mxu0 0.0
    %5351 = vmatprep.subr.mxu0 0.0
    %5352 = vmatpush1.msra.mxu0 0.0
    %5353 = vmatprep.subr.mxu0 0.0
    %5354 = vmatpush1.msra.mxu0 0.0
    %5355 = vmatprep.mubr.f32.mxu0 0.0
    %5356 = vmatmul.mubr.f32.gmra.mrb[0].mxu0 %v5289
    %v5357 = vpop.f32.mrb[0].mxu0
    %v5358 = vadd.f32 0.0, %v5357
    %v5359 = vpop.f32.mrb[0].mxu0
    %5360 = vdwg.mxu0
    %v5362 = vsel %vm2745, %v5281, 0
    %5364 = vmatprep.subr.mxu0 0.0
    %5365 = vmatpush1.msra.mxu0 %v4323
    %5366 = vmatprep.subr.mxu0 0.0
    %5367 = vmatpush1.msra.mxu0 %v4391
    %5368 = vmatprep.subr.mxu0 0.0
    %5369 = vmatpush1.msra.mxu0 0.0
    %5370 = vmatprep.subr.mxu0 0.0
    %5371 = vmatpush1.msra.mxu0 0.0
    %5372 = vmatprep.subr.mxu0 0.0
    %5373 = vmatpush1.msra.mxu0 0.0
    %5374 = vmatprep.subr.mxu0 0.0
    %5375 = vmatpush1.msra.mxu0 0.0
    %5376 = vmatprep.subr.mxu0 0.0
    %5377 = vmatpush1.msra.mxu0 0.0
    %5378 = vmatprep.subr.mxu0 0.0
    %5379 = vmatpush1.msra.mxu0 0.0
    %5380 = vmatprep.subr.mxu0 0.0
    %5381 = vmatpush1.msra.mxu0 0.0
    %5382 = vmatprep.subr.mxu0 0.0
    %5383 = vmatpush1.msra.mxu0 0.0
    %5384 = vmatprep.subr.mxu0 0.0
    %5385 = vmatpush1.msra.mxu0 0.0
    %5386 = vmatprep.subr.mxu0 0.0
    %5387 = vmatpush1.msra.mxu0 0.0
    %5388 = vmatprep.subr.mxu0 0.0
    %5389 = vmatpush1.msra.mxu0 0.0
    %5390 = vmatprep.subr.mxu0 0.0
    %5391 = vmatpush1.msra.mxu0 0.0
    %5392 = vmatprep.subr.mxu0 0.0
    %5393 = vmatpush1.msra.mxu0 0.0
    %5394 = vmatprep.subr.mxu0 0.0
    %5395 = vmatpush1.msra.mxu0 0.0
    %5396 = vmatprep.subr.mxu0 0.0
    %5397 = vmatpush1.msra.mxu0 0.0
    %5398 = vmatprep.subr.mxu0 0.0
    %5399 = vmatpush1.msra.mxu0 0.0
    %5400 = vmatprep.subr.mxu0 0.0
    %5401 = vmatpush1.msra.mxu0 0.0
    %5402 = vmatprep.subr.mxu0 0.0
    %5403 = vmatpush1.msra.mxu0 0.0
    %5404 = vmatprep.subr.mxu0 0.0
    %5405 = vmatpush1.msra.mxu0 0.0
    %5406 = vmatprep.subr.mxu0 0.0
    %5407 = vmatpush1.msra.mxu0 0.0
    %5408 = vmatprep.subr.mxu0 0.0
    %5409 = vmatpush1.msra.mxu0 0.0
    %5410 = vmatprep.subr.mxu0 0.0
    %5411 = vmatpush1.msra.mxu0 0.0
    %5412 = vmatprep.subr.mxu0 0.0
    %5413 = vmatpush1.msra.mxu0 0.0
    %5414 = vmatprep.subr.mxu0 0.0
    %5415 = vmatpush1.msra.mxu0 0.0
    %5416 = vmatprep.subr.mxu0 0.0
    %5417 = vmatpush1.msra.mxu0 0.0
    %5418 = vmatprep.subr.mxu0 0.0
    %5419 = vmatpush1.msra.mxu0 0.0
    %5420 = vmatprep.subr.mxu0 0.0
    %5421 = vmatpush1.msra.mxu0 0.0
    %5422 = vmatprep.subr.mxu0 0.0
    %5423 = vmatpush1.msra.mxu0 0.0
    %5424 = vmatprep.subr.mxu0 0.0
    %5425 = vmatpush1.msra.mxu0 0.0
    %5426 = vmatprep.subr.mxu0 0.0
    %5427 = vmatpush1.msra.mxu0 0.0
    %5428 = vmatprep.mubr.f32.mxu0 0.0
    %5429 = vmatmul.mubr.f32.gmra.mrb[0].mxu0 %v5362
    %v5430 = vpop.f32.mrb[0].mxu0
    %v5431 = vadd.f32 0.0, %v5430
    %v5432 = vpop.f32.mrb[0].mxu0
    %5433 = vdwg.mxu0
    %v5435 = vsel %vm2745, %v5282, 0
    %5437 = vmatprep.subr.mxu0 0.0
    %5438 = vmatpush1.msra.mxu0 %v4324
    %5439 = vmatprep.subr.mxu0 0.0
    %5440 = vmatpush1.msra.mxu0 %v4392
    %5441 = vmatprep.subr.mxu0 0.0
    %5442 = vmatpush1.msra.mxu0 0.0
    %5443 = vmatprep.subr.mxu0 0.0
    %5444 = vmatpush1.msra.mxu0 0.0
    %5445 = vmatprep.subr.mxu0 0.0
    %5446 = vmatpush1.msra.mxu0 0.0
    %5447 = vmatprep.subr.mxu0 0.0
    %5448 = vmatpush1.msra.mxu0 0.0
    %5449 = vmatprep.subr.mxu0 0.0
    %5450 = vmatpush1.msra.mxu0 0.0
    %5451 = vmatprep.subr.mxu0 0.0
    %5452 = vmatpush1.msra.mxu0 0.0
    %5453 = vmatprep.subr.mxu0 0.0
    %5454 = vmatpush1.msra.mxu0 0.0
    %5455 = vmatprep.subr.mxu0 0.0
    %5456 = vmatpush1.msra.mxu0 0.0
    %5457 = vmatprep.subr.mxu0 0.0
    %5458 = vmatpush1.msra.mxu0 0.0
    %5459 = vmatprep.subr.mxu0 0.0
    %5460 = vmatpush1.msra.mxu0 0.0
    %5461 = vmatprep.subr.mxu0 0.0
    %5462 = vmatpush1.msra.mxu0 0.0
    %5463 = vmatprep.subr.mxu0 0.0
    %5464 = vmatpush1.msra.mxu0 0.0
    %5465 = vmatprep.subr.mxu0 0.0
    %5466 = vmatpush1.msra.mxu0 0.0
    %5467 = vmatprep.subr.mxu0 0.0
    %5468 = vmatpush1.msra.mxu0 0.0
    %5469 = vmatprep.subr.mxu0 0.0
    %5470 = vmatpush1.msra.mxu0 0.0
    %5471 = vmatprep.subr.mxu0 0.0
    %5472 = vmatpush1.msra.mxu0 0.0
    %5473 = vmatprep.subr.mxu0 0.0
    %5474 = vmatpush1.msra.mxu0 0.0
    %5475 = vmatprep.subr.mxu0 0.0
    %5476 = vmatpush1.msra.mxu0 0.0
    %5477 = vmatprep.subr.mxu0 0.0
    %5478 = vmatpush1.msra.mxu0 0.0
    %5479 = vmatprep.subr.mxu0 0.0
    %5480 = vmatpush1.msra.mxu0 0.0
    %5481 = vmatprep.subr.mxu0 0.0
    %5482 = vmatpush1.msra.mxu0 0.0
    %5483 = vmatprep.subr.mxu0 0.0
    %5484 = vmatpush1.msra.mxu0 0.0
    %5485 = vmatprep.subr.mxu0 0.0
    %5486 = vmatpush1.msra.mxu0 0.0
    %5487 = vmatprep.subr.mxu0 0.0
    %5488 = vmatpush1.msra.mxu0 0.0
    %5489 = vmatprep.subr.mxu0 0.0
    %5490 = vmatpush1.msra.mxu0 0.0
    %5491 = vmatprep.subr.mxu0 0.0
    %5492 = vmatpush1.msra.mxu0 0.0
    %5493 = vmatprep.subr.mxu0 0.0
    %5494 = vmatpush1.msra.mxu0 0.0
    %5495 = vmatprep.subr.mxu0 0.0
    %5496 = vmatpush1.msra.mxu0 0.0
    %5497 = vmatprep.subr.mxu0 0.0
    %5498 = vmatpush1.msra.mxu0 0.0
    %5499 = vmatprep.subr.mxu0 0.0
    %5500 = vmatpush1.msra.mxu0 0.0
    %5501 = vmatprep.mubr.f32.mxu0 0.0
    %5502 = vmatmul.mubr.f32.gmra.mrb[0].mxu0 %v5435
    %v5503 = vpop.f32.mrb[0].mxu0
    %v5504 = vadd.f32 0.0, %v5503
    %v5505 = vpop.f32.mrb[0].mxu0
    %5506 = vdwg.mxu0
    %v5508 = vsel %vm2745, %v5283, 0
    %5510 = vmatprep.subr.mxu0 0.0
    %5511 = vmatpush1.msra.mxu0 %v4325
    %5512 = vmatprep.subr.mxu0 0.0
    %5513 = vmatpush1.msra.mxu0 %v4393
    %5514 = vmatprep.subr.mxu0 0.0
    %5515 = vmatpush1.msra.mxu0 0.0
    %5516 = vmatprep.subr.mxu0 0.0
    %5517 = vmatpush1.msra.mxu0 0.0
    %5518 = vmatprep.subr.mxu0 0.0
    %5519 = vmatpush1.msra.mxu0 0.0
    %5520 = vmatprep.subr.mxu0 0.0
    %5521 = vmatpush1.msra.mxu0 0.0
    %5522 = vmatprep.subr.mxu0 0.0
    %5523 = vmatpush1.msra.mxu0 0.0
    %5524 = vmatprep.subr.mxu0 0.0
    %5525 = vmatpush1.msra.mxu0 0.0
    %5526 = vmatprep.subr.mxu0 0.0
    %5527 = vmatpush1.msra.mxu0 0.0
    %5528 = vmatprep.subr.mxu0 0.0
    %5529 = vmatpush1.msra.mxu0 0.0
    %5530 = vmatprep.subr.mxu0 0.0
    %5531 = vmatpush1.msra.mxu0 0.0
    %5532 = vmatprep.subr.mxu0 0.0
    %5533 = vmatpush1.msra.mxu0 0.0
    %5534 = vmatprep.subr.mxu0 0.0
    %5535 = vmatpush1.msra.mxu0 0.0
    %5536 = vmatprep.subr.mxu0 0.0
    %5537 = vmatpush1.msra.mxu0 0.0
    %5538 = vmatprep.subr.mxu0 0.0
    %5539 = vmatpush1.msra.mxu0 0.0
    %5540 = vmatprep.subr.mxu0 0.0
    %5541 = vmatpush1.msra.mxu0 0.0
    %5542 = vmatprep.subr.mxu0 0.0
    %5543 = vmatpush1.msra.mxu0 0.0
    %5544 = vmatprep.subr.mxu0 0.0
    %5545 = vmatpush1.msra.mxu0 0.0
    %5546 = vmatprep.subr.mxu0 0.0
    %5547 = vmatpush1.msra.mxu0 0.0
    %5548 = vmatprep.subr.mxu0 0.0
    %5549 = vmatpush1.msra.mxu0 0.0
    %5550 = vmatprep.subr.mxu0 0.0
    %5551 = vmatpush1.msra.mxu0 0.0
    %5552 = vmatprep.subr.mxu0 0.0
    %5553 = vmatpush1.msra.mxu0 0.0
    %5554 = vmatprep.subr.mxu0 0.0
    %5555 = vmatpush1.msra.mxu0 0.0
    %5556 = vmatprep.subr.mxu0 0.0
    %5557 = vmatpush1.msra.mxu0 0.0
    %5558 = vmatprep.subr.mxu0 0.0
    %5559 = vmatpush1.msra.mxu0 0.0
    %5560 = vmatprep.subr.mxu0 0.0
    %5561 = vmatpush1.msra.mxu0 0.0
    %5562 = vmatprep.subr.mxu0 0.0
    %5563 = vmatpush1.msra.mxu0 0.0
    %5564 = vmatprep.subr.mxu0 0.0
    %5565 = vmatpush1.msra.mxu0 0.0
    %5566 = vmatprep.subr.mxu0 0.0
    %5567 = vmatpush1.msra.mxu0 0.0
    %5568 = vmatprep.subr.mxu0 0.0
    %5569 = vmatpush1.msra.mxu0 0.0
    %5570 = vmatprep.subr.mxu0 0.0
    %5571 = vmatpush1.msra.mxu0 0.0
    %5572 = vmatprep.subr.mxu0 0.0
    %5573 = vmatpush1.msra.mxu0 0.0
    %5574 = vmatprep.mubr.f32.mxu0 0.0
    %5575 = vmatmul.mubr.f32.gmra.mrb[0].mxu0 %v5508
    %v5576 = vpop.f32.mrb[0].mxu0
    %v5577 = vadd.f32 0.0, %v5576
    %v5578 = vpop.f32.mrb[0].mxu0
    %5579 = vdwg.mxu0
    %v5581 = vsel %vm2745, %v5284, 0
    %5583 = vmatprep.subr.mxu0 0.0
    %5584 = vmatpush1.msra.mxu0 %v4458
    %5585 = vmatprep.subr.mxu0 0.0
    %5586 = vmatpush1.msra.mxu0 %v4526
    %5587 = vmatprep.subr.mxu0 0.0
    %5588 = vmatpush1.msra.mxu0 0.0
    %5589 = vmatprep.subr.mxu0 0.0
    %5590 = vmatpush1.msra.mxu0 0.0
    %5591 = vmatprep.subr.mxu0 0.0
    %5592 = vmatpush1.msra.mxu0 0.0
    %5593 = vmatprep.subr.mxu0 0.0
    %5594 = vmatpush1.msra.mxu0 0.0
    %5595 = vmatprep.subr.mxu0 0.0
    %5596 = vmatpush1.msra.mxu0 0.0
    %5597 = vmatprep.subr.mxu0 0.0
    %5598 = vmatpush1.msra.mxu0 0.0
    %5599 = vmatprep.subr.mxu0 0.0
    %5600 = vmatpush1.msra.mxu0 0.0
    %5601 = vmatprep.subr.mxu0 0.0
    %5602 = vmatpush1.msra.mxu0 0.0
    %5603 = vmatprep.subr.mxu0 0.0
    %5604 = vmatpush1.msra.mxu0 0.0
    %5605 = vmatprep.subr.mxu0 0.0
    %5606 = vmatpush1.msra.mxu0 0.0
    %5607 = vmatprep.subr.mxu0 0.0
    %5608 = vmatpush1.msra.mxu0 0.0
    %5609 = vmatprep.subr.mxu0 0.0
    %5610 = vmatpush1.msra.mxu0 0.0
    %5611 = vmatprep.subr.mxu0 0.0
    %5612 = vmatpush1.msra.mxu0 0.0
    %5613 = vmatprep.subr.mxu0 0.0
    %5614 = vmatpush1.msra.mxu0 0.0
    %5615 = vmatprep.subr.mxu0 0.0
    %5616 = vmatpush1.msra.mxu0 0.0
    %5617 = vmatprep.subr.mxu0 0.0
    %5618 = vmatpush1.msra.mxu0 0.0
    %5619 = vmatprep.subr.mxu0 0.0
    %5620 = vmatpush1.msra.mxu0 0.0
    %5621 = vmatprep.subr.mxu0 0.0
    %5622 = vmatpush1.msra.mxu0 0.0
    %5623 = vmatprep.subr.mxu0 0.0
    %5624 = vmatpush1.msra.mxu0 0.0
    %5625 = vmatprep.subr.mxu0 0.0
    %5626 = vmatpush1.msra.mxu0 0.0
    %5627 = vmatprep.subr.mxu0 0.0
    %5628 = vmatpush1.msra.mxu0 0.0
    %5629 = vmatprep.subr.mxu0 0.0
    %5630 = vmatpush1.msra.mxu0 0.0
    %5631 = vmatprep.subr.mxu0 0.0
    %5632 = vmatpush1.msra.mxu0 0.0
    %5633 = vmatprep.subr.mxu0 0.0
    %5634 = vmatpush1.msra.mxu0 0.0
    %5635 = vmatprep.subr.mxu0 0.0
    %5636 = vmatpush1.msra.mxu0 0.0
    %5637 = vmatprep.subr.mxu0 0.0
    %5638 = vmatpush1.msra.mxu0 0.0
    %5639 = vmatprep.subr.mxu0 0.0
    %5640 = vmatpush1.msra.mxu0 0.0
    %5641 = vmatprep.subr.mxu0 0.0
    %5642 = vmatpush1.msra.mxu0 0.0
    %5643 = vmatprep.subr.mxu0 0.0
    %5644 = vmatpush1.msra.mxu0 0.0
    %5645 = vmatprep.subr.mxu0 0.0
    %5646 = vmatpush1.msra.mxu0 0.0
    %5647 = vmatprep.mubr.f32.mxu0 0.0
    %5648 = vmatmul.mubr.f32.gmra.mrb[0].mxu0 %v5581
    %v5649 = vpop.f32.mrb[0].mxu0
    %v5650 = vadd.f32 0.0, %v5649
    %v5651 = vpop.f32.mrb[0].mxu0
    %5652 = vdwg.mxu0
    %v5654 = vsel %vm2745, %v5285, 0
    %5656 = vmatprep.subr.mxu0 0.0
    %5657 = vmatpush1.msra.mxu0 %v4459
    %5658 = vmatprep.subr.mxu0 0.0
    %5659 = vmatpush1.msra.mxu0 %v4527
    %5660 = vmatprep.subr.mxu0 0.0
    %5661 = vmatpush1.msra.mxu0 0.0
    %5662 = vmatprep.subr.mxu0 0.0
    %5663 = vmatpush1.msra.mxu0 0.0
    %5664 = vmatprep.subr.mxu0 0.0
    %5665 = vmatpush1.msra.mxu0 0.0
    %5666 = vmatprep.subr.mxu0 0.0
    %5667 = vmatpush1.msra.mxu0 0.0
    %5668 = vmatprep.subr.mxu0 0.0
    %5669 = vmatpush1.msra.mxu0 0.0
    %5670 = vmatprep.subr.mxu0 0.0
    %5671 = vmatpush1.msra.mxu0 0.0
    %5672 = vmatprep.subr.mxu0 0.0
    %5673 = vmatpush1.msra.mxu0 0.0
    %5674 = vmatprep.subr.mxu0 0.0
    %5675 = vmatpush1.msra.mxu0 0.0
    %5676 = vmatprep.subr.mxu0 0.0
    %5677 = vmatpush1.msra.mxu0 0.0
    %5678 = vmatprep.subr.mxu0 0.0
    %5679 = vmatpush1.msra.mxu0 0.0
    %5680 = vmatprep.subr.mxu0 0.0
    %5681 = vmatpush1.msra.mxu0 0.0
    %5682 = vmatprep.subr.mxu0 0.0
    %5683 = vmatpush1.msra.mxu0 0.0
    %5684 = vmatprep.subr.mxu0 0.0
    %5685 = vmatpush1.msra.mxu0 0.0
    %5686 = vmatprep.subr.mxu0 0.0
    %5687 = vmatpush1.msra.mxu0 0.0
    %5688 = vmatprep.subr.mxu0 0.0
    %5689 = vmatpush1.msra.mxu0 0.0
    %5690 = vmatprep.subr.mxu0 0.0
    %5691 = vmatpush1.msra.mxu0 0.0
    %5692 = vmatprep.subr.mxu0 0.0
    %5693 = vmatpush1.msra.mxu0 0.0
    %5694 = vmatprep.subr.mxu0 0.0
    %5695 = vmatpush1.msra.mxu0 0.0
    %5696 = vmatprep.subr.mxu0 0.0
    %5697 = vmatpush1.msra.mxu0 0.0
    %5698 = vmatprep.subr.mxu0 0.0
    %5699 = vmatpush1.msra.mxu0 0.0
    %5700 = vmatprep.subr.mxu0 0.0
    %5701 = vmatpush1.msra.mxu0 0.0
    %5702 = vmatprep.subr.mxu0 0.0
    %5703 = vmatpush1.msra.mxu0 0.0
    %5704 = vmatprep.subr.mxu0 0.0
    %5705 = vmatpush1.msra.mxu0 0.0
    %5706 = vmatprep.subr.mxu0 0.0
    %5707 = vmatpush1.msra.mxu0 0.0
    %5708 = vmatprep.subr.mxu0 0.0
    %5709 = vmatpush1.msra.mxu0 0.0
    %5710 = vmatprep.subr.mxu0 0.0
    %5711 = vmatpush1.msra.mxu0 0.0
    %5712 = vmatprep.subr.mxu0 0.0
    %5713 = vmatpush1.msra.mxu0 0.0
    %5714 = vmatprep.subr.mxu0 0.0
    %5715 = vmatpush1.msra.mxu0 0.0
    %5716 = vmatprep.subr.mxu0 0.0
    %5717 = vmatpush1.msra.mxu0 0.0
    %5718 = vmatprep.subr.mxu0 0.0
    %5719 = vmatpush1.msra.mxu0 0.0
    %5720 = vmatprep.mubr.f32.mxu0 0.0
    %5721 = vmatmul.mubr.f32.gmra.mrb[0].mxu0 %v5654
    %v5722 = vpop.f32.mrb[0].mxu0
    %v5723 = vadd.f32 0.0, %v5722
    %v5724 = vpop.f32.mrb[0].mxu0
    %5725 = vdwg.mxu0
    %v5727 = vsel %vm2745, %v5286, 0
    %5729 = vmatprep.subr.mxu0 0.0
    %5730 = vmatpush1.msra.mxu0 %v4460
    %5731 = vmatprep.subr.mxu0 0.0
    %5732 = vmatpush1.msra.mxu0 %v4528
    %5733 = vmatprep.subr.mxu0 0.0
    %5734 = vmatpush1.msra.mxu0 0.0
    %5735 = vmatprep.subr.mxu0 0.0
    %5736 = vmatpush1.msra.mxu0 0.0
    %5737 = vmatprep.subr.mxu0 0.0
    %5738 = vmatpush1.msra.mxu0 0.0
    %5739 = vmatprep.subr.mxu0 0.0
    %5740 = vmatpush1.msra.mxu0 0.0
    %5741 = vmatprep.subr.mxu0 0.0
    %5742 = vmatpush1.msra.mxu0 0.0
    %5743 = vmatprep.subr.mxu0 0.0
    %5744 = vmatpush1.msra.mxu0 0.0
    %5745 = vmatprep.subr.mxu0 0.0
    %5746 = vmatpush1.msra.mxu0 0.0
    %5747 = vmatprep.subr.mxu0 0.0
    %5748 = vmatpush1.msra.mxu0 0.0
    %5749 = vmatprep.subr.mxu0 0.0
    %5750 = vmatpush1.msra.mxu0 0.0
    %5751 = vmatprep.subr.mxu0 0.0
    %5752 = vmatpush1.msra.mxu0 0.0
    %5753 = vmatprep.subr.mxu0 0.0
    %5754 = vmatpush1.msra.mxu0 0.0
    %5755 = vmatprep.subr.mxu0 0.0
    %5756 = vmatpush1.msra.mxu0 0.0
    %5757 = vmatprep.subr.mxu0 0.0
    %5758 = vmatpush1.msra.mxu0 0.0
    %5759 = vmatprep.subr.mxu0 0.0
    %5760 = vmatpush1.msra.mxu0 0.0
    %5761 = vmatprep.subr.mxu0 0.0
    %5762 = vmatpush1.msra.mxu0 0.0
    %5763 = vmatprep.subr.mxu0 0.0
    %5764 = vmatpush1.msra.mxu0 0.0
    %5765 = vmatprep.subr.mxu0 0.0
    %5766 = vmatpush1.msra.mxu0 0.0
    %5767 = vmatprep.subr.mxu0 0.0
    %5768 = vmatpush1.msra.mxu0 0.0
    %5769 = vmatprep.subr.mxu0 0.0
    %5770 = vmatpush1.msra.mxu0 0.0
    %5771 = vmatprep.subr.mxu0 0.0
    %5772 = vmatpush1.msra.mxu0 0.0
    %5773 = vmatprep.subr.mxu0 0.0
    %5774 = vmatpush1.msra.mxu0 0.0
    %5775 = vmatprep.subr.mxu0 0.0
    %5776 = vmatpush1.msra.mxu0 0.0
    %5777 = vmatprep.subr.mxu0 0.0
    %5778 = vmatpush1.msra.mxu0 0.0
    %5779 = vmatprep.subr.mxu0 0.0
    %5780 = vmatpush1.msra.mxu0 0.0
    %5781 = vmatprep.subr.mxu0 0.0
    %5782 = vmatpush1.msra.mxu0 0.0
    %5783 = vmatprep.subr.mxu0 0.0
    %5784 = vmatpush1.msra.mxu0 0.0
    %5785 = vmatprep.subr.mxu0 0.0
    %5786 = vmatpush1.msra.mxu0 0.0
    %5787 = vmatprep.subr.mxu0 0.0
    %5788 = vmatpush1.msra.mxu0 0.0
    %5789 = vmatprep.subr.mxu0 0.0
    %5790 = vmatpush1.msra.mxu0 0.0
    %5791 = vmatprep.subr.mxu0 0.0
    %5792 = vmatpush1.msra.mxu0 0.0
    %5793 = vmatprep.mubr.f32.mxu0 0.0
    %5794 = vmatmul.mubr.f32.gmra.mrb[0].mxu0 %v5727
    %v5795 = vpop.f32.mrb[0].mxu0
    %v5796 = vadd.f32 0.0, %v5795
    %v5797 = vpop.f32.mrb[0].mxu0
    %5798 = vdwg.mxu0
    %v5800 = vsel %vm2745, %v5287, 0
    %5802 = vmatprep.subr.mxu0 0.0
    %5803 = vmatpush1.msra.mxu0 %v4461
    %5804 = vmatprep.subr.mxu0 0.0
    %5805 = vmatpush1.msra.mxu0 %v4529
    %5806 = vmatprep.subr.mxu0 0.0
    %5807 = vmatpush1.msra.mxu0 0.0
    %5808 = vmatprep.subr.mxu0 0.0
    %5809 = vmatpush1.msra.mxu0 0.0
    %5810 = vmatprep.subr.mxu0 0.0
    %5811 = vmatpush1.msra.mxu0 0.0
    %5812 = vmatprep.subr.mxu0 0.0
    %5813 = vmatpush1.msra.mxu0 0.0
    %5814 = vmatprep.subr.mxu0 0.0
    %5815 = vmatpush1.msra.mxu0 0.0
    %5816 = vmatprep.subr.mxu0 0.0
    %5817 = vmatpush1.msra.mxu0 0.0
    %5818 = vmatprep.subr.mxu0 0.0
    %5819 = vmatpush1.msra.mxu0 0.0
    %5820 = vmatprep.subr.mxu0 0.0
    %5821 = vmatpush1.msra.mxu0 0.0
    %5822 = vmatprep.subr.mxu0 0.0
    %5823 = vmatpush1.msra.mxu0 0.0
    %5824 = vmatprep.subr.mxu0 0.0
    %5825 = vmatpush1.msra.mxu0 0.0
    %5826 = vmatprep.subr.mxu0 0.0
    %5827 = vmatpush1.msra.mxu0 0.0
    %5828 = vmatprep.subr.mxu0 0.0
    %5829 = vmatpush1.msra.mxu0 0.0
    %5830 = vmatprep.subr.mxu0 0.0
    %5831 = vmatpush1.msra.mxu0 0.0
    %5832 = vmatprep.subr.mxu0 0.0
    %5833 = vmatpush1.msra.mxu0 0.0
    %5834 = vmatprep.subr.mxu0 0.0
    %5835 = vmatpush1.msra.mxu0 0.0
    %5836 = vmatprep.subr.mxu0 0.0
    %5837 = vmatpush1.msra.mxu0 0.0
    %5838 = vmatprep.subr.mxu0 0.0
    %5839 = vmatpush1.msra.mxu0 0.0
    %5840 = vmatprep.subr.mxu0 0.0
    %5841 = vmatpush1.msra.mxu0 0.0
    %5842 = vmatprep.subr.mxu0 0.0
    %5843 = vmatpush1.msra.mxu0 0.0
    %5844 = vmatprep.subr.mxu0 0.0
    %5845 = vmatpush1.msra.mxu0 0.0
    %5846 = vmatprep.subr.mxu0 0.0
    %5847 = vmatpush1.msra.mxu0 0.0
    %5848 = vmatprep.subr.mxu0 0.0
    %5849 = vmatpush1.msra.mxu0 0.0
    %5850 = vmatprep.subr.mxu0 0.0
    %5851 = vmatpush1.msra.mxu0 0.0
    %5852 = vmatprep.subr.mxu0 0.0
    %5853 = vmatpush1.msra.mxu0 0.0
    %5854 = vmatprep.subr.mxu0 0.0
    %5855 = vmatpush1.msra.mxu0 0.0
    %5856 = vmatprep.subr.mxu0 0.0
    %5857 = vmatpush1.msra.mxu0 0.0
    %5858 = vmatprep.subr.mxu0 0.0
    %5859 = vmatpush1.msra.mxu0 0.0
    %5860 = vmatprep.subr.mxu0 0.0
    %5861 = vmatpush1.msra.mxu0 0.0
    %5862 = vmatprep.subr.mxu0 0.0
    %5863 = vmatpush1.msra.mxu0 0.0
    %5864 = vmatprep.subr.mxu0 0.0
    %5865 = vmatpush1.msra.mxu0 0.0
    %5866 = vmatprep.mubr.f32.mxu0 0.0
    %5867 = vmatmul.mubr.f32.gmra.mrb[0].mxu0 %v5800
    %v5868 = vpop.f32.mrb[0].mxu0
    %v5869 = vadd.f32 0.0, %v5868
    %v5870 = vpop.f32.mrb[0].mxu0
    %5871 = vdwg.mxu0
    %v5872 = vcombine.low %v5358, %v5504
    %v5873 = vcombine.high %v5358, %v5504
    %v5875 = vunpack.c.l.s4 1983009808
    %v5876 = vunpack.c.0.s8 %v5875
    %v5877 = vlaneseq
    %v5878 = vshrl.u32 %v5877, 7
    %v5879 = vsub.s32 %v5876, %v5878
    %v5880 = vrot.slane %v5872, %v5879
    %v5882 = vunpack.c.l.s4 1983009808
    %v5883 = vunpack.c.0.s8 %v5882
    %v5884 = vlaneseq
    %v5885 = vshrl.u32 %v5884, 7
    %v5886 = vsub.s32 %v5883, %v5885
    %v5887 = vrot.slane %v5873, %v5886
    %v5888 = vcombine.low %v5431, %v5577
    %v5889 = vcombine.high %v5431, %v5577
    %v5891 = vunpack.c.l.s4 1983009808
    %v5892 = vunpack.c.0.s8 %v5891
    %v5893 = vlaneseq
    %v5894 = vshrl.u32 %v5893, 7
    %v5895 = vsub.s32 %v5892, %v5894
    %v5896 = vrot.slane %v5888, %v5895
    %v5898 = vunpack.c.l.s4 1983009808
    %v5899 = vunpack.c.0.s8 %v5898
    %v5900 = vlaneseq
    %v5901 = vshrl.u32 %v5900, 7
    %v5902 = vsub.s32 %v5899, %v5901
    %v5903 = vrot.slane %v5889, %v5902
    %v5904 = vcombine.low %v5880, %v5896
    %v5905 = vcombine.high %v5880, %v5896
    %v5907 = vunpack.c.l.s4 1934713408
    %v5908 = vunpack.c.0.s8 %v5907
    %v5909 = vlaneseq
    %v5910 = vshrl.u32 %v5909, 7
    %v5911 = vsub.s32 %v5908, %v5910
    %v5912 = vrot.slane %v5904, %v5911
    %v5914 = vunpack.c.l.s4 1934713408
    %v5915 = vunpack.c.0.s8 %v5914
    %v5916 = vlaneseq
    %v5917 = vshrl.u32 %v5916, 7
    %v5918 = vsub.s32 %v5915, %v5917
    %v5919 = vrot.slane %v5905, %v5918
    %v5920 = vcombine.low %v5887, %v5903
    %v5921 = vcombine.high %v5887, %v5903
    %v5923 = vunpack.c.l.s4 1934713408
    %v5924 = vunpack.c.0.s8 %v5923
    %v5925 = vlaneseq
    %v5926 = vshrl.u32 %v5925, 7
    %v5927 = vsub.s32 %v5924, %v5926
    %v5928 = vrot.slane %v5920, %v5927
    %v5930 = vunpack.c.l.s4 1934713408
    %v5931 = vunpack.c.0.s8 %v5930
    %v5932 = vlaneseq
    %v5933 = vshrl.u32 %v5932, 7
    %v5934 = vsub.s32 %v5931, %v5933
    %v5935 = vrot.slane %v5921, %v5934
    %v5936 = vcombine.high %v5912, 0.0
    %v5937 = vcombine.high %v5919, 0.0
    %v5938 = vcombine.high %v5928, 0.0
    %v5939 = vcombine.high %v5935, 0.0
    %v5940 = vcombine.low %v5650, %v5796
    %v5941 = vcombine.high %v5650, %v5796
    %v5943 = vunpack.c.l.s4 1983009808
    %v5944 = vunpack.c.0.s8 %v5943
    %v5945 = vlaneseq
    %v5946 = vshrl.u32 %v5945, 7
    %v5947 = vsub.s32 %v5944, %v5946
    %v5948 = vrot.slane %v5940, %v5947
    %v5950 = vunpack.c.l.s4 1983009808
    %v5951 = vunpack.c.0.s8 %v5950
    %v5952 = vlaneseq
    %v5953 = vshrl.u32 %v5952, 7
    %v5954 = vsub.s32 %v5951, %v5953
    %v5955 = vrot.slane %v5941, %v5954
    %v5956 = vcombine.low %v5723, %v5869
    %v5957 = vcombine.high %v5723, %v5869
    %v5959 = vunpack.c.l.s4 1983009808
    %v5960 = vunpack.c.0.s8 %v5959
    %v5961 = vlaneseq
    %v5962 = vshrl.u32 %v5961, 7
    %v5963 = vsub.s32 %v5960, %v5962
    %v5964 = vrot.slane %v5956, %v5963
    %v5966 = vunpack.c.l.s4 1983009808
    %v5967 = vunpack.c.0.s8 %v5966
    %v5968 = vlaneseq
    %v5969 = vshrl.u32 %v5968, 7
    %v5970 = vsub.s32 %v5967, %v5969
    %v5971 = vrot.slane %v5957, %v5970
    %v5972 = vcombine.low %v5948, %v5964
    %v5973 = vcombine.high %v5948, %v5964
    %v5975 = vunpack.c.l.s4 1934713408
    %v5976 = vunpack.c.0.s8 %v5975
    %v5977 = vlaneseq
    %v5978 = vshrl.u32 %v5977, 7
    %v5979 = vsub.s32 %v5976, %v5978
    %v5980 = vrot.slane %v5972, %v5979
    %v5982 = vunpack.c.l.s4 1934713408
    %v5983 = vunpack.c.0.s8 %v5982
    %v5984 = vlaneseq
    %v5985 = vshrl.u32 %v5984, 7
    %v5986 = vsub.s32 %v5983, %v5985
    %v5987 = vrot.slane %v5973, %v5986
    %v5988 = vcombine.low %v5955, %v5971
    %v5989 = vcombine.high %v5955, %v5971
    %v5991 = vunpack.c.l.s4 1934713408
    %v5992 = vunpack.c.0.s8 %v5991
    %v5993 = vlaneseq
    %v5994 = vshrl.u32 %v5993, 7
    %v5995 = vsub.s32 %v5992, %v5994
    %v5996 = vrot.slane %v5988, %v5995
    %v5998 = vunpack.c.l.s4 1934713408
    %v5999 = vunpack.c.0.s8 %v5998
    %v6000 = vlaneseq
    %v6001 = vshrl.u32 %v6000, 7
    %v6002 = vsub.s32 %v5999, %v6001
    %v6003 = vrot.slane %v5989, %v6002
    %v6004 = vcombine.high %v5980, 0.0
    %v6005 = vcombine.high %v5987, 0.0
    %v6006 = vcombine.high %v5996, 0.0
    %v6007 = vcombine.high %v6003, 0.0
    %v6008 = vcombine.low %v5912, %v5919
    %v6010 = vunpack.c.l.s4 1983009808
    %v6011 = vunpack.c.0.s8 %v6010
    %v6012 = vlaneseq
    %v6013 = vshrl.u32 %v6012, 7
    %v6014 = vsub.s32 %v6011, %v6013
    %v6015 = vrot.slane %v6008, %v6014
    %v6016 = vcombine.low %v5936, %v5937
    %v6018 = vunpack.c.l.s4 1983009808
    %v6019 = vunpack.c.0.s8 %v6018
    %v6020 = vlaneseq
    %v6021 = vshrl.u32 %v6020, 7
    %v6022 = vsub.s32 %v6019, %v6021
    %v6023 = vrot.slane %v6016, %v6022
    %v6024 = vcombine.low %v5928, %v5935
    %v6026 = vunpack.c.l.s4 1983009808
    %v6027 = vunpack.c.0.s8 %v6026
    %v6028 = vlaneseq
    %v6029 = vshrl.u32 %v6028, 7
    %v6030 = vsub.s32 %v6027, %v6029
    %v6031 = vrot.slane %v6024, %v6030
    %v6032 = vcombine.low %v5938, %v5939
    %v6034 = vunpack.c.l.s4 1983009808
    %v6035 = vunpack.c.0.s8 %v6034
    %v6036 = vlaneseq
    %v6037 = vshrl.u32 %v6036, 7
    %v6038 = vsub.s32 %v6035, %v6037
    %v6039 = vrot.slane %v6032, %v6038
    %v6040 = vcombine.low %v6015, %v6023
    %v6041 = vcombine.high %v6015, %v6023
    %v6043 = vunpack.c.l.s4 1934713408
    %v6044 = vunpack.c.0.s8 %v6043
    %v6045 = vlaneseq
    %v6046 = vshrl.u32 %v6045, 7
    %v6047 = vsub.s32 %v6044, %v6046
    %v6048 = vrot.slane %v6040, %v6047
    %v6050 = vunpack.c.l.s4 1934713408
    %v6051 = vunpack.c.0.s8 %v6050
    %v6052 = vlaneseq
    %v6053 = vshrl.u32 %v6052, 7
    %v6054 = vsub.s32 %v6051, %v6053
    %v6055 = vrot.slane %v6041, %v6054
    %v6056 = vcombine.low %v6031, %v6039
    %v6057 = vcombine.high %v6031, %v6039
    %v6059 = vunpack.c.l.s4 1934713408
    %v6060 = vunpack.c.0.s8 %v6059
    %v6061 = vlaneseq
    %v6062 = vshrl.u32 %v6061, 7
    %v6063 = vsub.s32 %v6060, %v6062
    %v6064 = vrot.slane %v6056, %v6063
    %v6066 = vunpack.c.l.s4 1934713408
    %v6067 = vunpack.c.0.s8 %v6066
    %v6068 = vlaneseq
    %v6069 = vshrl.u32 %v6068, 7
    %v6070 = vsub.s32 %v6067, %v6069
    %v6071 = vrot.slane %v6057, %v6070
    %v6072 = vcombine.low %v6048, %v6064
    %v6073 = vcombine.high %v6048, %v6064
    %v6074 = vcombine.low %v6055, %v6071
    %v6075 = vcombine.high %v6055, %v6071
    %v6076 = vcombine.low %v5980, %v5987
    %v6078 = vunpack.c.l.s4 1983009808
    %v6079 = vunpack.c.0.s8 %v6078
    %v6080 = vlaneseq
    %v6081 = vshrl.u32 %v6080, 7
    %v6082 = vsub.s32 %v6079, %v6081
    %v6083 = vrot.slane %v6076, %v6082
    %v6084 = vcombine.low %v6004, %v6005
    %v6086 = vunpack.c.l.s4 1983009808
    %v6087 = vunpack.c.0.s8 %v6086
    %v6088 = vlaneseq
    %v6089 = vshrl.u32 %v6088, 7
    %v6090 = vsub.s32 %v6087, %v6089
    %v6091 = vrot.slane %v6084, %v6090
    %v6092 = vcombine.low %v5996, %v6003
    %v6094 = vunpack.c.l.s4 1983009808
    %v6095 = vunpack.c.0.s8 %v6094
    %v6096 = vlaneseq
    %v6097 = vshrl.u32 %v6096, 7
    %v6098 = vsub.s32 %v6095, %v6097
    %v6099 = vrot.slane %v6092, %v6098
    %v6100 = vcombine.low %v6006, %v6007
    %v6102 = vunpack.c.l.s4 1983009808
    %v6103 = vunpack.c.0.s8 %v6102
    %v6104 = vlaneseq
    %v6105 = vshrl.u32 %v6104, 7
    %v6106 = vsub.s32 %v6103, %v6105
    %v6107 = vrot.slane %v6100, %v6106
    %v6108 = vcombine.low %v6083, %v6091
    %v6109 = vcombine.high %v6083, %v6091
    %v6111 = vunpack.c.l.s4 1934713408
    %v6112 = vunpack.c.0.s8 %v6111
    %v6113 = vlaneseq
    %v6114 = vshrl.u32 %v6113, 7
    %v6115 = vsub.s32 %v6112, %v6114
    %v6116 = vrot.slane %v6108, %v6115
    %v6118 = vunpack.c.l.s4 1934713408
    %v6119 = vunpack.c.0.s8 %v6118
    %v6120 = vlaneseq
    %v6121 = vshrl.u32 %v6120, 7
    %v6122 = vsub.s32 %v6119, %v6121
    %v6123 = vrot.slane %v6109, %v6122
    %v6124 = vcombine.low %v6099, %v6107
    %v6125 = vcombine.high %v6099, %v6107
    %v6127 = vunpack.c.l.s4 1934713408
    %v6128 = vunpack.c.0.s8 %v6127
    %v6129 = vlaneseq
    %v6130 = vshrl.u32 %v6129, 7
    %v6131 = vsub.s32 %v6128, %v6130
    %v6132 = vrot.slane %v6124, %v6131
    %v6134 = vunpack.c.l.s4 1934713408
    %v6135 = vunpack.c.0.s8 %v6134
    %v6136 = vlaneseq
    %v6137 = vshrl.u32 %v6136, 7
    %v6138 = vsub.s32 %v6135, %v6137
    %v6139 = vrot.slane %v6125, %v6138
    %v6140 = vcombine.low %v6116, %v6132
    %v6141 = vcombine.high %v6116, %v6132
    %v6142 = vcombine.low %v6123, %v6139
    %v6143 = vcombine.high %v6123, %v6139
    %6146 = vrot.lane.b32.xlu0 %v6073, 8
    %v6147 = vpop.permute.xlu0 %6146
    %6148 = vrot.lane.b32.xlu0 %v6141, 8
    %v6149 = vpop.permute.xlu0 %6148
    %6154 = vrot.lane.b32.xlu0 %v6074, 16
    %v6155 = vpop.permute.xlu0 %6154
    %6156 = vrot.lane.b32.xlu0 %v6142, 16
    %v6157 = vpop.permute.xlu0 %6156
    %6162 = vrot.lane.b32.xlu0 %v6075, 24
    %v6163 = vpop.permute.xlu0 %6162
    %6164 = vrot.lane.b32.xlu0 %v6143, 24
    %v6165 = vpop.permute.xlu0 %6164
    %v6168 = vsel %vm1142, %v6072, %v6147
    %v6169 = vsel %vm1142, %v6140, %v6149
    %v6170 = vsel %vm2745, %v6168, %v6155
    %v6171 = vsel %vm2745, %v6169, %v6157
    %v6172 = vsel %vm2748, %v6170, %v6163
    %v6173 = vsel %vm2748, %v6171, %v6165
    %v6174 = vld [vmem:[#allocation10] sm:$0xff]
    %v6175 = vld [vmem:[#allocation10 + $0x8] sm:$0xff]
    %v6176 = vld [vmem:[#allocation10 + $0x10] sm:$0xff]
    %v6177 = vld [vmem:[#allocation10 + $0x18] sm:$0xff]
    %v6179 = vsel %vm131, %v6172, 0
    %v6182 = vsel %vm131, %v6173, 0
    %6184 = vmatprep.subr.mxu0 0.0
    %6185 = vmatpush1.msra.mxu0 %v6174
    %6186 = vmatprep.subr.mxu0 0.0
    %6187 = vmatpush1.msra.mxu0 %v6175
    %6188 = vmatprep.subr.mxu0 0.0
    %6189 = vmatpush1.msra.mxu0 %v6176
    %6190 = vmatprep.subr.mxu0 0.0
    %6191 = vmatpush1.msra.mxu0 %v6177
    %6192 = vmatprep.subr.mxu0 0.0
    %6193 = vmatpush1.msra.mxu0 0.0
    %6194 = vmatprep.subr.mxu0 0.0
    %6195 = vmatpush1.msra.mxu0 0.0
    %6196 = vmatprep.subr.mxu0 0.0
    %6197 = vmatpush1.msra.mxu0 0.0
    %6198 = vmatprep.subr.mxu0 0.0
    %6199 = vmatpush1.msra.mxu0 0.0
    %6200 = vmatprep.subr.mxu0 0.0
    %6201 = vmatpush1.msra.mxu0 0.0
    %6202 = vmatprep.subr.mxu0 0.0
    %6203 = vmatpush1.msra.mxu0 0.0
    %6204 = vmatprep.subr.mxu0 0.0
    %6205 = vmatpush1.msra.mxu0 0.0
    %6206 = vmatprep.subr.mxu0 0.0
    %6207 = vmatpush1.msra.mxu0 0.0
    %6208 = vmatprep.subr.mxu0 0.0
    %6209 = vmatpush1.msra.mxu0 0.0
    %6210 = vmatprep.subr.mxu0 0.0
    %6211 = vmatpush1.msra.mxu0 0.0
    %6212 = vmatprep.subr.mxu0 0.0
    %6213 = vmatpush1.msra.mxu0 0.0
    %6214 = vmatprep.subr.mxu0 0.0
    %6215 = vmatpush1.msra.mxu0 0.0
    %6216 = vmatprep.subr.mxu0 0.0
    %6217 = vmatpush1.msra.mxu0 0.0
    %6218 = vmatprep.subr.mxu0 0.0
    %6219 = vmatpush1.msra.mxu0 0.0
    %6220 = vmatprep.subr.mxu0 0.0
    %6221 = vmatpush1.msra.mxu0 0.0
    %6222 = vmatprep.subr.mxu0 0.0
    %6223 = vmatpush1.msra.mxu0 0.0
    %6224 = vmatprep.subr.mxu0 0.0
    %6225 = vmatpush1.msra.mxu0 0.0
    %6226 = vmatprep.subr.mxu0 0.0
    %6227 = vmatpush1.msra.mxu0 0.0
    %6228 = vmatprep.subr.mxu0 0.0
    %6229 = vmatpush1.msra.mxu0 0.0
    %6230 = vmatprep.subr.mxu0 0.0
    %6231 = vmatpush1.msra.mxu0 0.0
    %6232 = vmatprep.subr.mxu0 0.0
    %6233 = vmatpush1.msra.mxu0 0.0
    %6234 = vmatprep.subr.mxu0 0.0
    %6235 = vmatpush1.msra.mxu0 0.0
    %6236 = vmatprep.subr.mxu0 0.0
    %6237 = vmatpush1.msra.mxu0 0.0
    %6238 = vmatprep.subr.mxu0 0.0
    %6239 = vmatpush1.msra.mxu0 0.0
    %6240 = vmatprep.subr.mxu0 0.0
    %6241 = vmatpush1.msra.mxu0 0.0
    %6242 = vmatprep.subr.mxu0 0.0
    %6243 = vmatpush1.msra.mxu0 0.0
    %6244 = vmatprep.subr.mxu0 0.0
    %6245 = vmatpush1.msra.mxu0 0.0
    %6246 = vmatprep.subr.mxu0 0.0
    %6247 = vmatpush1.msra.mxu0 0.0
    %6248 = vmatprep.mubr.f32.mxu0 0.0
    %6249 = vmatmul.mubr.f32.gmra.mrb[0].mxu0 %v6179
    %v6250 = vpop.f32.mrb[0].mxu0
    %v6251 = vadd.f32 0.0, %v6250
    %v6252 = vpop.f32.mrb[0].mxu0
    %6253 = vmatprep.mubr.f32.mxu0 0.0
    %6254 = vmatmul.mubr.f32.gmra.mrb[0].mxu0 %v6182
    %v6255 = vpop.f32.mrb[0].mxu0
    %v6256 = vadd.f32 0.0, %v6255
    %v6257 = vpop.f32.mrb[0].mxu0
    %6258 = vdwg.mxu0
    %v6259 = vadd.f32 %v2836, %v6251
    %v6260 = vadd.f32 %v2837, %v6256
    %v6261 = vsel %vm131, %v6259, 0.0
    %6262 = vadd.xlane.f32.xlu0 %v6261
    %v6263 = vpop.xlane.xlu0 %6262
    %v6264 = vsel %vm131, %v6260, 0.0
    %6265 = vadd.xlane.f32.xlu0 %v6264
    %v6266 = vpop.xlane.xlu0 %6265
    %v6267 = vmul.f32 %v6263, %v138
    %v6268 = vmul.f32 %v6266, %v138
    %v6269 = vsub.f32 %v6259, %v6267
    %v6270 = vsub.f32 %v6260, %v6268
    %v6271 = vmul.f32 %v6269, %v6269
    %v6272 = vmul.f32 %v6270, %v6270
    %v6273 = vsel %vm131, %v6271, 0.0
    %6274 = vadd.xlane.f32.xlu0 %v6273
    %v6275 = vpop.xlane.xlu0 %6274
    %v6276 = vsel %vm131, %v6272, 0.0
    %6277 = vadd.xlane.f32.xlu0 %v6276
    %v6278 = vpop.xlane.xlu0 %6277
    %v6279 = vmul.f32 %v6275, %v138
    %v6280 = vmul.f32 %v6278, %v138
    %v6281 = vadd.f32 %v6279, 1e-06
    %v6282 = vadd.f32 %v6280, 1e-06
    %v6283 = vrsqrt.pop %v6281
    %v6284 = vrsqrt.pop %v6282
    %v6285 = vmul.f32 %v6269, %v6283
    %v6286 = vmul.f32 %v6270, %v6284
    %v6287 = vlaneseq
    %v6288 = vshrl.u32 %v6287, 7
    %v6289 = vsub.s32 4, %v6288
    %v6290 = vrot.slane %v130, %v6289
    %v6291 = vmul.f32 %v6285, %v6290
    %v6292 = vmul.f32 %v6286, %v6290
    %v6293 = vlaneseq
    %v6294 = vshrl.u32 %v6293, 7
    %v6295 = vsub.s32 5, %v6294
    %v6296 = vrot.slane %v130, %v6295
    %v6297 = vadd.f32 %v6291, %v6296
    %v6298 = vadd.f32 %v6292, %v6296
    %v6299 = vld [vmem:[#allocation11] sm:$0xff]
    %v6300 = vld [vmem:[#allocation11 + $0x8] sm:$0xff]
    %v6301 = vld [vmem:[#allocation11 + $0x10] sm:$0xff]
    %v6302 = vld [vmem:[#allocation11 + $0x18] sm:$0xff]
    %v6304 = vsel %vm131, %v6297, 0
    %v6307 = vsel %vm131, %v6298, 0
    %6309 = vmatprep.subr.mxu0 0.0
    %6310 = vmatpush1.msra.mxu0 %v6299
    %6311 = vmatprep.subr.mxu0 0.0
    %6312 = vmatpush1.msra.mxu0 %v6300
    %6313 = vmatprep.subr.mxu0 0.0
    %6314 = vmatpush1.msra.mxu0 %v6301
    %6315 = vmatprep.subr.mxu0 0.0
    %6316 = vmatpush1.msra.mxu0 %v6302
    %6317 = vmatprep.subr.mxu0 0.0
    %6318 = vmatpush1.msra.mxu0 0.0
    %6319 = vmatprep.subr.mxu0 0.0
    %6320 = vmatpush1.msra.mxu0 0.0
    %6321 = vmatprep.subr.mxu0 0.0
    %6322 = vmatpush1.msra.mxu0 0.0
    %6323 = vmatprep.subr.mxu0 0.0
    %6324 = vmatpush1.msra.mxu0 0.0
    %6325 = vmatprep.subr.mxu0 0.0
    %6326 = vmatpush1.msra.mxu0 0.0
    %6327 = vmatprep.subr.mxu0 0.0
    %6328 = vmatpush1.msra.mxu0 0.0
    %6329 = vmatprep.subr.mxu0 0.0
    %6330 = vmatpush1.msra.mxu0 0.0
    %6331 = vmatprep.subr.mxu0 0.0
    %6332 = vmatpush1.msra.mxu0 0.0
    %6333 = vmatprep.subr.mxu0 0.0
    %6334 = vmatpush1.msra.mxu0 0.0
    %6335 = vmatprep.subr.mxu0 0.0
    %6336 = vmatpush1.msra.mxu0 0.0
    %6337 = vmatprep.subr.mxu0 0.0
    %6338 = vmatpush1.msra.mxu0 0.0
    %6339 = vmatprep.subr.mxu0 0.0
    %6340 = vmatpush1.msra.mxu0 0.0
    %6341 = vmatprep.subr.mxu0 0.0
    %6342 = vmatpush1.msra.mxu0 0.0
    %6343 = vmatprep.subr.mxu0 0.0
    %6344 = vmatpush1.msra.mxu0 0.0
    %6345 = vmatprep.subr.mxu0 0.0
    %6346 = vmatpush1.msra.mxu0 0.0
    %6347 = vmatprep.subr.mxu0 0.0
    %6348 = vmatpush1.msra.mxu0 0.0
    %6349 = vmatprep.subr.mxu0 0.0
    %6350 = vmatpush1.msra.mxu0 0.0
    %6351 = vmatprep.subr.mxu0 0.0
    %6352 = vmatpush1.msra.mxu0 0.0
    %6353 = vmatprep.subr.mxu0 0.0
    %6354 = vmatpush1.msra.mxu0 0.0
    %6355 = vmatprep.subr.mxu0 0.0
    %6356 = vmatpush1.msra.mxu0 0.0
    %6357 = vmatprep.subr.mxu0 0.0
    %6358 = vmatpush1.msra.mxu0 0.0
    %6359 = vmatprep.subr.mxu0 0.0
    %6360 = vmatpush1.msra.mxu0 0.0
    %6361 = vmatprep.subr.mxu0 0.0
    %6362 = vmatpush1.msra.mxu0 0.0
    %6363 = vmatprep.subr.mxu0 0.0
    %6364 = vmatpush1.msra.mxu0 0.0
    %6365 = vmatprep.subr.mxu0 0.0
    %6366 = vmatpush1.msra.mxu0 0.0
    %6367 = vmatprep.subr.mxu0 0.0
    %6368 = vmatpush1.msra.mxu0 0.0
    %6369 = vmatprep.subr.mxu0 0.0
    %6370 = vmatpush1.msra.mxu0 0.0
    %6371 = vmatprep.subr.mxu0 0.0
    %6372 = vmatpush1.msra.mxu0 0.0
    %6373 = vmatprep.mubr.f32.mxu0 0.0
    %6374 = vmatmul.mubr.f32.gmra.mrb[0].mxu0 %v6304
    %v6375 = vpop.f32.mrb[0].mxu0
    %v6376 = vadd.f32 0.0, %v6375
    %v6377 = vpop.f32.mrb[0].mxu0
    %6378 = vmatprep.mubr.f32.mxu0 0.0
    %6379 = vmatmul.mubr.f32.gmra.mrb[0].mxu0 %v6307
    %v6380 = vpop.f32.mrb[0].mxu0
    %v6381 = vadd.f32 0.0, %v6380
    %v6382 = vpop.f32.mrb[0].mxu0
    %6383 = vdwg.mxu0
    %v6384 = vmul.f32 %v6376, 0.5
    %v6385 = vmul.f32 %v6381, 0.5
    %v6386 = vmul.f32 %v6376, 0.044715
    %v6387 = vmul.f32 %v6381, 0.044715
    %v6388 = vmul.f32 %v6386, %v6376
    %v6389 = vmul.f32 %v6387, %v6381
    %v6390 = vmul.f32 %v6388, %v6376
    %v6391 = vmul.f32 %v6389, %v6381
    %v6392 = vadd.f32 %v6376, %v6390
    %v6393 = vadd.f32 %v6381, %v6391
    %v6394 = vmul.f32 %v6392, 0.7978846
    %v6395 = vmul.f32 %v6393, 0.7978846
    %v6396 = vtanh.pop %v6394
    %v6397 = vtanh.pop %v6395
    %v6398 = vadd.f32 %v6396, 1.0
    %v6399 = vadd.f32 %v6397, 1.0
    %v6400 = vmul.f32 %v6384, %v6398
    %v6401 = vmul.f32 %v6385, %v6399
    %6404 = vrot.lane.b32.xlu0 %v6376, 64
    %v6405 = vpop.permute.xlu0 %6404
    %6406 = vrot.lane.b32.xlu0 %v6381, 64
    %v6407 = vpop.permute.xlu0 %6406
    %v6410 = vmul.f32 %v6400, %v6405
    %v6411 = vmul.f32 %v6401, %v6407
    %v6412 = vld [vmem:[%s11] sm:$0xff]
    %v6413 = vld [vmem:[%s11 + $0x8] sm:$0xff]
    %v6414 = vld [vmem:[%s11 + $0x10] sm:$0xff]
    %v6415 = vld [vmem:[%s11 + $0x18] sm:$0xff]
    %v6416 = vld [vmem:[%s11 + $0x20] sm:$0xff]
    %v6417 = vld [vmem:[%s11 + $0x28] sm:$0xff]
    %v6418 = vld [vmem:[%s11 + $0x30] sm:$0xff]
    %v6419 = vld [vmem:[%s11 + $0x38] sm:$0xff]
    %vm6420 = vcmask 523264
    %v6422 = vsel %vm6420, %v6410, 0
    %v6425 = vsel %vm6420, %v6411, 0
    %6427 = vmatprep.subr.mxu0 0.0
    %6428 = vmatpush1.msra.mxu0 %v6412
    %6429 = vmatprep.subr.mxu0 0.0
    %6430 = vmatpush1.msra.mxu0 %v6413
    %6431 = vmatprep.subr.mxu0 0.0
    %6432 = vmatpush1.msra.mxu0 %v6414
    %6433 = vmatprep.subr.mxu0 0.0
    %6434 = vmatpush1.msra.mxu0 %v6415
    %6435 = vmatprep.subr.mxu0 0.0
    %6436 = vmatpush1.msra.mxu0 %v6416
    %6437 = vmatprep.subr.mxu0 0.0
    %6438 = vmatpush1.msra.mxu0 %v6417
    %6439 = vmatprep.subr.mxu0 0.0
    %6440 = vmatpush1.msra.mxu0 %v6418
    %6441 = vmatprep.subr.mxu0 0.0
    %6442 = vmatpush1.msra.mxu0 %v6419
    %6443 = vmatprep.subr.mxu0 0.0
    %6444 = vmatpush1.msra.mxu0 0.0
    %6445 = vmatprep.subr.mxu0 0.0
    %6446 = vmatpush1.msra.mxu0 0.0
    %6447 = vmatprep.subr.mxu0 0.0
    %6448 = vmatpush1.msra.mxu0 0.0
    %6449 = vmatprep.subr.mxu0 0.0
    %6450 = vmatpush1.msra.mxu0 0.0
    %6451 = vmatprep.subr.mxu0 0.0
    %6452 = vmatpush1.msra.mxu0 0.0
    %6453 = vmatprep.subr.mxu0 0.0
    %6454 = vmatpush1.msra.mxu0 0.0
    %6455 = vmatprep.subr.mxu0 0.0
    %6456 = vmatpush1.msra.mxu0 0.0
    %6457 = vmatprep.subr.mxu0 0.0
    %6458 = vmatpush1.msra.mxu0 0.0
    %6459 = vmatprep.subr.mxu0 0.0
    %6460 = vmatpush1.msra.mxu0 0.0
    %6461 = vmatprep.subr.mxu0 0.0
    %6462 = vmatpush1.msra.mxu0 0.0
    %6463 = vmatprep.subr.mxu0 0.0
    %6464 = vmatpush1.msra.mxu0 0.0
    %6465 = vmatprep.subr.mxu0 0.0
    %6466 = vmatpush1.msra.mxu0 0.0
    %6467 = vmatprep.subr.mxu0 0.0
    %6468 = vmatpush1.msra.mxu0 0.0
    %6469 = vmatprep.subr.mxu0 0.0
    %6470 = vmatpush1.msra.mxu0 0.0
    %6471 = vmatprep.subr.mxu0 0.0
    %6472 = vmatpush1.msra.mxu0 0.0
    %6473 = vmatprep.subr.mxu0 0.0
    %6474 = vmatpush1.msra.mxu0 0.0
    %6475 = vmatprep.subr.mxu0 0.0
    %6476 = vmatpush1.msra.mxu0 0.0
    %6477 = vmatprep.subr.mxu0 0.0
    %6478 = vmatpush1.msra.mxu0 0.0
    %6479 = vmatprep.subr.mxu0 0.0
    %6480 = vmatpush1.msra.mxu0 0.0
    %6481 = vmatprep.subr.mxu0 0.0
    %6482 = vmatpush1.msra.mxu0 0.0
    %6483 = vmatprep.subr.mxu0 0.0
    %6484 = vmatpush1.msra.mxu0 0.0
    %6485 = vmatprep.subr.mxu0 0.0
    %6486 = vmatpush1.msra.mxu0 0.0
    %6487 = vmatprep.subr.mxu0 0.0
    %6488 = vmatpush1.msra.mxu0 0.0
    %6489 = vmatprep.subr.mxu0 0.0
    %6490 = vmatpush1.msra.mxu0 0.0
    %6491 = vmatprep.mubr.f32.mxu0 0.0
    %6492 = vmatmul.mubr.f32.gmra.mrb[0].mxu0 %v6422
    %v6493 = vpop.f32.mrb[0].mxu0
    %v6494 = vadd.f32 0.0, %v6493
    %v6495 = vpop.f32.mrb[0].mxu0
    %6496 = vmatprep.mubr.f32.mxu0 0.0
    %6497 = vmatmul.mubr.f32.gmra.mrb[0].mxu0 %v6425
    %v6498 = vpop.f32.mrb[0].mxu0
    %v6499 = vadd.f32 0.0, %v6498
    %v6500 = vpop.f32.mrb[0].mxu0
    %6501 = vdwg.mxu0
    %v6502 = vadd.f32 %v6259, %v6494
    %v6503 = vadd.f32 %v6260, %v6499
    %6504 = vst.msk [vmem:[#allocation13] sm:$0xff] %vm131, %v6502
    %6505 = vst.msk [vmem:[#allocation13 + $0x8] sm:$0xff] %vm131, %v6503
    // Predicated region
    $region74: #{pix2struct_text_block.1} parent=1 // pred_check
      _
    $region75: #{pix2struct_text_block.1} parent=1 // pred_check_branch
      %6507 = sbr.rel (0) target = $region77
    $region76: #{pix2struct_text_block.1} parent=1 // pred_region
      %s6509 = ssub.s32 256, 256
      %6510 = vsyncadd [#allocation4], %s6509
      %s6511 = sshll.u32 [#allocation13], 4
      %s6512 = int_to_ptr.vmem [resolvable:$true] %s6511
      %6517 = dma.vmem_to_hbm [thread:$0]  %s6512, 256, %s12, [#allocation4], 128, 128, 8
    $region77: #{pix2struct_text_block.1} parent=1 // pred_fallthru
      _
    // Predicated region
    $region78: #{pix2struct_text_block.1} parent=1 // pred_check
      _
    $region79: #{pix2struct_text_block.1} parent=1 // pred_check_branch
      %6519 = sbr.rel (0) target = $region81
    $region80: #{pix2struct_text_block.1} parent=1 // pred_region
      %6520 = dma.done [#allocation4], 256
    $region81: #{pix2struct_text_block.1} parent=1 // pred_fallthru
      _
    %6521 = vsyncpa [#allocation3], 1
    %6522 = vsyncpa [#allocation6], 1
    %6523 = vsyncpa [#allocation9], 1
    %6524 = vsyncpa [#allocation12], 1
    %6525 = vsyncpa [#allocation4], 1

</llo_original>
